<compile_context>
chip_gen: v7x
topology: tpu7x:2x2x1
jax: 0.10.0
libtpu: 0.0.40
codegen_flags: <defaults>
</compile_context>

<pallas_src>
import functools

import jax
import jax.numpy as jnp
from jax.experimental import pallas as pl
from jax.experimental.pallas import tpu as pltpu

# Explicit scoped-VMEM budget: raises v5e's 16 MiB default, matches v6e/v7x defaults,
# and keeps double-buffered tiles well under v7x's 64 MiB physical VMEM.
VMEM_LIMIT = 32 * 1024 * 1024


def _tile(dim, target, align):
    """Largest block size <= target that divides `dim` and is a multiple of `align`.
    Falls back to the full dimension (always a legal block shape)."""
    if dim <= target:
        return dim
    t = (target // align) * align
    while t >= align:
        if dim % t == 0:
            return t
        t -= align
    return dim


# --------------------------- tiled matmul kernels ---------------------------

def _matmul_kernel(x_ref, w_ref, o_ref, acc_ref):
    @pl.when(pl.program_id(2) == 0)
    def _():
        acc_ref[...] = jnp.zeros_like(acc_ref)

    acc_ref[...] += jnp.dot(
        x_ref[...].astype(jnp.bfloat16), w_ref[...],
        preferred_element_type=jnp.float32)

    @pl.when(pl.program_id(2) == pl.num_programs(2) - 1)
    def _():
        o_ref[...] = acc_ref[...].astype(o_ref.dtype)


def linear(x, w, *, tm=256, tn=256, tk=512):
    """x: [M, K] f32, w: [K, N] bf16 -> [M, N] f32."""
    M, K = x.shape
    N = w.shape[1]
    tm = _tile(M, tm, 8)
    tn = _tile(N, tn, 128)
    tk = _tile(K, tk, 128)
    return pl.pallas_call(
        _matmul_kernel,
        out_shape=jax.ShapeDtypeStruct((M, N), jnp.float32),
        grid=(M // tm, N // tn, K // tk),
        in_specs=[
            pl.BlockSpec((tm, tk), lambda i, j, k: (i, k)),
            pl.BlockSpec((tk, tn), lambda i, j, k: (k, j)),
        ],
        out_specs=pl.BlockSpec((tm, tn), lambda i, j, k: (i, j)),
        scratch_shapes=[pltpu.VMEM((tm, tn), jnp.float32)],
        compiler_params=pltpu.CompilerParams(
            dimension_semantics=("parallel", "parallel", "arbitrary"),
            vmem_limit_bytes=VMEM_LIMIT),
    )(x, w)


def _matmul_rmsnorm_kernel(x_ref, w_ref, g_ref, o_ref, acc_ref, *, eps):
    @pl.when(pl.program_id(1) == 0)
    def _():
        acc_ref[...] = jnp.zeros_like(acc_ref)

    acc_ref[...] += jnp.dot(
        x_ref[...].astype(jnp.bfloat16), w_ref[...],
        preferred_element_type=jnp.float32)

    @pl.when(pl.program_id(1) == pl.num_programs(1) - 1)
    def _():
        y = acc_ref[...]
        var = jnp.mean(y * y, axis=-1, keepdims=True)
        y = y * jax.lax.rsqrt(var + eps)
        o_ref[...] = (y * g_ref[...].astype(jnp.float32)).astype(o_ref.dtype)


def linear_rmsnorm(x, w, gamma, eps, *, tm=256, tk=512):
    """RMSNorm(x @ w) * gamma, fused epilogue.  Output rows are kept whole (N
    untiled) so the variance reduction sees the full row."""
    M, K = x.shape
    N = w.shape[1]
    tm = _tile(M, tm, 8)
    tk = _tile(K, tk, 128)
    return pl.pallas_call(
        functools.partial(_matmul_rmsnorm_kernel, eps=eps),
        out_shape=jax.ShapeDtypeStruct((M, N), jnp.float32),
        grid=(M // tm, K // tk),
        in_specs=[
            pl.BlockSpec((tm, tk), lambda i, k: (i, k)),
            pl.BlockSpec((tk, N), lambda i, k: (k, 0)),
            pl.BlockSpec((1, N), lambda i, k: (0, 0)),
        ],
        out_specs=pl.BlockSpec((tm, N), lambda i, k: (i, 0)),
        scratch_shapes=[pltpu.VMEM((tm, N), jnp.float32)],
        compiler_params=pltpu.CompilerParams(
            dimension_semantics=("parallel", "arbitrary"),
            vmem_limit_bytes=VMEM_LIMIT),
    )(x, w, gamma.reshape(1, N))


def _gate_up_silu_kernel(x_ref, wg_ref, wu_ref, o_ref, accg_ref, accu_ref):
    @pl.when(pl.program_id(2) == 0)
    def _():
        accg_ref[...] = jnp.zeros_like(accg_ref)
        accu_ref[...] = jnp.zeros_like(accu_ref)

    xb = x_ref[...].astype(jnp.bfloat16)
    accg_ref[...] += jnp.dot(xb, wg_ref[...], preferred_element_type=jnp.float32)
    accu_ref[...] += jnp.dot(xb, wu_ref[...], preferred_element_type=jnp.float32)

    @pl.when(pl.program_id(2) == pl.num_programs(2) - 1)
    def _():
        g = accg_ref[...]
        o_ref[...] = (g * jax.nn.sigmoid(g) * accu_ref[...]).astype(o_ref.dtype)


def gate_up_silu(x, w_gate, w_up, *, tm=256, tn=256, tk=512):
    """silu(x @ w_gate) * (x @ w_up), fused (no [T, 2I] intermediate in HBM)."""
    M, K = x.shape
    N = w_gate.shape[1]
    tm = _tile(M, tm, 8)
    tn = _tile(N, tn, 128)
    tk = _tile(K, tk, 128)
    return pl.pallas_call(
        _gate_up_silu_kernel,
        out_shape=jax.ShapeDtypeStruct((M, N), jnp.float32),
        grid=(M // tm, N // tn, K // tk),
        in_specs=[
            pl.BlockSpec((tm, tk), lambda i, j, k: (i, k)),
            pl.BlockSpec((tk, tn), lambda i, j, k: (k, j)),
            pl.BlockSpec((tk, tn), lambda i, j, k: (k, j)),
        ],
        out_specs=pl.BlockSpec((tm, tn), lambda i, j, k: (i, j)),
        scratch_shapes=[pltpu.VMEM((tm, tn), jnp.float32),
                        pltpu.VMEM((tm, tn), jnp.float32)],
        compiler_params=pltpu.CompilerParams(
            dimension_semantics=("parallel", "parallel", "arbitrary"),
            vmem_limit_bytes=VMEM_LIMIT),
    )(x, w_gate, w_up)


# ------------------------------ rmsnorm (standalone) ------------------------

def _rmsnorm_kernel(x_ref, g_ref, o_ref, *, eps):
    x = x_ref[...].astype(jnp.float32)
    var = jnp.mean(x * x, axis=-1, keepdims=True)
    y = x * jax.lax.rsqrt(var + eps)
    o_ref[...] = (y * g_ref[...].astype(jnp.float32)).astype(o_ref.dtype)


def rmsnorm(x, gamma, eps, *, tm=512):
    T, H = x.shape
    tm = _tile(T, tm, 8)
    return pl.pallas_call(
        functools.partial(_rmsnorm_kernel, eps=eps),
        out_shape=jax.ShapeDtypeStruct((T, H), x.dtype),
        grid=(T // tm,),
        in_specs=[
            pl.BlockSpec((tm, H), lambda i: (i, 0)),
            pl.BlockSpec((1, H), lambda i: (0, 0)),
        ],
        out_specs=pl.BlockSpec((tm, H), lambda i: (i, 0)),
        compiler_params=pltpu.CompilerParams(
            dimension_semantics=("parallel",),
            vmem_limit_bytes=VMEM_LIMIT),
    )(x, gamma.reshape(1, H))


# ----------------------- flash causal attention kernel ----------------------

def _flash_attn_kernel(q_ref, k_ref, v_ref, o_ref, m_ref, l_ref, acc_ref,
                       *, nh, d, scale, tq, tk):
    ki = pl.program_id(2)

    @pl.when(ki == 0)
    def _():
        m_ref[...] = jnp.full(m_ref.shape, -1e30, dtype=jnp.float32)
        l_ref[...] = jnp.zeros_like(l_ref)
        acc_ref[...] = jnp.zeros_like(acc_ref)

    q_start = pl.program_id(1) * tq
    k_start = ki * tk

    # Skip KV blocks strictly above the causal diagonal (block 0 is never skipped,
    # so the running max is always finite and no NaNs can appear).
    @pl.when(k_start <= q_start + (tq - 1))
    def _():
        qb = (q_ref[0] * scale).astype(jnp.bfloat16)          # (tq, H)
        kb = k_ref[0].astype(jnp.bfloat16)                    # (tk, H)
        vb = v_ref[0].astype(jnp.bfloat16)                    # (tk, H)
        row = q_start + jax.lax.broadcasted_iota(jnp.int32, (tq, tk), 0)
        col = k_start + jax.lax.broadcasted_iota(jnp.int32, (tq, tk), 1)
        mask = col <= row
        for h in range(nh):
            sl = slice(h * d, (h + 1) * d)
            qh, kh, vh = qb[:, sl], kb[:, sl], vb[:, sl]
            s = jax.lax.dot_general(
                qh, kh, (((1,), (1,)), ((), ())),
                preferred_element_type=jnp.float32)           # (tq, tk)
            s = jnp.where(mask, s, -1e30)
            m_prev = m_ref[h]                                 # (tq, 1)
            m_new = jnp.maximum(m_prev, jnp.max(s, axis=-1, keepdims=True))
            alpha = jnp.exp(m_prev - m_new)
            p = jnp.exp(s - m_new)
            l_ref[h] = alpha * l_ref[h] + jnp.sum(p, axis=-1, keepdims=True)
            acc_ref[h] = alpha * acc_ref[h] + jax.lax.dot_general(
                p.astype(jnp.bfloat16), vh, (((1,), (0,)), ((), ())),
                preferred_element_type=jnp.float32)
            m_ref[h] = m_new

    @pl.when(ki == pl.num_programs(2) - 1)
    def _():
        outs = []
        for h in range(nh):
            inv = pl.reciprocal(l_ref[h], approx=True)        # (tq, 1)
            outs.append(acc_ref[h] * inv)
        o_ref[0] = jnp.concatenate(outs, axis=-1).astype(o_ref.dtype)  # (tq, H)


def flash_causal_attention(q, k, v, *, num_heads, scale, tq=128, tkv=128):
    """q, k, v: [B, S, H] (heads packed along the lane-dense last dim) -> [B, S, H]."""
    B, S, H = q.shape
    D = H // num_heads
    tq = _tile(S, tq, 8)
    tkv = _tile(S, tkv, 8)
    kernel = functools.partial(_flash_attn_kernel, nh=num_heads, d=D,
                               scale=scale, tq=tq, tk=tkv)
    q_spec = pl.BlockSpec((1, tq, H), lambda b, qi, ki: (b, qi, 0))
    kv_spec = pl.BlockSpec((1, tkv, H), lambda b, qi, ki: (b, ki, 0))
    return pl.pallas_call(
        kernel,
        out_shape=jax.ShapeDtypeStruct((B, S, H), q.dtype),
        grid=(B, S // tq, S // tkv),
        in_specs=[q_spec, kv_spec, kv_spec],
        out_specs=pl.BlockSpec((1, tq, H), lambda b, qi, ki: (b, qi, 0)),
        scratch_shapes=[pltpu.VMEM((num_heads, tq, 1), jnp.float32),
                        pltpu.VMEM((num_heads, tq, 1), jnp.float32),
                        pltpu.VMEM((num_heads, tq, D), jnp.float32)],
        compiler_params=pltpu.CompilerParams(
            dimension_semantics=("parallel", "parallel", "arbitrary"),
            vmem_limit_bytes=VMEM_LIMIT),
    )(q, k, v)


# ------------------------------ model (glue) --------------------------------

CFG = dict(
    vocab_size=256,
    hidden_size=128,
    num_attention_heads=4,
    num_key_value_heads=4,       # qkv.chunk(3) in the reference implies kv_heads == heads
    intermediate_size=256,
    num_hidden_layers=2,
    rms_norm_eps=1e-5,
    rope_theta=10000.0,
    attention_bias=False,        # OLMo-2 default: no qkv / o_proj bias
)


def init_params(key, cfg):
    H = cfg["hidden_size"]
    I = cfg["intermediate_size"]
    V = cfg["vocab_size"]
    L = cfg["num_hidden_layers"]

    def nrm(k, shape, scale=0.02, dtype=jnp.float32):
        return (scale * jax.random.normal(k, shape, dtype=jnp.float32)).astype(dtype)

    keys = jax.random.split(key, 2 + 11 * L)
    params = {"embed": nrm(keys[0], (V, H)),
              "final_norm": jnp.ones((H,), jnp.float32)}
    layers = []
    for li in range(L):
        ks = keys[2 + 11 * li: 2 + 11 * (li + 1)]
        layers.append(dict(
            # projection weights stored [in, out], bf16 in HBM (MXU-native)
            q_w=nrm(ks[0], (H, H), dtype=jnp.bfloat16),
            k_w=nrm(ks[1], (H, H), dtype=jnp.bfloat16),
            v_w=nrm(ks[2], (H, H), dtype=jnp.bfloat16),
            o_w=nrm(ks[3], (H, H), dtype=jnp.bfloat16),
            gate_w=nrm(ks[4], (H, I), dtype=jnp.bfloat16),
            up_w=nrm(ks[5], (H, I), dtype=jnp.bfloat16),
            down_w=nrm(ks[6], (I, H), dtype=jnp.bfloat16),
            # norm gains in f32
            q_norm=1.0 + nrm(ks[7], (H,)),
            k_norm=1.0 + nrm(ks[8], (H,)),
            input_ln=1.0 + nrm(ks[9], (H,)),
            post_ln=1.0 + nrm(ks[10], (H,)),
        ))
    params["layers"] = layers
    return params


def rope_cos_sin(positions, head_dim, theta):
    # neox-style rotary (vLLM get_rope default), rotary_dim == head_dim
    half = head_dim // 2
    inv_freq = 1.0 / (theta ** (jnp.arange(0, half, dtype=jnp.float32) / half))
    freqs = positions.astype(jnp.float32)[:, None] * inv_freq[None, :]   # [T, half]
    return jnp.cos(freqs), jnp.sin(freqs)


def apply_rope(x, cos, sin):
    # x: [T, NH, D]; neox rotate-half
    D = x.shape[-1]
    half = D // 2
    x1, x2 = x[..., :half], x[..., half:]
    c = cos[:, None, :]
    s = sin[:, None, :]
    return jnp.concatenate([x1 * c - x2 * s, x2 * c + x1 * s], axis=-1)
    # TODO(synk): RoPE could be fused into the q/k projection epilogue with pltpu.roll;
    # kept as XLA glue here for clarity.


def decoder_layer(h, lp, cfg, cos, sin, B, S):
    H = cfg["hidden_size"]
    NH = cfg["num_attention_heads"]
    D = H // NH
    eps = cfg["rms_norm_eps"]
    T = B * S

    residual = h
    # qkv_proj + chunk(3) + q_norm/k_norm  ==  three projections with fused RMSNorm
    q = linear_rmsnorm(h, lp["q_w"], lp["q_norm"], eps)   # [T, H]
    k = linear_rmsnorm(h, lp["k_w"], lp["k_norm"], eps)   # [T, H]
    v = linear(h, lp["v_w"])                              # [T, H]

    q = apply_rope(q.reshape(T, NH, D), cos, sin).reshape(T, H)
    k = apply_rope(k.reshape(T, NH, D), cos, sin).reshape(T, H)

    # [T, H] -> [B, S, H] reshapes are free (no HBM transpose needed).
    attn = flash_causal_attention(
        q.reshape(B, S, H), k.reshape(B, S, H), v.reshape(B, S, H),
        num_heads=NH, scale=D ** -0.5)
    attn = attn.reshape(T, H)

    # o_proj followed by input_layernorm (OLMo-2 norm-after), fused; then residual.
    h = linear_rmsnorm(attn, lp["o_w"], lp["input_ln"], eps) + residual

    residual = h
    act = gate_up_silu(h, lp["gate_w"], lp["up_w"])                     # [T, I]
    # down_proj followed by post_attention_layernorm, fused; then residual.
    h = residual + linear_rmsnorm(act, lp["down_w"], lp["post_ln"], eps)
    return h


def olmo_forward(params, input_ids, cfg):
    """input_ids: [B, S] int32 -> hidden_states [B, S, H]."""
    B, S = input_ids.shape
    H = cfg["hidden_size"]
    D = H // cfg["num_attention_heads"]
    T = B * S

    flat_ids = input_ids.reshape(T)
    positions = jnp.tile(jnp.arange(S, dtype=jnp.int32), B)   # per-sequence positions
    cos, sin = rope_cos_sin(positions, D, cfg["rope_theta"])

    h = jnp.take(params["embed"], flat_ids, axis=0)           # embedding lookup (glue)
    for lp in params["layers"]:
        h = decoder_layer(h, lp, cfg, cos, sin, B, S)
    h = rmsnorm(h, params["final_norm"], cfg["rms_norm_eps"])
    return h.reshape(B, S, H)
    # TODO(synk): compute_logits / sampler (lm_head matmul + sampling) are separate
    # methods in vLLM, not part of Olmo1124ForCausalLM.forward; omitted here.
    # TODO(synk): paged kv_cache / attn_metadata decode path not modeled (prefill-only).


# --------------------------------- driver -----------------------------------

if __name__ == "__main__":
    key = jax.random.PRNGKey(0)
    pkey, ikey = jax.random.split(key)
    params = init_params(pkey, CFG)

    B, S = 2, 16
    input_ids = jax.random.randint(ikey, (B, S), 0, CFG["vocab_size"], dtype=jnp.int32)

    fwd = jax.jit(functools.partial(olmo_forward, cfg=CFG))
    out = fwd(params, input_ids)
    out = jax.block_until_ready(out)

    assert out.shape == (B, S, CFG["hidden_size"])
    assert bool(jnp.all(jnp.isfinite(out)))
    print("KERNEL_OK")
</pallas_src>

<mosaic_0001>
module attributes {stable_mosaic.version = 11 : i64} {
  func.func @_matmul_rmsnorm_kernel(%arg0: i32, %arg1: i32, %arg2: memref<32x128xf32, #tpu.memory_space<vmem>>, %arg3: memref<128x128xbf16, #tpu.memory_space<vmem>>, %arg4: memref<1x128xf32, #tpu.memory_space<vmem>>, %arg5: memref<32x128xf32, #tpu.memory_space<vmem>>, %arg6: memref<32x128xf32, #tpu.memory_space<vmem>>) attributes {dimension_semantics = [#tpu.dimension_semantics<parallel>, #tpu.dimension_semantics<arbitrary>], iteration_bounds = array<i64: 1, 1>, scalar_prefetch = 0 : i64, scratch_operands = 1 : i64, tpu.core_type = #tpu.core_type<tc>, window_params = [{transform_indices = @transform_0, window_bounds = array<i64: 32, 128>}, {transform_indices = @transform_1, window_bounds = array<i64: 128, 128>}, {pipeline_mode = #tpu.pipeline_mode<synchronous>, transform_indices = @transform_2, window_bounds = array<i64: 1, 128>}, {transform_indices = @transform_3, window_bounds = array<i64: 32, 128>}]} {
    %c0_i32 = arith.constant 0 : i32
    %0 = arith.cmpi eq, %arg1, %c0_i32 : i32
    %1 = arith.extui %0 : i1 to i32
    %c0_i32_0 = arith.constant 0 : i32
    %2 = arith.cmpi ne, %1, %c0_i32_0 : i32
    scf.if %2 {
      %cst_10 = arith.constant 0.000000e+00 : f32
      %13 = vector.broadcast %cst_10 : f32 to vector<32x128xf32>
      %c0_11 = arith.constant 0 : index
      %c0_12 = arith.constant 0 : index
      %14 = vector.load %arg6[%c0_11, %c0_12] : memref<32x128xf32, #tpu.memory_space<vmem>>, vector<32x128xf32>
      tpu.vector_store %arg6[%c0_11, %c0_12], %13 {strides = array<i32>} : memref<32x128xf32, #tpu.memory_space<vmem>>, vector<32x128xf32>,
    } else {
    }
    %c0 = arith.constant 0 : index
    %c0_1 = arith.constant 0 : index
    %3 = vector.load %arg6[%c0, %c0_1] : memref<32x128xf32, #tpu.memory_space<vmem>>, vector<32x128xf32>
    %c0_2 = arith.constant 0 : index
    %c0_3 = arith.constant 0 : index
    %4 = vector.load %arg2[%c0_2, %c0_3] : memref<32x128xf32, #tpu.memory_space<vmem>>, vector<32x128xf32>
    %5 = arith.truncf %4 : vector<32x128xf32> to vector<32x128xbf16>
    %c0_4 = arith.constant 0 : index
    %c0_5 = arith.constant 0 : index
    %6 = vector.load %arg3[%c0_4, %c0_5] : memref<128x128xbf16, #tpu.memory_space<vmem>>, vector<128x128xbf16>
    %cst = arith.constant dense<0.000000e+00> : vector<32x128xf32>
    %7 = tpu.matmul %5, %6, %cst {dimension_numbers = #tpu.dot_dimension_numbers<[1], [0], [0], [1], [0, 0, 1, 1], [], []>} : vector<32x128xbf16>, vector<128x128xbf16>, vector<32x128xf32> -> vector<32x128xf32>
    %8 = arith.addf %3, %7 : vector<32x128xf32>
    %c0_6 = arith.constant 0 : index
    %c0_7 = arith.constant 0 : index
    %9 = vector.load %arg6[%c0_6, %c0_7] : memref<32x128xf32, #tpu.memory_space<vmem>>, vector<32x128xf32>
    tpu.vector_store %arg6[%c0_6, %c0_7], %8 {strides = array<i32>} : memref<32x128xf32, #tpu.memory_space<vmem>>, vector<32x128xf32>,
    %c0_i32_8 = arith.constant 0 : i32
    %10 = arith.cmpi eq, %arg1, %c0_i32_8 : i32
    %11 = arith.extui %10 : i1 to i32
    %c0_i32_9 = arith.constant 0 : i32
    %12 = arith.cmpi ne, %11, %c0_i32_9 : i32
    scf.if %12 {
      %c0_10 = arith.constant 0 : index
      %c0_11 = arith.constant 0 : index
      %13 = vector.load %arg6[%c0_10, %c0_11] : memref<32x128xf32, #tpu.memory_space<vmem>>, vector<32x128xf32>
      %14 = arith.mulf %13, %13 : vector<32x128xf32>
      %cst_12 = arith.constant dense<0.000000e+00> : vector<32xf32>
      %15 = vector.multi_reduction <add>, %14, %cst_12 [1] : vector<32x128xf32> to vector<32xf32>
      %16 = vector.shape_cast %15 : vector<32xf32> to vector<32x1xf32>
      %cst_13 = arith.constant 1.280000e+02 : f32
      %17 = vector.broadcast %cst_13 : f32 to vector<32x1xf32>
      %18 = arith.divf %16, %17 : vector<32x1xf32>
      %cst_14 = arith.constant 9.99999974E-6 : f32
      %19 = vector.broadcast %cst_14 : f32 to vector<32x1xf32>
      %20 = arith.addf %18, %19 : vector<32x1xf32>
      %21 = math.rsqrt %20 : vector<32x1xf32>
      %22 = vector.broadcast %21 : vector<32x1xf32> to vector<32x128xf32>
      %23 = arith.mulf %13, %22 : vector<32x128xf32>
      %c0_15 = arith.constant 0 : index
      %c0_16 = arith.constant 0 : index
      %24 = vector.load %arg4[%c0_15, %c0_16] : memref<1x128xf32, #tpu.memory_space<vmem>>, vector<1x128xf32>
      %25 = vector.broadcast %24 : vector<1x128xf32> to vector<32x128xf32>
      %26 = arith.mulf %23, %25 : vector<32x128xf32>
      %c0_17 = arith.constant 0 : index
      %c0_18 = arith.constant 0 : index
      %27 = vector.load %arg5[%c0_17, %c0_18] : memref<32x128xf32, #tpu.memory_space<vmem>>, vector<32x128xf32>
      tpu.vector_store %arg5[%c0_17, %c0_18], %26 {strides = array<i32>} : memref<32x128xf32, #tpu.memory_space<vmem>>, vector<32x128xf32>,
    } else {
    }
    return
  }
  func.func @transform_0(%arg0: i32, %arg1: i32) -> (i32, i32) {
    %c0_i32 = arith.constant 0 : i32
    return %arg0, %arg1 : i32, i32
  }
  func.func @transform_1(%arg0: i32, %arg1: i32) -> (i32, i32) {
    %c0_i32 = arith.constant 0 : i32
    %c0_i32_0 = arith.constant 0 : i32
    return %arg1, %c0_i32 : i32, i32
  }
  func.func @transform_2(%arg0: i32, %arg1: i32) -> (i32, i32) {
    %c0_i32 = arith.constant 0 : i32
    %c0_i32_0 = arith.constant 0 : i32
    %c0_i32_1 = arith.constant 0 : i32
    return %c0_i32, %c0_i32_0 : i32, i32
  }
  func.func @transform_3(%arg0: i32, %arg1: i32) -> (i32, i32) {
    %c0_i32 = arith.constant 0 : i32
    %c0_i32_0 = arith.constant 0 : i32
    return %arg0, %c0_i32 : i32, i32
  }
}

module attributes {stable_mosaic.version = 11 : i64} {
  func.func @_matmul_kernel(%arg0: i32, %arg1: i32, %arg2: i32, %arg3: memref<32x128xf32, #tpu.memory_space<vmem>>, %arg4: memref<128x128xbf16, #tpu.memory_space<vmem>>, %arg5: memref<32x128xf32, #tpu.memory_space<vmem>>, %arg6: memref<32x128xf32, #tpu.memory_space<vmem>>) attributes {dimension_semantics = [#tpu.dimension_semantics<parallel>, #tpu.dimension_semantics<parallel>, #tpu.dimension_semantics<arbitrary>], iteration_bounds = array<i64: 1, 1, 1>, scalar_prefetch = 0 : i64, scratch_operands = 1 : i64, tpu.core_type = #tpu.core_type<tc>, window_params = [{transform_indices = @transform_0, window_bounds = array<i64: 32, 128>}, {transform_indices = @transform_1, window_bounds = array<i64: 128, 128>}, {transform_indices = @transform_2, window_bounds = array<i64: 32, 128>}]} {
    %c0_i32 = arith.constant 0 : i32
    %0 = arith.cmpi eq, %arg2, %c0_i32 : i32
    %1 = arith.extui %0 : i1 to i32
    %c0_i32_0 = arith.constant 0 : i32
    %2 = arith.cmpi ne, %1, %c0_i32_0 : i32
    scf.if %2 {
      %cst_10 = arith.constant 0.000000e+00 : f32
      %13 = vector.broadcast %cst_10 : f32 to vector<32x128xf32>
      %c0_11 = arith.constant 0 : index
      %c0_12 = arith.constant 0 : index
      %14 = vector.load %arg6[%c0_11, %c0_12] : memref<32x128xf32, #tpu.memory_space<vmem>>, vector<32x128xf32>
      tpu.vector_store %arg6[%c0_11, %c0_12], %13 {strides = array<i32>} : memref<32x128xf32, #tpu.memory_space<vmem>>, vector<32x128xf32>,
    } else {
    }
    %c0 = arith.constant 0 : index
    %c0_1 = arith.constant 0 : index
    %3 = vector.load %arg6[%c0, %c0_1] : memref<32x128xf32, #tpu.memory_space<vmem>>, vector<32x128xf32>
    %c0_2 = arith.constant 0 : index
    %c0_3 = arith.constant 0 : index
    %4 = vector.load %arg3[%c0_2, %c0_3] : memref<32x128xf32, #tpu.memory_space<vmem>>, vector<32x128xf32>
    %5 = arith.truncf %4 : vector<32x128xf32> to vector<32x128xbf16>
    %c0_4 = arith.constant 0 : index
    %c0_5 = arith.constant 0 : index
    %6 = vector.load %arg4[%c0_4, %c0_5] : memref<128x128xbf16, #tpu.memory_space<vmem>>, vector<128x128xbf16>
    %cst = arith.constant dense<0.000000e+00> : vector<32x128xf32>
    %7 = tpu.matmul %5, %6, %cst {dimension_numbers = #tpu.dot_dimension_numbers<[1], [0], [0], [1], [0, 0, 1, 1], [], []>} : vector<32x128xbf16>, vector<128x128xbf16>, vector<32x128xf32> -> vector<32x128xf32>
    %8 = arith.addf %3, %7 : vector<32x128xf32>
    %c0_6 = arith.constant 0 : index
    %c0_7 = arith.constant 0 : index
    %9 = vector.load %arg6[%c0_6, %c0_7] : memref<32x128xf32, #tpu.memory_space<vmem>>, vector<32x128xf32>
    tpu.vector_store %arg6[%c0_6, %c0_7], %8 {strides = array<i32>} : memref<32x128xf32, #tpu.memory_space<vmem>>, vector<32x128xf32>,
    %c0_i32_8 = arith.constant 0 : i32
    %10 = arith.cmpi eq, %arg2, %c0_i32_8 : i32
    %11 = arith.extui %10 : i1 to i32
    %c0_i32_9 = arith.constant 0 : i32
    %12 = arith.cmpi ne, %11, %c0_i32_9 : i32
    scf.if %12 {
      %c0_10 = arith.constant 0 : index
      %c0_11 = arith.constant 0 : index
      %13 = vector.load %arg6[%c0_10, %c0_11] : memref<32x128xf32, #tpu.memory_space<vmem>>, vector<32x128xf32>
      %c0_12 = arith.constant 0 : index
      %c0_13 = arith.constant 0 : index
      %14 = vector.load %arg5[%c0_12, %c0_13] : memref<32x128xf32, #tpu.memory_space<vmem>>, vector<32x128xf32>
      tpu.vector_store %arg5[%c0_12, %c0_13], %13 {strides = array<i32>} : memref<32x128xf32, #tpu.memory_space<vmem>>, vector<32x128xf32>,
    } else {
    }
    return
  }
  func.func @transform_0(%arg0: i32, %arg1: i32, %arg2: i32) -> (i32, i32) {
    %c0_i32 = arith.constant 0 : i32
    return %arg0, %arg2 : i32, i32
  }
  func.func @transform_1(%arg0: i32, %arg1: i32, %arg2: i32) -> (i32, i32) {
    %c0_i32 = arith.constant 0 : i32
    return %arg2, %arg1 : i32, i32
  }
  func.func @transform_2(%arg0: i32, %arg1: i32, %arg2: i32) -> (i32, i32) {
    %c0_i32 = arith.constant 0 : i32
    return %arg0, %arg1 : i32, i32
  }
}

module attributes {stable_mosaic.version = 11 : i64} {
  func.func @_gate_up_silu_kernel(%arg0: i32, %arg1: i32, %arg2: i32, %arg3: memref<32x128xf32, #tpu.memory_space<vmem>>, %arg4: memref<128x256xbf16, #tpu.memory_space<vmem>>, %arg5: memref<128x256xbf16, #tpu.memory_space<vmem>>, %arg6: memref<32x256xf32, #tpu.memory_space<vmem>>, %arg7: memref<32x256xf32, #tpu.memory_space<vmem>>, %arg8: memref<32x256xf32, #tpu.memory_space<vmem>>) attributes {dimension_semantics = [#tpu.dimension_semantics<parallel>, #tpu.dimension_semantics<parallel>, #tpu.dimension_semantics<arbitrary>], iteration_bounds = array<i64: 1, 1, 1>, scalar_prefetch = 0 : i64, scratch_operands = 2 : i64, tpu.core_type = #tpu.core_type<tc>, window_params = [{transform_indices = @transform_0, window_bounds = array<i64: 32, 128>}, {transform_indices = @transform_1, window_bounds = array<i64: 128, 256>}, {transform_indices = @transform_2, window_bounds = array<i64: 128, 256>}, {transform_indices = @transform_3, window_bounds = array<i64: 32, 256>}]} {
    %c0_i32 = arith.constant 0 : i32
    %0 = arith.cmpi eq, %arg2, %c0_i32 : i32
    %1 = arith.extui %0 : i1 to i32
    %c0_i32_0 = arith.constant 0 : i32
    %2 = arith.cmpi ne, %1, %c0_i32_0 : i32
    scf.if %2 {
      %cst_17 = arith.constant 0.000000e+00 : f32
      %18 = vector.broadcast %cst_17 : f32 to vector<32x256xf32>
      %c0_18 = arith.constant 0 : index
      %c0_19 = arith.constant 0 : index
      %19 = vector.load %arg7[%c0_18, %c0_19] : memref<32x256xf32, #tpu.memory_space<vmem>>, vector<32x256xf32>
      tpu.vector_store %arg7[%c0_18, %c0_19], %18 {strides = array<i32>} : memref<32x256xf32, #tpu.memory_space<vmem>>, vector<32x256xf32>,
      %cst_20 = arith.constant 0.000000e+00 : f32
      %20 = vector.broadcast %cst_20 : f32 to vector<32x256xf32>
      %c0_21 = arith.constant 0 : index
      %c0_22 = arith.constant 0 : index
      %21 = vector.load %arg8[%c0_21, %c0_22] : memref<32x256xf32, #tpu.memory_space<vmem>>, vector<32x256xf32>
      tpu.vector_store %arg8[%c0_21, %c0_22], %20 {strides = array<i32>} : memref<32x256xf32, #tpu.memory_space<vmem>>, vector<32x256xf32>,
    } else {
    }
    %c0 = arith.constant 0 : index
    %c0_1 = arith.constant 0 : index
    %3 = vector.load %arg3[%c0, %c0_1] : memref<32x128xf32, #tpu.memory_space<vmem>>, vector<32x128xf32>
    %4 = arith.truncf %3 : vector<32x128xf32> to vector<32x128xbf16>
    %c0_2 = arith.constant 0 : index
    %c0_3 = arith.constant 0 : index
    %5 = vector.load %arg7[%c0_2, %c0_3] : memref<32x256xf32, #tpu.memory_space<vmem>>, vector<32x256xf32>
    %c0_4 = arith.constant 0 : index
    %c0_5 = arith.constant 0 : index
    %6 = vector.load %arg4[%c0_4, %c0_5] : memref<128x256xbf16, #tpu.memory_space<vmem>>, vector<128x256xbf16>
    %cst = arith.constant dense<0.000000e+00> : vector<32x256xf32>
    %7 = tpu.matmul %4, %6, %cst {dimension_numbers = #tpu.dot_dimension_numbers<[1], [0], [0], [1], [0, 0, 1, 1], [], []>} : vector<32x128xbf16>, vector<128x256xbf16>, vector<32x256xf32> -> vector<32x256xf32>
    %8 = arith.addf %5, %7 : vector<32x256xf32>
    %c0_6 = arith.constant 0 : index
    %c0_7 = arith.constant 0 : index
    %9 = vector.load %arg7[%c0_6, %c0_7] : memref<32x256xf32, #tpu.memory_space<vmem>>, vector<32x256xf32>
    tpu.vector_store %arg7[%c0_6, %c0_7], %8 {strides = array<i32>} : memref<32x256xf32, #tpu.memory_space<vmem>>, vector<32x256xf32>,
    %c0_8 = arith.constant 0 : index
    %c0_9 = arith.constant 0 : index
    %10 = vector.load %arg8[%c0_8, %c0_9] : memref<32x256xf32, #tpu.memory_space<vmem>>, vector<32x256xf32>
    %c0_10 = arith.constant 0 : index
    %c0_11 = arith.constant 0 : index
    %11 = vector.load %arg5[%c0_10, %c0_11] : memref<128x256xbf16, #tpu.memory_space<vmem>>, vector<128x256xbf16>
    %cst_12 = arith.constant dense<0.000000e+00> : vector<32x256xf32>
    %12 = tpu.matmul %4, %11, %cst_12 {dimension_numbers = #tpu.dot_dimension_numbers<[1], [0], [0], [1], [0, 0, 1, 1], [], []>} : vector<32x128xbf16>, vector<128x256xbf16>, vector<32x256xf32> -> vector<32x256xf32>
    %13 = arith.addf %10, %12 : vector<32x256xf32>
    %c0_13 = arith.constant 0 : index
    %c0_14 = arith.constant 0 : index
    %14 = vector.load %arg8[%c0_13, %c0_14] : memref<32x256xf32, #tpu.memory_space<vmem>>, vector<32x256xf32>
    tpu.vector_store %arg8[%c0_13, %c0_14], %13 {strides = array<i32>} : memref<32x256xf32, #tpu.memory_space<vmem>>, vector<32x256xf32>,
    %c0_i32_15 = arith.constant 0 : i32
    %15 = arith.cmpi eq, %arg2, %c0_i32_15 : i32
    %16 = arith.extui %15 : i1 to i32
    %c0_i32_16 = arith.constant 0 : i32
    %17 = arith.cmpi ne, %16, %c0_i32_16 : i32
    scf.if %17 {
      %c0_17 = arith.constant 0 : index
      %c0_18 = arith.constant 0 : index
      %18 = vector.load %arg7[%c0_17, %c0_18] : memref<32x256xf32, #tpu.memory_space<vmem>>, vector<32x256xf32>
      %19 = arith.negf %18 : vector<32x256xf32>
      %20 = math.exp %19 : vector<32x256xf32>
      %cst_19 = arith.constant 1.000000e+00 : f32
      %21 = vector.broadcast %cst_19 : f32 to vector<32x256xf32>
      %22 = arith.addf %21, %20 : vector<32x256xf32>
      %23 = arith.divf %21, %22 : vector<32x256xf32>
      %24 = arith.mulf %18, %23 : vector<32x256xf32>
      %c0_20 = arith.constant 0 : index
      %c0_21 = arith.constant 0 : index
      %25 = vector.load %arg8[%c0_20, %c0_21] : memref<32x256xf32, #tpu.memory_space<vmem>>, vector<32x256xf32>
      %26 = arith.mulf %24, %25 : vector<32x256xf32>
      %c0_22 = arith.constant 0 : index
      %c0_23 = arith.constant 0 : index
      %27 = vector.load %arg6[%c0_22, %c0_23] : memref<32x256xf32, #tpu.memory_space<vmem>>, vector<32x256xf32>
      tpu.vector_store %arg6[%c0_22, %c0_23], %26 {strides = array<i32>} : memref<32x256xf32, #tpu.memory_space<vmem>>, vector<32x256xf32>,
    } else {
    }
    return
  }
  func.func @transform_0(%arg0: i32, %arg1: i32, %arg2: i32) -> (i32, i32) {
    %c0_i32 = arith.constant 0 : i32
    return %arg0, %arg2 : i32, i32
  }
  func.func @transform_1(%arg0: i32, %arg1: i32, %arg2: i32) -> (i32, i32) {
    %c0_i32 = arith.constant 0 : i32
    return %arg2, %arg1 : i32, i32
  }
  func.func @transform_2(%arg0: i32, %arg1: i32, %arg2: i32) -> (i32, i32) {
    %c0_i32 = arith.constant 0 : i32
    return %arg2, %arg1 : i32, i32
  }
  func.func @transform_3(%arg0: i32, %arg1: i32, %arg2: i32) -> (i32, i32) {
    %c0_i32 = arith.constant 0 : i32
    return %arg0, %arg1 : i32, i32
  }
}

module attributes {stable_mosaic.version = 11 : i64} {
  func.func @_flash_attn_kernel(%arg0: i32, %arg1: i32, %arg2: i32, %arg3: memref<1x16x128xf32, #tpu.memory_space<vmem>>, %arg4: memref<1x16x128xf32, #tpu.memory_space<vmem>>, %arg5: memref<1x16x128xf32, #tpu.memory_space<vmem>>, %arg6: memref<1x16x128xf32, #tpu.memory_space<vmem>>, %arg7: memref<4x16x1xf32, #tpu.memory_space<vmem>>, %arg8: memref<4x16x1xf32, #tpu.memory_space<vmem>>, %arg9: memref<4x16x32xf32, #tpu.memory_space<vmem>>) attributes {dimension_semantics = [#tpu.dimension_semantics<parallel>, #tpu.dimension_semantics<parallel>, #tpu.dimension_semantics<arbitrary>], iteration_bounds = array<i64: 2, 1, 1>, scalar_prefetch = 0 : i64, scratch_operands = 3 : i64, tpu.core_type = #tpu.core_type<tc>, window_params = [{transform_indices = @transform_0, window_bounds = array<i64: 1, 16, 128>}, {transform_indices = @transform_1, window_bounds = array<i64: 1, 16, 128>}, {transform_indices = @transform_2, window_bounds = array<i64: 1, 16, 128>}, {transform_indices = @transform_3, window_bounds = array<i64: 1, 16, 128>}]} {
    %c0_i32 = arith.constant 0 : i32
    %0 = arith.cmpi eq, %arg2, %c0_i32 : i32
    %1 = arith.extui %0 : i1 to i32
    %c0_i32_0 = arith.constant 0 : i32
    %2 = arith.cmpi ne, %1, %c0_i32_0 : i32
    scf.if %2 {
      %cst = arith.constant -1.000000e+30 : f32
      %12 = vector.broadcast %cst : f32 to vector<4x16x1xf32>
      %c0 = arith.constant 0 : index
      %c0_5 = arith.constant 0 : index
      %c0_6 = arith.constant 0 : index
      %13 = vector.load %arg7[%c0, %c0_5, %c0_6] : memref<4x16x1xf32, #tpu.memory_space<vmem>>, vector<4x16x1xf32>
      tpu.vector_store %arg7[%c0, %c0_5, %c0_6], %12 {strides = array<i32>} : memref<4x16x1xf32, #tpu.memory_space<vmem>>, vector<4x16x1xf32>,
      %cst_7 = arith.constant 0.000000e+00 : f32
      %14 = vector.broadcast %cst_7 : f32 to vector<4x16x1xf32>
      %c0_8 = arith.constant 0 : index
      %c0_9 = arith.constant 0 : index
      %c0_10 = arith.constant 0 : index
      %15 = vector.load %arg8[%c0_8, %c0_9, %c0_10] : memref<4x16x1xf32, #tpu.memory_space<vmem>>, vector<4x16x1xf32>
      tpu.vector_store %arg8[%c0_8, %c0_9, %c0_10], %14 {strides = array<i32>} : memref<4x16x1xf32, #tpu.memory_space<vmem>>, vector<4x16x1xf32>,
      %cst_11 = arith.constant 0.000000e+00 : f32
      %16 = vector.broadcast %cst_11 : f32 to vector<4x16x32xf32>
      %c0_12 = arith.constant 0 : index
      %c0_13 = arith.constant 0 : index
      %c0_14 = arith.constant 0 : index
      %17 = vector.load %arg9[%c0_12, %c0_13, %c0_14] : memref<4x16x32xf32, #tpu.memory_space<vmem>>, vector<4x16x32xf32>
      tpu.vector_store %arg9[%c0_12, %c0_13, %c0_14], %16 {strides = array<i32>} : memref<4x16x32xf32, #tpu.memory_space<vmem>>, vector<4x16x32xf32>,
    } else {
    }
    %c16_i32 = arith.constant 16 : i32
    %3 = arith.muli %arg1, %c16_i32 : i32
    %c16_i32_1 = arith.constant 16 : i32
    %4 = arith.muli %arg2, %c16_i32_1 : i32
    %c15_i32 = arith.constant 15 : i32
    %5 = arith.addi %3, %c15_i32 : i32
    %6 = arith.cmpi sle, %4, %5 : i32
    %7 = arith.extui %6 : i1 to i32
    %c0_i32_2 = arith.constant 0 : i32
    %8 = arith.cmpi ne, %7, %c0_i32_2 : i32
    scf.if %8 {
      %c0 = arith.constant 0 : index
      %c0_5 = arith.constant 0 : index
      %c0_6 = arith.constant 0 : index
      %12 = vector.load %arg3[%c0, %c0_5, %c0_6] : memref<1x16x128xf32, #tpu.memory_space<vmem>>, vector<1x16x128xf32>
      %13 = vector.shape_cast %12 : vector<1x16x128xf32> to vector<16x128xf32>
      %cst = arith.constant 0.176776692 : f32
      %14 = vector.broadcast %cst : f32 to vector<16x128xf32>
      %15 = arith.mulf %13, %14 : vector<16x128xf32>
      %16 = arith.truncf %15 : vector<16x128xf32> to vector<16x128xbf16>
      %c0_7 = arith.constant 0 : index
      %c0_8 = arith.constant 0 : index
      %c0_9 = arith.constant 0 : index
      %17 = vector.load %arg4[%c0_7, %c0_8, %c0_9] : memref<1x16x128xf32, #tpu.memory_space<vmem>>, vector<1x16x128xf32>
      %18 = vector.shape_cast %17 : vector<1x16x128xf32> to vector<16x128xf32>
      %19 = arith.truncf %18 : vector<16x128xf32> to vector<16x128xbf16>
      %c0_10 = arith.constant 0 : index
      %c0_11 = arith.constant 0 : index
      %c0_12 = arith.constant 0 : index
      %20 = vector.load %arg5[%c0_10, %c0_11, %c0_12] : memref<1x16x128xf32, #tpu.memory_space<vmem>>, vector<1x16x128xf32>
      %21 = vector.shape_cast %20 : vector<1x16x128xf32> to vector<16x128xf32>
      %22 = arith.truncf %21 : vector<16x128xf32> to vector<16x128xbf16>
      %23 = tpu.iota {dimensions = array<i32: 0>} : vector<16x16xi32>
      %24 = vector.broadcast %3 : i32 to vector<16x16xi32>
      %25 = arith.addi %24, %23 : vector<16x16xi32>
      %26 = tpu.iota {dimensions = array<i32: 1>} : vector<16x16xi32>
      %27 = vector.broadcast %4 : i32 to vector<16x16xi32>
      %28 = arith.addi %27, %26 : vector<16x16xi32>
      %29 = arith.cmpi sle, %28, %25 : vector<16x16xi32>
      %30 = vector.extract_strided_slice %16 {offsets = [0, 0], sizes = [16, 32], strides = [1, 1]} : vector<16x128xbf16> to vector<16x32xbf16>
      %31 = vector.extract_strided_slice %19 {offsets = [0, 0], sizes = [16, 32], strides = [1, 1]} : vector<16x128xbf16> to vector<16x32xbf16>
      %32 = vector.extract_strided_slice %22 {offsets = [0, 0], sizes = [16, 32], strides = [1, 1]} : vector<16x128xbf16> to vector<16x32xbf16>
      %cst_13 = arith.constant dense<0.000000e+00> : vector<16x16xf32>
      %33 = tpu.matmul %30, %31, %cst_13 {dimension_numbers = #tpu.dot_dimension_numbers<[1], [1], [0], [0], [0, 0, 1, 0], [], []>} : vector<16x32xbf16>, vector<16x32xbf16>, vector<16x16xf32> -> vector<16x16xf32>
      %cst_14 = arith.constant -1.000000e+30 : f32
      %34 = vector.broadcast %cst_14 : f32 to vector<16x16xf32>
      %35 = arith.select %29, %33, %34 : vector<16x16xi1>, vector<16x16xf32>
      %c0_15 = arith.constant 0 : index
      %c0_16 = arith.constant 0 : index
      %c0_17 = arith.constant 0 : index
      %36 = vector.load %arg7[%c0_15, %c0_16, %c0_17] : memref<4x16x1xf32, #tpu.memory_space<vmem>>, vector<1x16x1xf32>
      %37 = vector.shape_cast %36 : vector<1x16x1xf32> to vector<16x1xf32>
      %cst_18 = arith.constant dense<0xFF800000> : vector<16xf32>
      %38 = vector.multi_reduction <maximumf>, %35, %cst_18 [1] : vector<16x16xf32> to vector<16xf32>
      %39 = vector.shape_cast %38 : vector<16xf32> to vector<16x1xf32>
      %40 = arith.maximumf %37, %39 : vector<16x1xf32>
      %41 = arith.subf %37, %40 : vector<16x1xf32>
      %42 = math.exp %41 : vector<16x1xf32>
      %43 = vector.broadcast %40 : vector<16x1xf32> to vector<16x16xf32>
      %44 = arith.subf %35, %43 : vector<16x16xf32>
      %45 = math.exp %44 : vector<16x16xf32>
      %c0_19 = arith.constant 0 : index
      %c0_20 = arith.constant 0 : index
      %c0_21 = arith.constant 0 : index
      %46 = vector.load %arg8[%c0_19, %c0_20, %c0_21] : memref<4x16x1xf32, #tpu.memory_space<vmem>>, vector<1x16x1xf32>
      %47 = vector.shape_cast %46 : vector<1x16x1xf32> to vector<16x1xf32>
      %48 = arith.mulf %42, %47 : vector<16x1xf32>
      %cst_22 = arith.constant dense<0.000000e+00> : vector<16xf32>
      %49 = vector.multi_reduction <add>, %45, %cst_22 [1] : vector<16x16xf32> to vector<16xf32>
      %50 = vector.shape_cast %49 : vector<16xf32> to vector<16x1xf32>
      %51 = arith.addf %48, %50 : vector<16x1xf32>
      %c0_23 = arith.constant 0 : index
      %c0_24 = arith.constant 0 : index
      %c0_25 = arith.constant 0 : index
      %52 = vector.load %arg8[%c0_23, %c0_24, %c0_25] : memref<4x16x1xf32, #tpu.memory_space<vmem>>, vector<1x16x1xf32>
      %53 = vector.shape_cast %52 : vector<1x16x1xf32> to vector<16x1xf32>
      %54 = vector.shape_cast %51 : vector<16x1xf32> to vector<1x16x1xf32>
      tpu.vector_store %arg8[%c0_23, %c0_24, %c0_25], %54 {strides = array<i32>} : memref<4x16x1xf32, #tpu.memory_space<vmem>>, vector<1x16x1xf32>,
      %c0_26 = arith.constant 0 : index
      %c0_27 = arith.constant 0 : index
      %c0_28 = arith.constant 0 : index
      %55 = vector.load %arg9[%c0_26, %c0_27, %c0_28] : memref<4x16x32xf32, #tpu.memory_space<vmem>>, vector<1x16x32xf32>
      %56 = vector.shape_cast %55 : vector<1x16x32xf32> to vector<16x32xf32>
      %57 = vector.broadcast %42 : vector<16x1xf32> to vector<16x32xf32>
      %58 = arith.mulf %57, %56 : vector<16x32xf32>
      %59 = arith.truncf %45 : vector<16x16xf32> to vector<16x16xbf16>
      %cst_29 = arith.constant dense<0.000000e+00> : vector<16x32xf32>
      %60 = tpu.matmul %59, %32, %cst_29 {dimension_numbers = #tpu.dot_dimension_numbers<[1], [0], [0], [1], [0, 0, 1, 1], [], []>} : vector<16x16xbf16>, vector<16x32xbf16>, vector<16x32xf32> -> vector<16x32xf32>
      %61 = arith.addf %58, %60 : vector<16x32xf32>
      %c0_30 = arith.constant 0 : index
      %c0_31 = arith.constant 0 : index
      %c0_32 = arith.constant 0 : index
      %62 = vector.load %arg9[%c0_30, %c0_31, %c0_32] : memref<4x16x32xf32, #tpu.memory_space<vmem>>, vector<1x16x32xf32>
      %63 = vector.shape_cast %62 : vector<1x16x32xf32> to vector<16x32xf32>
      %64 = vector.shape_cast %61 : vector<16x32xf32> to vector<1x16x32xf32>
      tpu.vector_store %arg9[%c0_30, %c0_31, %c0_32], %64 {strides = array<i32>} : memref<4x16x32xf32, #tpu.memory_space<vmem>>, vector<1x16x32xf32>,
      %c0_33 = arith.constant 0 : index
      %c0_34 = arith.constant 0 : index
      %c0_35 = arith.constant 0 : index
      %65 = vector.load %arg7[%c0_33, %c0_34, %c0_35] : memref<4x16x1xf32, #tpu.memory_space<vmem>>, vector<1x16x1xf32>
      %66 = vector.shape_cast %65 : vector<1x16x1xf32> to vector<16x1xf32>
      %67 = vector.shape_cast %40 : vector<16x1xf32> to vector<1x16x1xf32>
      tpu.vector_store %arg7[%c0_33, %c0_34, %c0_35], %67 {strides = array<i32>} : memref<4x16x1xf32, #tpu.memory_space<vmem>>, vector<1x16x1xf32>,
      %68 = vector.extract_strided_slice %16 {offsets = [0, 32], sizes = [16, 32], strides = [1, 1]} : vector<16x128xbf16> to vector<16x32xbf16>
      %69 = vector.extract_strided_slice %19 {offsets = [0, 32], sizes = [16, 32], strides = [1, 1]} : vector<16x128xbf16> to vector<16x32xbf16>
      %70 = vector.extract_strided_slice %22 {offsets = [0, 32], sizes = [16, 32], strides = [1, 1]} : vector<16x128xbf16> to vector<16x32xbf16>
      %cst_36 = arith.constant dense<0.000000e+00> : vector<16x16xf32>
      %71 = tpu.matmul %68, %69, %cst_36 {dimension_numbers = #tpu.dot_dimension_numbers<[1], [1], [0], [0], [0, 0, 1, 0], [], []>} : vector<16x32xbf16>, vector<16x32xbf16>, vector<16x16xf32> -> vector<16x16xf32>
      %cst_37 = arith.constant -1.000000e+30 : f32
      %72 = vector.broadcast %cst_37 : f32 to vector<16x16xf32>
      %73 = arith.select %29, %71, %72 : vector<16x16xi1>, vector<16x16xf32>
      %c1 = arith.constant 1 : index
      %c0_38 = arith.constant 0 : index
      %c0_39 = arith.constant 0 : index
      %74 = vector.load %arg7[%c1, %c0_38, %c0_39] : memref<4x16x1xf32, #tpu.memory_space<vmem>>, vector<1x16x1xf32>
      %75 = vector.shape_cast %74 : vector<1x16x1xf32> to vector<16x1xf32>
      %cst_40 = arith.constant dense<0xFF800000> : vector<16xf32>
      %76 = vector.multi_reduction <maximumf>, %73, %cst_40 [1] : vector<16x16xf32> to vector<16xf32>
      %77 = vector.shape_cast %76 : vector<16xf32> to vector<16x1xf32>
      %78 = arith.maximumf %75, %77 : vector<16x1xf32>
      %79 = arith.subf %75, %78 : vector<16x1xf32>
      %80 = math.exp %79 : vector<16x1xf32>
      %81 = vector.broadcast %78 : vector<16x1xf32> to vector<16x16xf32>
      %82 = arith.subf %73, %81 : vector<16x16xf32>
      %83 = math.exp %82 : vector<16x16xf32>
      %c1_41 = arith.constant 1 : index
      %c0_42 = arith.constant 0 : index
      %c0_43 = arith.constant 0 : index
      %84 = vector.load %arg8[%c1_41, %c0_42, %c0_43] : memref<4x16x1xf32, #tpu.memory_space<vmem>>, vector<1x16x1xf32>
      %85 = vector.shape_cast %84 : vector<1x16x1xf32> to vector<16x1xf32>
      %86 = arith.mulf %80, %85 : vector<16x1xf32>
      %cst_44 = arith.constant dense<0.000000e+00> : vector<16xf32>
      %87 = vector.multi_reduction <add>, %83, %cst_44 [1] : vector<16x16xf32> to vector<16xf32>
      %88 = vector.shape_cast %87 : vector<16xf32> to vector<16x1xf32>
      %89 = arith.addf %86, %88 : vector<16x1xf32>
      %c1_45 = arith.constant 1 : index
      %c0_46 = arith.constant 0 : index
      %c0_47 = arith.constant 0 : index
      %90 = vector.load %arg8[%c1_45, %c0_46, %c0_47] : memref<4x16x1xf32, #tpu.memory_space<vmem>>, vector<1x16x1xf32>
      %91 = vector.shape_cast %90 : vector<1x16x1xf32> to vector<16x1xf32>
      %92 = vector.shape_cast %89 : vector<16x1xf32> to vector<1x16x1xf32>
      tpu.vector_store %arg8[%c1_45, %c0_46, %c0_47], %92 {strides = array<i32>} : memref<4x16x1xf32, #tpu.memory_space<vmem>>, vector<1x16x1xf32>,
      %c1_48 = arith.constant 1 : index
      %c0_49 = arith.constant 0 : index
      %c0_50 = arith.constant 0 : index
      %93 = vector.load %arg9[%c1_48, %c0_49, %c0_50] : memref<4x16x32xf32, #tpu.memory_space<vmem>>, vector<1x16x32xf32>
      %94 = vector.shape_cast %93 : vector<1x16x32xf32> to vector<16x32xf32>
      %95 = vector.broadcast %80 : vector<16x1xf32> to vector<16x32xf32>
      %96 = arith.mulf %95, %94 : vector<16x32xf32>
      %97 = arith.truncf %83 : vector<16x16xf32> to vector<16x16xbf16>
      %cst_51 = arith.constant dense<0.000000e+00> : vector<16x32xf32>
      %98 = tpu.matmul %97, %70, %cst_51 {dimension_numbers = #tpu.dot_dimension_numbers<[1], [0], [0], [1], [0, 0, 1, 1], [], []>} : vector<16x16xbf16>, vector<16x32xbf16>, vector<16x32xf32> -> vector<16x32xf32>
      %99 = arith.addf %96, %98 : vector<16x32xf32>
      %c1_52 = arith.constant 1 : index
      %c0_53 = arith.constant 0 : index
      %c0_54 = arith.constant 0 : index
      %100 = vector.load %arg9[%c1_52, %c0_53, %c0_54] : memref<4x16x32xf32, #tpu.memory_space<vmem>>, vector<1x16x32xf32>
      %101 = vector.shape_cast %100 : vector<1x16x32xf32> to vector<16x32xf32>
      %102 = vector.shape_cast %99 : vector<16x32xf32> to vector<1x16x32xf32>
      tpu.vector_store %arg9[%c1_52, %c0_53, %c0_54], %102 {strides = array<i32>} : memref<4x16x32xf32, #tpu.memory_space<vmem>>, vector<1x16x32xf32>,
      %c1_55 = arith.constant 1 : index
      %c0_56 = arith.constant 0 : index
      %c0_57 = arith.constant 0 : index
      %103 = vector.load %arg7[%c1_55, %c0_56, %c0_57] : memref<4x16x1xf32, #tpu.memory_space<vmem>>, vector<1x16x1xf32>
      %104 = vector.shape_cast %103 : vector<1x16x1xf32> to vector<16x1xf32>
      %105 = vector.shape_cast %78 : vector<16x1xf32> to vector<1x16x1xf32>
      tpu.vector_store %arg7[%c1_55, %c0_56, %c0_57], %105 {strides = array<i32>} : memref<4x16x1xf32, #tpu.memory_space<vmem>>, vector<1x16x1xf32>,
      %106 = vector.extract_strided_slice %16 {offsets = [0, 64], sizes = [16, 32], strides = [1, 1]} : vector<16x128xbf16> to vector<16x32xbf16>
      %107 = vector.extract_strided_slice %19 {offsets = [0, 64], sizes = [16, 32], strides = [1, 1]} : vector<16x128xbf16> to vector<16x32xbf16>
      %108 = vector.extract_strided_slice %22 {offsets = [0, 64], sizes = [16, 32], strides = [1, 1]} : vector<16x128xbf16> to vector<16x32xbf16>
      %cst_58 = arith.constant dense<0.000000e+00> : vector<16x16xf32>
      %109 = tpu.matmul %106, %107, %cst_58 {dimension_numbers = #tpu.dot_dimension_numbers<[1], [1], [0], [0], [0, 0, 1, 0], [], []>} : vector<16x32xbf16>, vector<16x32xbf16>, vector<16x16xf32> -> vector<16x16xf32>
      %cst_59 = arith.constant -1.000000e+30 : f32
      %110 = vector.broadcast %cst_59 : f32 to vector<16x16xf32>
      %111 = arith.select %29, %109, %110 : vector<16x16xi1>, vector<16x16xf32>
      %c2 = arith.constant 2 : index
      %c0_60 = arith.constant 0 : index
      %c0_61 = arith.constant 0 : index
      %112 = vector.load %arg7[%c2, %c0_60, %c0_61] : memref<4x16x1xf32, #tpu.memory_space<vmem>>, vector<1x16x1xf32>
      %113 = vector.shape_cast %112 : vector<1x16x1xf32> to vector<16x1xf32>
      %cst_62 = arith.constant dense<0xFF800000> : vector<16xf32>
      %114 = vector.multi_reduction <maximumf>, %111, %cst_62 [1] : vector<16x16xf32> to vector<16xf32>
      %115 = vector.shape_cast %114 : vector<16xf32> to vector<16x1xf32>
      %116 = arith.maximumf %113, %115 : vector<16x1xf32>
      %117 = arith.subf %113, %116 : vector<16x1xf32>
      %118 = math.exp %117 : vector<16x1xf32>
      %119 = vector.broadcast %116 : vector<16x1xf32> to vector<16x16xf32>
      %120 = arith.subf %111, %119 : vector<16x16xf32>
      %121 = math.exp %120 : vector<16x16xf32>
      %c2_63 = arith.constant 2 : index
      %c0_64 = arith.constant 0 : index
      %c0_65 = arith.constant 0 : index
      %122 = vector.load %arg8[%c2_63, %c0_64, %c0_65] : memref<4x16x1xf32, #tpu.memory_space<vmem>>, vector<1x16x1xf32>
      %123 = vector.shape_cast %122 : vector<1x16x1xf32> to vector<16x1xf32>
      %124 = arith.mulf %118, %123 : vector<16x1xf32>
      %cst_66 = arith.constant dense<0.000000e+00> : vector<16xf32>
      %125 = vector.multi_reduction <add>, %121, %cst_66 [1] : vector<16x16xf32> to vector<16xf32>
      %126 = vector.shape_cast %125 : vector<16xf32> to vector<16x1xf32>
      %127 = arith.addf %124, %126 : vector<16x1xf32>
      %c2_67 = arith.constant 2 : index
      %c0_68 = arith.constant 0 : index
      %c0_69 = arith.constant 0 : index
      %128 = vector.load %arg8[%c2_67, %c0_68, %c0_69] : memref<4x16x1xf32, #tpu.memory_space<vmem>>, vector<1x16x1xf32>
      %129 = vector.shape_cast %128 : vector<1x16x1xf32> to vector<16x1xf32>
      %130 = vector.shape_cast %127 : vector<16x1xf32> to vector<1x16x1xf32>
      tpu.vector_store %arg8[%c2_67, %c0_68, %c0_69], %130 {strides = array<i32>} : memref<4x16x1xf32, #tpu.memory_space<vmem>>, vector<1x16x1xf32>,
      %c2_70 = arith.constant 2 : index
      %c0_71 = arith.constant 0 : index
      %c0_72 = arith.constant 0 : index
      %131 = vector.load %arg9[%c2_70, %c0_71, %c0_72] : memref<4x16x32xf32, #tpu.memory_space<vmem>>, vector<1x16x32xf32>
      %132 = vector.shape_cast %131 : vector<1x16x32xf32> to vector<16x32xf32>
      %133 = vector.broadcast %118 : vector<16x1xf32> to vector<16x32xf32>
      %134 = arith.mulf %133, %132 : vector<16x32xf32>
      %135 = arith.truncf %121 : vector<16x16xf32> to vector<16x16xbf16>
      %cst_73 = arith.constant dense<0.000000e+00> : vector<16x32xf32>
      %136 = tpu.matmul %135, %108, %cst_73 {dimension_numbers = #tpu.dot_dimension_numbers<[1], [0], [0], [1], [0, 0, 1, 1], [], []>} : vector<16x16xbf16>, vector<16x32xbf16>, vector<16x32xf32> -> vector<16x32xf32>
      %137 = arith.addf %134, %136 : vector<16x32xf32>
      %c2_74 = arith.constant 2 : index
      %c0_75 = arith.constant 0 : index
      %c0_76 = arith.constant 0 : index
      %138 = vector.load %arg9[%c2_74, %c0_75, %c0_76] : memref<4x16x32xf32, #tpu.memory_space<vmem>>, vector<1x16x32xf32>
      %139 = vector.shape_cast %138 : vector<1x16x32xf32> to vector<16x32xf32>
      %140 = vector.shape_cast %137 : vector<16x32xf32> to vector<1x16x32xf32>
      tpu.vector_store %arg9[%c2_74, %c0_75, %c0_76], %140 {strides = array<i32>} : memref<4x16x32xf32, #tpu.memory_space<vmem>>, vector<1x16x32xf32>,
      %c2_77 = arith.constant 2 : index
      %c0_78 = arith.constant 0 : index
      %c0_79 = arith.constant 0 : index
      %141 = vector.load %arg7[%c2_77, %c0_78, %c0_79] : memref<4x16x1xf32, #tpu.memory_space<vmem>>, vector<1x16x1xf32>
      %142 = vector.shape_cast %141 : vector<1x16x1xf32> to vector<16x1xf32>
      %143 = vector.shape_cast %116 : vector<16x1xf32> to vector<1x16x1xf32>
      tpu.vector_store %arg7[%c2_77, %c0_78, %c0_79], %143 {strides = array<i32>} : memref<4x16x1xf32, #tpu.memory_space<vmem>>, vector<1x16x1xf32>,
      %144 = vector.extract_strided_slice %16 {offsets = [0, 96], sizes = [16, 32], strides = [1, 1]} : vector<16x128xbf16> to vector<16x32xbf16>
      %145 = vector.extract_strided_slice %19 {offsets = [0, 96], sizes = [16, 32], strides = [1, 1]} : vector<16x128xbf16> to vector<16x32xbf16>
      %146 = vector.extract_strided_slice %22 {offsets = [0, 96], sizes = [16, 32], strides = [1, 1]} : vector<16x128xbf16> to vector<16x32xbf16>
      %cst_80 = arith.constant dense<0.000000e+00> : vector<16x16xf32>
      %147 = tpu.matmul %144, %145, %cst_80 {dimension_numbers = #tpu.dot_dimension_numbers<[1], [1], [0], [0], [0, 0, 1, 0], [], []>} : vector<16x32xbf16>, vector<16x32xbf16>, vector<16x16xf32> -> vector<16x16xf32>
      %cst_81 = arith.constant -1.000000e+30 : f32
      %148 = vector.broadcast %cst_81 : f32 to vector<16x16xf32>
      %149 = arith.select %29, %147, %148 : vector<16x16xi1>, vector<16x16xf32>
      %c3 = arith.constant 3 : index
      %c0_82 = arith.constant 0 : index
      %c0_83 = arith.constant 0 : index
      %150 = vector.load %arg7[%c3, %c0_82, %c0_83] : memref<4x16x1xf32, #tpu.memory_space<vmem>>, vector<1x16x1xf32>
      %151 = vector.shape_cast %150 : vector<1x16x1xf32> to vector<16x1xf32>
      %cst_84 = arith.constant dense<0xFF800000> : vector<16xf32>
      %152 = vector.multi_reduction <maximumf>, %149, %cst_84 [1] : vector<16x16xf32> to vector<16xf32>
      %153 = vector.shape_cast %152 : vector<16xf32> to vector<16x1xf32>
      %154 = arith.maximumf %151, %153 : vector<16x1xf32>
      %155 = arith.subf %151, %154 : vector<16x1xf32>
      %156 = math.exp %155 : vector<16x1xf32>
      %157 = vector.broadcast %154 : vector<16x1xf32> to vector<16x16xf32>
      %158 = arith.subf %149, %157 : vector<16x16xf32>
      %159 = math.exp %158 : vector<16x16xf32>
      %c3_85 = arith.constant 3 : index
      %c0_86 = arith.constant 0 : index
      %c0_87 = arith.constant 0 : index
      %160 = vector.load %arg8[%c3_85, %c0_86, %c0_87] : memref<4x16x1xf32, #tpu.memory_space<vmem>>, vector<1x16x1xf32>
      %161 = vector.shape_cast %160 : vector<1x16x1xf32> to vector<16x1xf32>
      %162 = arith.mulf %156, %161 : vector<16x1xf32>
      %cst_88 = arith.constant dense<0.000000e+00> : vector<16xf32>
      %163 = vector.multi_reduction <add>, %159, %cst_88 [1] : vector<16x16xf32> to vector<16xf32>
      %164 = vector.shape_cast %163 : vector<16xf32> to vector<16x1xf32>
      %165 = arith.addf %162, %164 : vector<16x1xf32>
      %c3_89 = arith.constant 3 : index
      %c0_90 = arith.constant 0 : index
      %c0_91 = arith.constant 0 : index
      %166 = vector.load %arg8[%c3_89, %c0_90, %c0_91] : memref<4x16x1xf32, #tpu.memory_space<vmem>>, vector<1x16x1xf32>
      %167 = vector.shape_cast %166 : vector<1x16x1xf32> to vector<16x1xf32>
      %168 = vector.shape_cast %165 : vector<16x1xf32> to vector<1x16x1xf32>
      tpu.vector_store %arg8[%c3_89, %c0_90, %c0_91], %168 {strides = array<i32>} : memref<4x16x1xf32, #tpu.memory_space<vmem>>, vector<1x16x1xf32>,
      %c3_92 = arith.constant 3 : index
      %c0_93 = arith.constant 0 : index
      %c0_94 = arith.constant 0 : index
      %169 = vector.load %arg9[%c3_92, %c0_93, %c0_94] : memref<4x16x32xf32, #tpu.memory_space<vmem>>, vector<1x16x32xf32>
      %170 = vector.shape_cast %169 : vector<1x16x32xf32> to vector<16x32xf32>
      %171 = vector.broadcast %156 : vector<16x1xf32> to vector<16x32xf32>
      %172 = arith.mulf %171, %170 : vector<16x32xf32>
      %173 = arith.truncf %159 : vector<16x16xf32> to vector<16x16xbf16>
      %cst_95 = arith.constant dense<0.000000e+00> : vector<16x32xf32>
      %174 = tpu.matmul %173, %146, %cst_95 {dimension_numbers = #tpu.dot_dimension_numbers<[1], [0], [0], [1], [0, 0, 1, 1], [], []>} : vector<16x16xbf16>, vector<16x32xbf16>, vector<16x32xf32> -> vector<16x32xf32>
      %175 = arith.addf %172, %174 : vector<16x32xf32>
      %c3_96 = arith.constant 3 : index
      %c0_97 = arith.constant 0 : index
      %c0_98 = arith.constant 0 : index
      %176 = vector.load %arg9[%c3_96, %c0_97, %c0_98] : memref<4x16x32xf32, #tpu.memory_space<vmem>>, vector<1x16x32xf32>
      %177 = vector.shape_cast %176 : vector<1x16x32xf32> to vector<16x32xf32>
      %178 = vector.shape_cast %175 : vector<16x32xf32> to vector<1x16x32xf32>
      tpu.vector_store %arg9[%c3_96, %c0_97, %c0_98], %178 {strides = array<i32>} : memref<4x16x32xf32, #tpu.memory_space<vmem>>, vector<1x16x32xf32>,
      %c3_99 = arith.constant 3 : index
      %c0_100 = arith.constant 0 : index
      %c0_101 = arith.constant 0 : index
      %179 = vector.load %arg7[%c3_99, %c0_100, %c0_101] : memref<4x16x1xf32, #tpu.memory_space<vmem>>, vector<1x16x1xf32>
      %180 = vector.shape_cast %179 : vector<1x16x1xf32> to vector<16x1xf32>
      %181 = vector.shape_cast %154 : vector<16x1xf32> to vector<1x16x1xf32>
      tpu.vector_store %arg7[%c3_99, %c0_100, %c0_101], %181 {strides = array<i32>} : memref<4x16x1xf32, #tpu.memory_space<vmem>>, vector<1x16x1xf32>,
    } else {
    }
    %c0_i32_3 = arith.constant 0 : i32
    %9 = arith.cmpi eq, %arg2, %c0_i32_3 : i32
    %10 = arith.extui %9 : i1 to i32
    %c0_i32_4 = arith.constant 0 : i32
    %11 = arith.cmpi ne, %10, %c0_i32_4 : i32
    scf.if %11 {
      %c0 = arith.constant 0 : index
      %c0_5 = arith.constant 0 : index
      %c0_6 = arith.constant 0 : index
      %12 = vector.load %arg8[%c0, %c0_5, %c0_6] : memref<4x16x1xf32, #tpu.memory_space<vmem>>, vector<1x16x1xf32>
      %13 = vector.shape_cast %12 : vector<1x16x1xf32> to vector<16x1xf32>
      %14 = tpu.reciprocal %13 {approx = true} : vector<16x1xf32> -> vector<16x1xf32>
      %c0_7 = arith.constant 0 : index
      %c0_8 = arith.constant 0 : index
      %c0_9 = arith.constant 0 : index
      %15 = vector.load %arg9[%c0_7, %c0_8, %c0_9] : memref<4x16x32xf32, #tpu.memory_space<vmem>>, vector<1x16x32xf32>
      %16 = vector.shape_cast %15 : vector<1x16x32xf32> to vector<16x32xf32>
      %17 = vector.broadcast %14 : vector<16x1xf32> to vector<16x32xf32>
      %18 = arith.mulf %16, %17 : vector<16x32xf32>
      %c1 = arith.constant 1 : index
      %c0_10 = arith.constant 0 : index
      %c0_11 = arith.constant 0 : index
      %19 = vector.load %arg8[%c1, %c0_10, %c0_11] : memref<4x16x1xf32, #tpu.memory_space<vmem>>, vector<1x16x1xf32>
      %20 = vector.shape_cast %19 : vector<1x16x1xf32> to vector<16x1xf32>
      %21 = tpu.reciprocal %20 {approx = true} : vector<16x1xf32> -> vector<16x1xf32>
      %c1_12 = arith.constant 1 : index
      %c0_13 = arith.constant 0 : index
      %c0_14 = arith.constant 0 : index
      %22 = vector.load %arg9[%c1_12, %c0_13, %c0_14] : memref<4x16x32xf32, #tpu.memory_space<vmem>>, vector<1x16x32xf32>
      %23 = vector.shape_cast %22 : vector<1x16x32xf32> to vector<16x32xf32>
      %24 = vector.broadcast %21 : vector<16x1xf32> to vector<16x32xf32>
      %25 = arith.mulf %23, %24 : vector<16x32xf32>
      %c2 = arith.constant 2 : index
      %c0_15 = arith.constant 0 : index
      %c0_16 = arith.constant 0 : index
      %26 = vector.load %arg8[%c2, %c0_15, %c0_16] : memref<4x16x1xf32, #tpu.memory_space<vmem>>, vector<1x16x1xf32>
      %27 = vector.shape_cast %26 : vector<1x16x1xf32> to vector<16x1xf32>
      %28 = tpu.reciprocal %27 {approx = true} : vector<16x1xf32> -> vector<16x1xf32>
      %c2_17 = arith.constant 2 : index
      %c0_18 = arith.constant 0 : index
      %c0_19 = arith.constant 0 : index
      %29 = vector.load %arg9[%c2_17, %c0_18, %c0_19] : memref<4x16x32xf32, #tpu.memory_space<vmem>>, vector<1x16x32xf32>
      %30 = vector.shape_cast %29 : vector<1x16x32xf32> to vector<16x32xf32>
      %31 = vector.broadcast %28 : vector<16x1xf32> to vector<16x32xf32>
      %32 = arith.mulf %30, %31 : vector<16x32xf32>
      %c3 = arith.constant 3 : index
      %c0_20 = arith.constant 0 : index
      %c0_21 = arith.constant 0 : index
      %33 = vector.load %arg8[%c3, %c0_20, %c0_21] : memref<4x16x1xf32, #tpu.memory_space<vmem>>, vector<1x16x1xf32>
      %34 = vector.shape_cast %33 : vector<1x16x1xf32> to vector<16x1xf32>
      %35 = tpu.reciprocal %34 {approx = true} : vector<16x1xf32> -> vector<16x1xf32>
      %c3_22 = arith.constant 3 : index
      %c0_23 = arith.constant 0 : index
      %c0_24 = arith.constant 0 : index
      %36 = vector.load %arg9[%c3_22, %c0_23, %c0_24] : memref<4x16x32xf32, #tpu.memory_space<vmem>>, vector<1x16x32xf32>
      %37 = vector.shape_cast %36 : vector<1x16x32xf32> to vector<16x32xf32>
      %38 = vector.broadcast %35 : vector<16x1xf32> to vector<16x32xf32>
      %39 = arith.mulf %37, %38 : vector<16x32xf32>
      %40 = tpu.concatenate %18, %25, %32, %39 in 1 : vector<16x32xf32>, vector<16x32xf32>, vector<16x32xf32>, vector<16x32xf32> -> vector<16x128xf32>
      %c0_25 = arith.constant 0 : index
      %c0_26 = arith.constant 0 : index
      %c0_27 = arith.constant 0 : index
      %41 = vector.load %arg6[%c0_25, %c0_26, %c0_27] : memref<1x16x128xf32, #tpu.memory_space<vmem>>, vector<1x16x128xf32>
      %42 = vector.shape_cast %41 : vector<1x16x128xf32> to vector<16x128xf32>
      %43 = vector.shape_cast %40 : vector<16x128xf32> to vector<1x16x128xf32>
      tpu.vector_store %arg6[%c0_25, %c0_26, %c0_27], %43 {strides = array<i32>} : memref<1x16x128xf32, #tpu.memory_space<vmem>>, vector<1x16x128xf32>,
    } else {
    }
    return
  }
  func.func @transform_0(%arg0: i32, %arg1: i32, %arg2: i32) -> (i32, i32, i32) {
    %c0_i32 = arith.constant 0 : i32
    %c0_i32_0 = arith.constant 0 : i32
    return %arg0, %arg1, %c0_i32 : i32, i32, i32
  }
  func.func @transform_1(%arg0: i32, %arg1: i32, %arg2: i32) -> (i32, i32, i32) {
    %c0_i32 = arith.constant 0 : i32
    %c0_i32_0 = arith.constant 0 : i32
    return %arg0, %arg2, %c0_i32 : i32, i32, i32
  }
  func.func @transform_2(%arg0: i32, %arg1: i32, %arg2: i32) -> (i32, i32, i32) {
    %c0_i32 = arith.constant 0 : i32
    %c0_i32_0 = arith.constant 0 : i32
    return %arg0, %arg2, %c0_i32 : i32, i32, i32
  }
  func.func @transform_3(%arg0: i32, %arg1: i32, %arg2: i32) -> (i32, i32, i32) {
    %c0_i32 = arith.constant 0 : i32
    %c0_i32_0 = arith.constant 0 : i32
    return %arg0, %arg1, %c0_i32 : i32, i32, i32
  }
}

module attributes {stable_mosaic.version = 11 : i64} {
  func.func @_matmul_rmsnorm_kernel(%arg0: i32, %arg1: i32, %arg2: memref<32x256xf32, #tpu.memory_space<vmem>>, %arg3: memref<256x128xbf16, #tpu.memory_space<vmem>>, %arg4: memref<1x128xf32, #tpu.memory_space<vmem>>, %arg5: memref<32x128xf32, #tpu.memory_space<vmem>>, %arg6: memref<32x128xf32, #tpu.memory_space<vmem>>) attributes {dimension_semantics = [#tpu.dimension_semantics<parallel>, #tpu.dimension_semantics<arbitrary>], iteration_bounds = array<i64: 1, 1>, scalar_prefetch = 0 : i64, scratch_operands = 1 : i64, tpu.core_type = #tpu.core_type<tc>, window_params = [{transform_indices = @transform_0, window_bounds = array<i64: 32, 256>}, {transform_indices = @transform_1, window_bounds = array<i64: 256, 128>}, {pipeline_mode = #tpu.pipeline_mode<synchronous>, transform_indices = @transform_2, window_bounds = array<i64: 1, 128>}, {transform_indices = @transform_3, window_bounds = array<i64: 32, 128>}]} {
    %c0_i32 = arith.constant 0 : i32
    %0 = arith.cmpi eq, %arg1, %c0_i32 : i32
    %1 = arith.extui %0 : i1 to i32
    %c0_i32_0 = arith.constant 0 : i32
    %2 = arith.cmpi ne, %1, %c0_i32_0 : i32
    scf.if %2 {
      %cst_10 = arith.constant 0.000000e+00 : f32
      %13 = vector.broadcast %cst_10 : f32 to vector<32x128xf32>
      %c0_11 = arith.constant 0 : index
      %c0_12 = arith.constant 0 : index
      %14 = vector.load %arg6[%c0_11, %c0_12] : memref<32x128xf32, #tpu.memory_space<vmem>>, vector<32x128xf32>
      tpu.vector_store %arg6[%c0_11, %c0_12], %13 {strides = array<i32>} : memref<32x128xf32, #tpu.memory_space<vmem>>, vector<32x128xf32>,
    } else {
    }
    %c0 = arith.constant 0 : index
    %c0_1 = arith.constant 0 : index
    %3 = vector.load %arg6[%c0, %c0_1] : memref<32x128xf32, #tpu.memory_space<vmem>>, vector<32x128xf32>
    %c0_2 = arith.constant 0 : index
    %c0_3 = arith.constant 0 : index
    %4 = vector.load %arg2[%c0_2, %c0_3] : memref<32x256xf32, #tpu.memory_space<vmem>>, vector<32x256xf32>
    %5 = arith.truncf %4 : vector<32x256xf32> to vector<32x256xbf16>
    %c0_4 = arith.constant 0 : index
    %c0_5 = arith.constant 0 : index
    %6 = vector.load %arg3[%c0_4, %c0_5] : memref<256x128xbf16, #tpu.memory_space<vmem>>, vector<256x128xbf16>
    %cst = arith.constant dense<0.000000e+00> : vector<32x128xf32>
    %7 = tpu.matmul %5, %6, %cst {dimension_numbers = #tpu.dot_dimension_numbers<[1], [0], [0], [1], [0, 0, 1, 1], [], []>} : vector<32x256xbf16>, vector<256x128xbf16>, vector<32x128xf32> -> vector<32x128xf32>
    %8 = arith.addf %3, %7 : vector<32x128xf32>
    %c0_6 = arith.constant 0 : index
    %c0_7 = arith.constant 0 : index
    %9 = vector.load %arg6[%c0_6, %c0_7] : memref<32x128xf32, #tpu.memory_space<vmem>>, vector<32x128xf32>
    tpu.vector_store %arg6[%c0_6, %c0_7], %8 {strides = array<i32>} : memref<32x128xf32, #tpu.memory_space<vmem>>, vector<32x128xf32>,
    %c0_i32_8 = arith.constant 0 : i32
    %10 = arith.cmpi eq, %arg1, %c0_i32_8 : i32
    %11 = arith.extui %10 : i1 to i32
    %c0_i32_9 = arith.constant 0 : i32
    %12 = arith.cmpi ne, %11, %c0_i32_9 : i32
    scf.if %12 {
      %c0_10 = arith.constant 0 : index
      %c0_11 = arith.constant 0 : index
      %13 = vector.load %arg6[%c0_10, %c0_11] : memref<32x128xf32, #tpu.memory_space<vmem>>, vector<32x128xf32>
      %14 = arith.mulf %13, %13 : vector<32x128xf32>
      %cst_12 = arith.constant dense<0.000000e+00> : vector<32xf32>
      %15 = vector.multi_reduction <add>, %14, %cst_12 [1] : vector<32x128xf32> to vector<32xf32>
      %16 = vector.shape_cast %15 : vector<32xf32> to vector<32x1xf32>
      %cst_13 = arith.constant 1.280000e+02 : f32
      %17 = vector.broadcast %cst_13 : f32 to vector<32x1xf32>
      %18 = arith.divf %16, %17 : vector<32x1xf32>
      %cst_14 = arith.constant 9.99999974E-6 : f32
      %19 = vector.broadcast %cst_14 : f32 to vector<32x1xf32>
      %20 = arith.addf %18, %19 : vector<32x1xf32>
      %21 = math.rsqrt %20 : vector<32x1xf32>
      %22 = vector.broadcast %21 : vector<32x1xf32> to vector<32x128xf32>
      %23 = arith.mulf %13, %22 : vector<32x128xf32>
      %c0_15 = arith.constant 0 : index
      %c0_16 = arith.constant 0 : index
      %24 = vector.load %arg4[%c0_15, %c0_16] : memref<1x128xf32, #tpu.memory_space<vmem>>, vector<1x128xf32>
      %25 = vector.broadcast %24 : vector<1x128xf32> to vector<32x128xf32>
      %26 = arith.mulf %23, %25 : vector<32x128xf32>
      %c0_17 = arith.constant 0 : index
      %c0_18 = arith.constant 0 : index
      %27 = vector.load %arg5[%c0_17, %c0_18] : memref<32x128xf32, #tpu.memory_space<vmem>>, vector<32x128xf32>
      tpu.vector_store %arg5[%c0_17, %c0_18], %26 {strides = array<i32>} : memref<32x128xf32, #tpu.memory_space<vmem>>, vector<32x128xf32>,
    } else {
    }
    return
  }
  func.func @transform_0(%arg0: i32, %arg1: i32) -> (i32, i32) {
    %c0_i32 = arith.constant 0 : i32
    return %arg0, %arg1 : i32, i32
  }
  func.func @transform_1(%arg0: i32, %arg1: i32) -> (i32, i32) {
    %c0_i32 = arith.constant 0 : i32
    %c0_i32_0 = arith.constant 0 : i32
    return %arg1, %c0_i32 : i32, i32
  }
  func.func @transform_2(%arg0: i32, %arg1: i32) -> (i32, i32) {
    %c0_i32 = arith.constant 0 : i32
    %c0_i32_0 = arith.constant 0 : i32
    %c0_i32_1 = arith.constant 0 : i32
    return %c0_i32, %c0_i32_0 : i32, i32
  }
  func.func @transform_3(%arg0: i32, %arg1: i32) -> (i32, i32) {
    %c0_i32 = arith.constant 0 : i32
    %c0_i32_0 = arith.constant 0 : i32
    return %arg0, %c0_i32 : i32, i32
  }
}

module attributes {stable_mosaic.version = 11 : i64} {
  func.func @_rmsnorm_kernel(%arg0: i32, %arg1: memref<32x128xf32, #tpu.memory_space<vmem>>, %arg2: memref<1x128xf32, #tpu.memory_space<vmem>>, %arg3: memref<32x128xf32, #tpu.memory_space<vmem>>) attributes {dimension_semantics = [#tpu.dimension_semantics<parallel>], iteration_bounds = array<i64: 1>, scalar_prefetch = 0 : i64, scratch_operands = 0 : i64, tpu.core_type = #tpu.core_type<tc>, window_params = [{transform_indices = @transform_0, window_bounds = array<i64: 32, 128>}, {pipeline_mode = #tpu.pipeline_mode<synchronous>, transform_indices = @transform_1, window_bounds = array<i64: 1, 128>}, {transform_indices = @transform_2, window_bounds = array<i64: 32, 128>}]} {
    %c0 = arith.constant 0 : index
    %c0_0 = arith.constant 0 : index
    %0 = vector.load %arg1[%c0, %c0_0] : memref<32x128xf32, #tpu.memory_space<vmem>>, vector<32x128xf32>
    %1 = arith.mulf %0, %0 : vector<32x128xf32>
    %cst = arith.constant dense<0.000000e+00> : vector<32xf32>
    %2 = vector.multi_reduction <add>, %1, %cst [1] : vector<32x128xf32> to vector<32xf32>
    %3 = vector.shape_cast %2 : vector<32xf32> to vector<32x1xf32>
    %cst_1 = arith.constant 1.280000e+02 : f32
    %4 = vector.broadcast %cst_1 : f32 to vector<32x1xf32>
    %5 = arith.divf %3, %4 : vector<32x1xf32>
    %cst_2 = arith.constant 9.99999974E-6 : f32
    %6 = vector.broadcast %cst_2 : f32 to vector<32x1xf32>
    %7 = arith.addf %5, %6 : vector<32x1xf32>
    %8 = math.rsqrt %7 : vector<32x1xf32>
    %9 = vector.broadcast %8 : vector<32x1xf32> to vector<32x128xf32>
    %10 = arith.mulf %0, %9 : vector<32x128xf32>
    %c0_3 = arith.constant 0 : index
    %c0_4 = arith.constant 0 : index
    %11 = vector.load %arg2[%c0_3, %c0_4] : memref<1x128xf32, #tpu.memory_space<vmem>>, vector<1x128xf32>
    %12 = vector.broadcast %11 : vector<1x128xf32> to vector<32x128xf32>
    %13 = arith.mulf %10, %12 : vector<32x128xf32>
    %c0_5 = arith.constant 0 : index
    %c0_6 = arith.constant 0 : index
    %14 = vector.load %arg3[%c0_5, %c0_6] : memref<32x128xf32, #tpu.memory_space<vmem>>, vector<32x128xf32>
    tpu.vector_store %arg3[%c0_5, %c0_6], %13 {strides = array<i32>} : memref<32x128xf32, #tpu.memory_space<vmem>>, vector<32x128xf32>,
    return
  }
  func.func @transform_0(%arg0: i32) -> (i32, i32) {
    %c0_i32 = arith.constant 0 : i32
    %c0_i32_0 = arith.constant 0 : i32
    return %arg0, %c0_i32 : i32, i32
  }
  func.func @transform_1(%arg0: i32) -> (i32, i32) {
    %c0_i32 = arith.constant 0 : i32
    %c0_i32_0 = arith.constant 0 : i32
    %c0_i32_1 = arith.constant 0 : i32
    return %c0_i32, %c0_i32_0 : i32, i32
  }
  func.func @transform_2(%arg0: i32) -> (i32, i32) {
    %c0_i32 = arith.constant 0 : i32
    %c0_i32_0 = arith.constant 0 : i32
    return %arg0, %c0_i32 : i32, i32
  }
}

</mosaic_0001>

<llo_original>
// kernel: olmo_forward.16
$region0: #{olmo_forward.16}
  #allocation0 [shape = 'u32[]', space=smem, size = 0x4, offset = 0x4, fixed_abs, tag = 'smem constant byte address 0x4 - core index']
  #allocation1 [shape = 'u32[144,128]{1,0:T(1,128)}', space=vmem, size = 0x12000, scoped, tag = 'internal scratch']
  #allocation2 [shape = 'f32[32,128]{1,0:T(8,128)}', space=vmem, size = 0x4000, scoped, tag = 'scratch operand']
  %s0 = inlined_call_operand.vmem [shape: f32[32,128], index: 0, kind: input, shape index: {}]
  %s1 = inlined_call_operand.vmem [shape: bf16[128,128], index: 1, kind: input, shape index: {}]
  %s2 = inlined_call_operand.vmem [shape: f32[1,128], index: 2, kind: input, shape index: {}]
  %s3 = inlined_call_operand.vmem [shape: f32[32,128], index: 3, kind: output, shape index: {}]
  %s4 = sld [smem:[#allocation0]]
  $region30: #{olmo_forward.16} parent=0
    _
  %s6 = ssub.s32 1, %s4
  %s7 = scalar_select 0, %s6, %s4
  // Predicated region
  $region2: #{olmo_forward.16} parent=0 // pred_check
    _
  $region3: #{olmo_forward.16} parent=0 // pred_check_branch
    %9 = sbr.rel (0) target = $region5
  $region4: #{olmo_forward.16} parent=0 // pred_region
    _
  $region5: #{olmo_forward.16} parent=0 // pred_fallthru
    _
  // Predicated region
  $region6: #{olmo_forward.16} parent=0 // pred_check
    _
  $region7: #{olmo_forward.16} parent=0 // pred_check_branch
    %11 = sbr.rel (0) target = $region9
  $region8: #{olmo_forward.16} parent=0 // pred_region
    _
  $region9: #{olmo_forward.16} parent=0 // pred_fallthru
    _
  // Predicated region
  $region10: #{olmo_forward.16} parent=0 // pred_check
    _
  $region11: #{olmo_forward.16} parent=0 // pred_check_branch
    %13 = sbr.rel (0) target = $region13
  $region12: #{olmo_forward.16} parent=0 // pred_region
    _
  $region13: #{olmo_forward.16} parent=0 // pred_fallthru
    _
  %p15 = scmp.eq.s32.totalorder 0, 0
  // Predicated region
  $region14: #{olmo_forward.16} parent=0 // pred_check
    %p16 = pneg %p15
  $region15: #{olmo_forward.16} parent=0 // pred_check_branch
    %18 = sbr.rel (%p16) target = $region17
  $region16: #{olmo_forward.16} parent=0 // pred_region
    %19 = vst [vmem:[#allocation2] sm:$0xff] 0.0
    %20 = vst [vmem:[#allocation2 + $0x8] sm:$0xff] 0.0
    %21 = vst [vmem:[#allocation2 + $0x10] sm:$0xff] 0.0
    %22 = vst [vmem:[#allocation2 + $0x18] sm:$0xff] 0.0
  $region17: #{olmo_forward.16} parent=0 // pred_fallthru
    _
  %v23 = vld [vmem:[#allocation2] sm:$0xff]
  %v24 = vld [vmem:[#allocation2 + $0x8] sm:$0xff]
  %v25 = vld [vmem:[#allocation2 + $0x10] sm:$0xff]
  %v26 = vld [vmem:[#allocation2 + $0x18] sm:$0xff]
  %v27 = vld [vmem:[%s0] sm:$0xff]
  %v28 = vld [vmem:[%s0 + $0x8] sm:$0xff]
  %v29 = vld [vmem:[%s0 + $0x10] sm:$0xff]
  %v30 = vld [vmem:[%s0 + $0x18] sm:$0xff]
  %v31 = vpack.c.bf16 %v28, %v27
  %v32 = vpack.c.bf16 %v30, %v29
  %v33 = vld [vmem:[%s1] sm:$0xf]
  %v34 = vld [vmem:[%s1 + $0x4] sm:$0xf]
  %v35 = vld [vmem:[%s1 + $0x8] sm:$0xf]
  %v36 = vld [vmem:[%s1 + $0xc] sm:$0xf]
  %v37 = vld [vmem:[%s1 + $0x10] sm:$0xf]
  %v38 = vld [vmem:[%s1 + $0x14] sm:$0xf]
  %v39 = vld [vmem:[%s1 + $0x18] sm:$0xf]
  %v40 = vld [vmem:[%s1 + $0x1c] sm:$0xf]
  %v41 = vld [vmem:[%s1 + $0x20] sm:$0xf]
  %v42 = vld [vmem:[%s1 + $0x24] sm:$0xf]
  %v43 = vld [vmem:[%s1 + $0x28] sm:$0xf]
  %v44 = vld [vmem:[%s1 + $0x2c] sm:$0xf]
  %v45 = vld [vmem:[%s1 + $0x30] sm:$0xf]
  %v46 = vld [vmem:[%s1 + $0x34] sm:$0xf]
  %v47 = vld [vmem:[%s1 + $0x38] sm:$0xf]
  %v48 = vld [vmem:[%s1 + $0x3c] sm:$0xf]
  %v65 = vunpack.c.l.b16 %v33
  %v66 = vunpack.c.l.b16 %v34
  %v67 = vunpack.c.l.b16 %v35
  %v68 = vunpack.c.l.b16 %v36
  %v69 = vunpack.c.l.b16 %v37
  %v70 = vunpack.c.l.b16 %v38
  %v71 = vunpack.c.l.b16 %v39
  %v72 = vunpack.c.l.b16 %v40
  %v73 = vunpack.c.l.b16 %v41
  %v74 = vunpack.c.l.b16 %v42
  %v75 = vunpack.c.l.b16 %v43
  %v76 = vunpack.c.l.b16 %v44
  %v77 = vunpack.c.l.b16 %v45
  %v78 = vunpack.c.l.b16 %v46
  %v79 = vunpack.c.l.b16 %v47
  %v80 = vunpack.c.l.b16 %v48
  %v81 = vpack.c.b16 %v66, %v65
  %v82 = vpack.c.b16 %v68, %v67
  %v83 = vpack.c.b16 %v70, %v69
  %v84 = vpack.c.b16 %v72, %v71
  %v85 = vpack.c.b16 %v74, %v73
  %v86 = vpack.c.b16 %v76, %v75
  %v87 = vpack.c.b16 %v78, %v77
  %v88 = vpack.c.b16 %v80, %v79
  %97 = vmatprep.subr.bf16.mxu0 0
  %98 = vmatpush1.bf16.msra.mxu0 %v81
  %99 = vmatprep.subr.bf16.mxu0 0
  %100 = vmatpush1.bf16.msra.mxu0 %v82
  %101 = vmatprep.subr.bf16.mxu0 0
  %102 = vmatpush1.bf16.msra.mxu0 %v83
  %103 = vmatprep.subr.bf16.mxu0 0
  %104 = vmatpush1.bf16.msra.mxu0 %v84
  %105 = vmatprep.subr.bf16.mxu0 0
  %106 = vmatpush1.bf16.msra.mxu0 %v85
  %107 = vmatprep.subr.bf16.mxu0 0
  %108 = vmatpush1.bf16.msra.mxu0 %v86
  %109 = vmatprep.subr.bf16.mxu0 0
  %110 = vmatpush1.bf16.msra.mxu0 %v87
  %111 = vmatprep.subr.bf16.mxu0 0
  %112 = vmatpush1.bf16.msra.mxu0 %v88
  %113 = vmatprep.subr.bf16.mxu0 0
  %114 = vmatpush1.bf16.msra.mxu0 0
  %115 = vmatprep.subr.bf16.mxu0 0
  %116 = vmatpush1.bf16.msra.mxu0 0
  %117 = vmatprep.subr.bf16.mxu0 0
  %118 = vmatpush1.bf16.msra.mxu0 0
  %119 = vmatprep.subr.bf16.mxu0 0
  %120 = vmatpush1.bf16.msra.mxu0 0
  %121 = vmatprep.subr.bf16.mxu0 0
  %122 = vmatpush1.bf16.msra.mxu0 0
  %123 = vmatprep.subr.bf16.mxu0 0
  %124 = vmatpush1.bf16.msra.mxu0 0
  %125 = vmatprep.subr.bf16.mxu0 0
  %126 = vmatpush1.bf16.msra.mxu0 0
  %127 = vmatprep.subr.bf16.mxu0 0
  %128 = vmatpush1.bf16.msra.mxu0 0
  %129 = vmatprep.mubr.bf16.mxu0 0
  %130 = vmatmul.mubr.bf16.gmra.mrb[0].mxu0 %v31
  %v131 = vpop.f32.mrb[0].mxu0
  %v132 = vadd.f32 0.0, %v131
  %v133 = vpop.f32.mrb[0].mxu0
  %v134 = vpop.f32.mrb[0].mxu0
  %v135 = vadd.f32 0.0, %v134
  %v136 = vpop.f32.mrb[0].mxu0
  %137 = vmatprep.mubr.bf16.mxu0 0
  %138 = vmatmul.mubr.bf16.gmra.mrb[0].mxu0 %v32
  %v139 = vpop.f32.mrb[0].mxu0
  %v140 = vadd.f32 0.0, %v139
  %v141 = vpop.f32.mrb[0].mxu0
  %v142 = vpop.f32.mrb[0].mxu0
  %v143 = vadd.f32 0.0, %v142
  %v144 = vpop.f32.mrb[0].mxu0
  %145 = vdwg.mxu0
  %v146 = vadd.f32 %v23, %v132
  %v147 = vadd.f32 %v24, %v135
  %v148 = vadd.f32 %v25, %v140
  %v149 = vadd.f32 %v26, %v143
  %150 = vst [vmem:[#allocation2] sm:$0xff] %v146
  %151 = vst [vmem:[#allocation2 + $0x8] sm:$0xff] %v147
  %152 = vst [vmem:[#allocation2 + $0x10] sm:$0xff] %v148
  %153 = vst [vmem:[#allocation2 + $0x18] sm:$0xff] %v149
  // Predicated region
  $region18: #{olmo_forward.16} parent=0 // pred_check
    %p154 = pneg %p15
  $region19: #{olmo_forward.16} parent=0 // pred_check_branch
    %156 = sbr.rel (%p154) target = $region21
  $region20: #{olmo_forward.16} parent=0 // pred_region
    %v157 = vld [vmem:[#allocation2] sm:$0xff]
    %v158 = vld [vmem:[#allocation2 + $0x8] sm:$0xff]
    %v159 = vld [vmem:[#allocation2 + $0x10] sm:$0xff]
    %v160 = vld [vmem:[#allocation2 + $0x18] sm:$0xff]
    %v161 = vmul.f32 %v157, %v157
    %v162 = vmul.f32 %v158, %v158
    %v163 = vmul.f32 %v159, %v159
    %v164 = vmul.f32 %v160, %v160
    %165 = vadd.xlane.f32.xlu0 %v161
    %v166 = vpop.xlane.xlu0 %165
    %167 = vadd.xlane.f32.xlu0 %v162
    %v168 = vpop.xlane.xlu0 %167
    %169 = vadd.xlane.f32.xlu0 %v163
    %v170 = vpop.xlane.xlu0 %169
    %171 = vadd.xlane.f32.xlu0 %v164
    %v172 = vpop.xlane.xlu0 %171
    %v173 = vrcp.pop 128.0
    %v174 = vmul.f32 %v166, %v173
    %v175 = vmul.f32 %v168, %v173
    %v176 = vmul.f32 %v170, %v173
    %v177 = vmul.f32 %v172, %v173
    %v178 = vadd.f32 %v174, 1e-05
    %v179 = vadd.f32 %v175, 1e-05
    %v180 = vadd.f32 %v176, 1e-05
    %v181 = vadd.f32 %v177, 1e-05
    %v182 = vrsqrt.pop %v178
    %v183 = vrsqrt.pop %v179
    %v184 = vrsqrt.pop %v180
    %v185 = vrsqrt.pop %v181
    %v186 = vmul.f32 %v157, %v182
    %v187 = vmul.f32 %v158, %v183
    %v188 = vmul.f32 %v159, %v184
    %v189 = vmul.f32 %v160, %v185
    %v190 = vld [vmem:[%s2] sm:$0x1]
    %v192 = vlaneseq
    %v193 = vshrl.u32 %v192, 7
    %v194 = vsub.s32 0, %v193
    %v195 = vrot.slane %v190, %v194
    %v197 = vmul.f32 %v186, %v195
    %v198 = vmul.f32 %v187, %v195
    %v199 = vmul.f32 %v188, %v195
    %v200 = vmul.f32 %v189, %v195
    %201 = vst [vmem:[%s3] sm:$0xff] %v197
    %202 = vst [vmem:[%s3 + $0x8] sm:$0xff] %v198
    %203 = vst [vmem:[%s3 + $0x10] sm:$0xff] %v199
    %204 = vst [vmem:[%s3 + $0x18] sm:$0xff] %v200
  $region21: #{olmo_forward.16} parent=0 // pred_fallthru
    _
  // Predicated region
  $region22: #{olmo_forward.16} parent=0 // pred_check
    _
  $region23: #{olmo_forward.16} parent=0 // pred_check_branch
    %206 = sbr.rel (0) target = $region25
  $region24: #{olmo_forward.16} parent=0 // pred_region
    _
  $region25: #{olmo_forward.16} parent=0 // pred_fallthru
    _
  // Predicated region
  $region26: #{olmo_forward.16} parent=0 // pred_check
    _
  $region27: #{olmo_forward.16} parent=0 // pred_check_branch
    %208 = sbr.rel (0) target = $region29
  $region28: #{olmo_forward.16} parent=0 // pred_region
    _
  $region29: #{olmo_forward.16} parent=0 // pred_fallthru
    _

// kernel: olmo_forward.17
$region0: #{olmo_forward.17}
  #allocation0 [shape = 'u32[]', space=smem, size = 0x4, offset = 0x4, fixed_abs, tag = 'smem constant byte address 0x4 - core index']
  #allocation1 [shape = 'u32[144,128]{1,0:T(1,128)}', space=vmem, size = 0x12000, scoped, tag = 'internal scratch']
  #allocation2 [shape = 'f32[32,128]{1,0:T(8,128)}', space=vmem, size = 0x4000, scoped, tag = 'scratch operand']
  %s0 = inlined_call_operand.vmem [shape: f32[32,128], index: 0, kind: input, shape index: {}]
  %s1 = inlined_call_operand.vmem [shape: bf16[128,128], index: 1, kind: input, shape index: {}]
  %s2 = inlined_call_operand.vmem [shape: f32[32,128], index: 2, kind: output, shape index: {}]
  %s3 = sld [smem:[#allocation0]]
  $region26: #{olmo_forward.17} parent=0
    _
  %s5 = ssub.s32 1, %s3
  %s6 = scalar_select 0, %s5, %s3
  // Predicated region
  $region2: #{olmo_forward.17} parent=0 // pred_check
    _
  $region3: #{olmo_forward.17} parent=0 // pred_check_branch
    %8 = sbr.rel (0) target = $region5
  $region4: #{olmo_forward.17} parent=0 // pred_region
    _
  $region5: #{olmo_forward.17} parent=0 // pred_fallthru
    _
  // Predicated region
  $region6: #{olmo_forward.17} parent=0 // pred_check
    _
  $region7: #{olmo_forward.17} parent=0 // pred_check_branch
    %10 = sbr.rel (0) target = $region9
  $region8: #{olmo_forward.17} parent=0 // pred_region
    _
  $region9: #{olmo_forward.17} parent=0 // pred_fallthru
    _
  %p12 = scmp.eq.s32.totalorder 0, 0
  // Predicated region
  $region10: #{olmo_forward.17} parent=0 // pred_check
    %p13 = pneg %p12
  $region11: #{olmo_forward.17} parent=0 // pred_check_branch
    %15 = sbr.rel (%p13) target = $region13
  $region12: #{olmo_forward.17} parent=0 // pred_region
    %16 = vst [vmem:[#allocation2] sm:$0xff] 0.0
    %17 = vst [vmem:[#allocation2 + $0x8] sm:$0xff] 0.0
    %18 = vst [vmem:[#allocation2 + $0x10] sm:$0xff] 0.0
    %19 = vst [vmem:[#allocation2 + $0x18] sm:$0xff] 0.0
  $region13: #{olmo_forward.17} parent=0 // pred_fallthru
    _
  %v20 = vld [vmem:[#allocation2] sm:$0xff]
  %v21 = vld [vmem:[#allocation2 + $0x8] sm:$0xff]
  %v22 = vld [vmem:[#allocation2 + $0x10] sm:$0xff]
  %v23 = vld [vmem:[#allocation2 + $0x18] sm:$0xff]
  %v24 = vld [vmem:[%s0] sm:$0xff]
  %v25 = vld [vmem:[%s0 + $0x8] sm:$0xff]
  %v26 = vld [vmem:[%s0 + $0x10] sm:$0xff]
  %v27 = vld [vmem:[%s0 + $0x18] sm:$0xff]
  %v28 = vpack.c.bf16 %v25, %v24
  %v29 = vpack.c.bf16 %v27, %v26
  %v30 = vld [vmem:[%s1] sm:$0xf]
  %v31 = vld [vmem:[%s1 + $0x4] sm:$0xf]
  %v32 = vld [vmem:[%s1 + $0x8] sm:$0xf]
  %v33 = vld [vmem:[%s1 + $0xc] sm:$0xf]
  %v34 = vld [vmem:[%s1 + $0x10] sm:$0xf]
  %v35 = vld [vmem:[%s1 + $0x14] sm:$0xf]
  %v36 = vld [vmem:[%s1 + $0x18] sm:$0xf]
  %v37 = vld [vmem:[%s1 + $0x1c] sm:$0xf]
  %v38 = vld [vmem:[%s1 + $0x20] sm:$0xf]
  %v39 = vld [vmem:[%s1 + $0x24] sm:$0xf]
  %v40 = vld [vmem:[%s1 + $0x28] sm:$0xf]
  %v41 = vld [vmem:[%s1 + $0x2c] sm:$0xf]
  %v42 = vld [vmem:[%s1 + $0x30] sm:$0xf]
  %v43 = vld [vmem:[%s1 + $0x34] sm:$0xf]
  %v44 = vld [vmem:[%s1 + $0x38] sm:$0xf]
  %v45 = vld [vmem:[%s1 + $0x3c] sm:$0xf]
  %v62 = vunpack.c.l.b16 %v30
  %v63 = vunpack.c.l.b16 %v31
  %v64 = vunpack.c.l.b16 %v32
  %v65 = vunpack.c.l.b16 %v33
  %v66 = vunpack.c.l.b16 %v34
  %v67 = vunpack.c.l.b16 %v35
  %v68 = vunpack.c.l.b16 %v36
  %v69 = vunpack.c.l.b16 %v37
  %v70 = vunpack.c.l.b16 %v38
  %v71 = vunpack.c.l.b16 %v39
  %v72 = vunpack.c.l.b16 %v40
  %v73 = vunpack.c.l.b16 %v41
  %v74 = vunpack.c.l.b16 %v42
  %v75 = vunpack.c.l.b16 %v43
  %v76 = vunpack.c.l.b16 %v44
  %v77 = vunpack.c.l.b16 %v45
  %v78 = vpack.c.b16 %v63, %v62
  %v79 = vpack.c.b16 %v65, %v64
  %v80 = vpack.c.b16 %v67, %v66
  %v81 = vpack.c.b16 %v69, %v68
  %v82 = vpack.c.b16 %v71, %v70
  %v83 = vpack.c.b16 %v73, %v72
  %v84 = vpack.c.b16 %v75, %v74
  %v85 = vpack.c.b16 %v77, %v76
  %94 = vmatprep.subr.bf16.mxu0 0
  %95 = vmatpush1.bf16.msra.mxu0 %v78
  %96 = vmatprep.subr.bf16.mxu0 0
  %97 = vmatpush1.bf16.msra.mxu0 %v79
  %98 = vmatprep.subr.bf16.mxu0 0
  %99 = vmatpush1.bf16.msra.mxu0 %v80
  %100 = vmatprep.subr.bf16.mxu0 0
  %101 = vmatpush1.bf16.msra.mxu0 %v81
  %102 = vmatprep.subr.bf16.mxu0 0
  %103 = vmatpush1.bf16.msra.mxu0 %v82
  %104 = vmatprep.subr.bf16.mxu0 0
  %105 = vmatpush1.bf16.msra.mxu0 %v83
  %106 = vmatprep.subr.bf16.mxu0 0
  %107 = vmatpush1.bf16.msra.mxu0 %v84
  %108 = vmatprep.subr.bf16.mxu0 0
  %109 = vmatpush1.bf16.msra.mxu0 %v85
  %110 = vmatprep.subr.bf16.mxu0 0
  %111 = vmatpush1.bf16.msra.mxu0 0
  %112 = vmatprep.subr.bf16.mxu0 0
  %113 = vmatpush1.bf16.msra.mxu0 0
  %114 = vmatprep.subr.bf16.mxu0 0
  %115 = vmatpush1.bf16.msra.mxu0 0
  %116 = vmatprep.subr.bf16.mxu0 0
  %117 = vmatpush1.bf16.msra.mxu0 0
  %118 = vmatprep.subr.bf16.mxu0 0
  %119 = vmatpush1.bf16.msra.mxu0 0
  %120 = vmatprep.subr.bf16.mxu0 0
  %121 = vmatpush1.bf16.msra.mxu0 0
  %122 = vmatprep.subr.bf16.mxu0 0
  %123 = vmatpush1.bf16.msra.mxu0 0
  %124 = vmatprep.subr.bf16.mxu0 0
  %125 = vmatpush1.bf16.msra.mxu0 0
  %126 = vmatprep.mubr.bf16.mxu0 0
  %127 = vmatmul.mubr.bf16.gmra.mrb[0].mxu0 %v28
  %v128 = vpop.f32.mrb[0].mxu0
  %v129 = vadd.f32 0.0, %v128
  %v130 = vpop.f32.mrb[0].mxu0
  %v131 = vpop.f32.mrb[0].mxu0
  %v132 = vadd.f32 0.0, %v131
  %v133 = vpop.f32.mrb[0].mxu0
  %134 = vmatprep.mubr.bf16.mxu0 0
  %135 = vmatmul.mubr.bf16.gmra.mrb[0].mxu0 %v29
  %v136 = vpop.f32.mrb[0].mxu0
  %v137 = vadd.f32 0.0, %v136
  %v138 = vpop.f32.mrb[0].mxu0
  %v139 = vpop.f32.mrb[0].mxu0
  %v140 = vadd.f32 0.0, %v139
  %v141 = vpop.f32.mrb[0].mxu0
  %142 = vdwg.mxu0
  %v143 = vadd.f32 %v20, %v129
  %v144 = vadd.f32 %v21, %v132
  %v145 = vadd.f32 %v22, %v137
  %v146 = vadd.f32 %v23, %v140
  %147 = vst [vmem:[#allocation2] sm:$0xff] %v143
  %148 = vst [vmem:[#allocation2 + $0x8] sm:$0xff] %v144
  %149 = vst [vmem:[#allocation2 + $0x10] sm:$0xff] %v145
  %150 = vst [vmem:[#allocation2 + $0x18] sm:$0xff] %v146
  // Predicated region
  $region14: #{olmo_forward.17} parent=0 // pred_check
    %p151 = pneg %p12
  $region15: #{olmo_forward.17} parent=0 // pred_check_branch
    %153 = sbr.rel (%p151) target = $region17
  $region16: #{olmo_forward.17} parent=0 // pred_region
    %v154 = vld [vmem:[#allocation2] sm:$0xff]
    %v155 = vld [vmem:[#allocation2 + $0x8] sm:$0xff]
    %v156 = vld [vmem:[#allocation2 + $0x10] sm:$0xff]
    %v157 = vld [vmem:[#allocation2 + $0x18] sm:$0xff]
    %158 = vst [vmem:[%s2] sm:$0xff] %v154
    %159 = vst [vmem:[%s2 + $0x8] sm:$0xff] %v155
    %160 = vst [vmem:[%s2 + $0x10] sm:$0xff] %v156
    %161 = vst [vmem:[%s2 + $0x18] sm:$0xff] %v157
  $region17: #{olmo_forward.17} parent=0 // pred_fallthru
    _
  // Predicated region
  $region18: #{olmo_forward.17} parent=0 // pred_check
    _
  $region19: #{olmo_forward.17} parent=0 // pred_check_branch
    %163 = sbr.rel (0) target = $region21
  $region20: #{olmo_forward.17} parent=0 // pred_region
    _
  $region21: #{olmo_forward.17} parent=0 // pred_fallthru
    _
  // Predicated region
  $region22: #{olmo_forward.17} parent=0 // pred_check
    _
  $region23: #{olmo_forward.17} parent=0 // pred_check_branch
    %165 = sbr.rel (0) target = $region25
  $region24: #{olmo_forward.17} parent=0 // pred_region
    _
  $region25: #{olmo_forward.17} parent=0 // pred_fallthru
    _

// kernel: olmo_forward.20
$region0: #{olmo_forward.20}
  #allocation0 [shape = 'u32[]', space=smem, size = 0x4, offset = 0x4, fixed_abs, tag = 'smem constant byte address 0x4 - core index']
  #allocation1 [shape = 'u32[144,128]{1,0:T(1,128)}', space=vmem, size = 0x12000, scoped, tag = 'internal scratch']
  #allocation2 [shape = 'f32[32,256]{1,0:T(8,128)}', space=vmem, size = 0x8000, scoped, tag = 'scratch operand']
  #allocation3 [shape = 'f32[32,256]{1,0:T(8,128)}', space=vmem, size = 0x8000, scoped, tag = 'scratch operand']
  %s0 = inlined_call_operand.vmem [shape: f32[32,128], index: 0, kind: input, shape index: {}]
  %s1 = inlined_call_operand.vmem [shape: bf16[128,256], index: 1, kind: input, shape index: {}]
  %s2 = inlined_call_operand.vmem [shape: bf16[128,256], index: 2, kind: input, shape index: {}]
  %s3 = inlined_call_operand.vmem [shape: f32[32,256], index: 3, kind: output, shape index: {}]
  %s4 = sld [smem:[#allocation0]]
  $region30: #{olmo_forward.20} parent=0
    _
  %s6 = ssub.s32 1, %s4
  %s7 = scalar_select 0, %s6, %s4
  // Predicated region
  $region2: #{olmo_forward.20} parent=0 // pred_check
    _
  $region3: #{olmo_forward.20} parent=0 // pred_check_branch
    %9 = sbr.rel (0) target = $region5
  $region4: #{olmo_forward.20} parent=0 // pred_region
    _
  $region5: #{olmo_forward.20} parent=0 // pred_fallthru
    _
  // Predicated region
  $region6: #{olmo_forward.20} parent=0 // pred_check
    _
  $region7: #{olmo_forward.20} parent=0 // pred_check_branch
    %11 = sbr.rel (0) target = $region9
  $region8: #{olmo_forward.20} parent=0 // pred_region
    _
  $region9: #{olmo_forward.20} parent=0 // pred_fallthru
    _
  // Predicated region
  $region10: #{olmo_forward.20} parent=0 // pred_check
    _
  $region11: #{olmo_forward.20} parent=0 // pred_check_branch
    %13 = sbr.rel (0) target = $region13
  $region12: #{olmo_forward.20} parent=0 // pred_region
    _
  $region13: #{olmo_forward.20} parent=0 // pred_fallthru
    _
  %p15 = scmp.eq.s32.totalorder 0, 0
  // Predicated region
  $region14: #{olmo_forward.20} parent=0 // pred_check
    %p16 = pneg %p15
  $region15: #{olmo_forward.20} parent=0 // pred_check_branch
    %18 = sbr.rel (%p16) target = $region17
  $region16: #{olmo_forward.20} parent=0 // pred_region
    %19 = vst [vmem:[#allocation2] sm:$0xff] 0.0
    %20 = vst [vmem:[#allocation2 + $0x8] sm:$0xff] 0.0
    %21 = vst [vmem:[#allocation2 + $0x10] sm:$0xff] 0.0
    %22 = vst [vmem:[#allocation2 + $0x18] sm:$0xff] 0.0
    %23 = vst [vmem:[#allocation2 + $0x20] sm:$0xff] 0.0
    %24 = vst [vmem:[#allocation2 + $0x28] sm:$0xff] 0.0
    %25 = vst [vmem:[#allocation2 + $0x30] sm:$0xff] 0.0
    %26 = vst [vmem:[#allocation2 + $0x38] sm:$0xff] 0.0
    %27 = vst [vmem:[#allocation3] sm:$0xff] 0.0
    %28 = vst [vmem:[#allocation3 + $0x8] sm:$0xff] 0.0
    %29 = vst [vmem:[#allocation3 + $0x10] sm:$0xff] 0.0
    %30 = vst [vmem:[#allocation3 + $0x18] sm:$0xff] 0.0
    %31 = vst [vmem:[#allocation3 + $0x20] sm:$0xff] 0.0
    %32 = vst [vmem:[#allocation3 + $0x28] sm:$0xff] 0.0
    %33 = vst [vmem:[#allocation3 + $0x30] sm:$0xff] 0.0
    %34 = vst [vmem:[#allocation3 + $0x38] sm:$0xff] 0.0
  $region17: #{olmo_forward.20} parent=0 // pred_fallthru
    _
  %v35 = vld [vmem:[%s0] sm:$0xff]
  %v36 = vld [vmem:[%s0 + $0x8] sm:$0xff]
  %v37 = vld [vmem:[%s0 + $0x10] sm:$0xff]
  %v38 = vld [vmem:[%s0 + $0x18] sm:$0xff]
  %v39 = vpack.c.bf16 %v36, %v35
  %v40 = vpack.c.bf16 %v38, %v37
  %v41 = vld [vmem:[#allocation2] sm:$0xff]
  %v42 = vld [vmem:[#allocation2 + $0x8] sm:$0xff]
  %v43 = vld [vmem:[#allocation2 + $0x10] sm:$0xff]
  %v44 = vld [vmem:[#allocation2 + $0x18] sm:$0xff]
  %v45 = vld [vmem:[#allocation2 + $0x20] sm:$0xff]
  %v46 = vld [vmem:[#allocation2 + $0x28] sm:$0xff]
  %v47 = vld [vmem:[#allocation2 + $0x30] sm:$0xff]
  %v48 = vld [vmem:[#allocation2 + $0x38] sm:$0xff]
  %v49 = vld [vmem:[%s1] sm:$0xff]
  %v50 = vld [vmem:[%s1 + $0x8] sm:$0xff]
  %v51 = vld [vmem:[%s1 + $0x10] sm:$0xff]
  %v52 = vld [vmem:[%s1 + $0x18] sm:$0xff]
  %v53 = vld [vmem:[%s1 + $0x20] sm:$0xff]
  %v54 = vld [vmem:[%s1 + $0x28] sm:$0xff]
  %v55 = vld [vmem:[%s1 + $0x30] sm:$0xff]
  %v56 = vld [vmem:[%s1 + $0x38] sm:$0xff]
  %v57 = vld [vmem:[%s1 + $0x40] sm:$0xff]
  %v58 = vld [vmem:[%s1 + $0x48] sm:$0xff]
  %v59 = vld [vmem:[%s1 + $0x50] sm:$0xff]
  %v60 = vld [vmem:[%s1 + $0x58] sm:$0xff]
  %v61 = vld [vmem:[%s1 + $0x60] sm:$0xff]
  %v62 = vld [vmem:[%s1 + $0x68] sm:$0xff]
  %v63 = vld [vmem:[%s1 + $0x70] sm:$0xff]
  %v64 = vld [vmem:[%s1 + $0x78] sm:$0xff]
  %v81 = vunpack.c.l.b16 %v49
  %v82 = vunpack.c.h.b16 %v49
  %v83 = vunpack.c.l.b16 %v50
  %v84 = vunpack.c.h.b16 %v50
  %v85 = vunpack.c.l.b16 %v51
  %v86 = vunpack.c.h.b16 %v51
  %v87 = vunpack.c.l.b16 %v52
  %v88 = vunpack.c.h.b16 %v52
  %v89 = vunpack.c.l.b16 %v53
  %v90 = vunpack.c.h.b16 %v53
  %v91 = vunpack.c.l.b16 %v54
  %v92 = vunpack.c.h.b16 %v54
  %v93 = vunpack.c.l.b16 %v55
  %v94 = vunpack.c.h.b16 %v55
  %v95 = vunpack.c.l.b16 %v56
  %v96 = vunpack.c.h.b16 %v56
  %v97 = vunpack.c.l.b16 %v57
  %v98 = vunpack.c.h.b16 %v57
  %v99 = vunpack.c.l.b16 %v58
  %v100 = vunpack.c.h.b16 %v58
  %v101 = vunpack.c.l.b16 %v59
  %v102 = vunpack.c.h.b16 %v59
  %v103 = vunpack.c.l.b16 %v60
  %v104 = vunpack.c.h.b16 %v60
  %v105 = vunpack.c.l.b16 %v61
  %v106 = vunpack.c.h.b16 %v61
  %v107 = vunpack.c.l.b16 %v62
  %v108 = vunpack.c.h.b16 %v62
  %v109 = vunpack.c.l.b16 %v63
  %v110 = vunpack.c.h.b16 %v63
  %v111 = vunpack.c.l.b16 %v64
  %v112 = vunpack.c.h.b16 %v64
  %v113 = vpack.c.b16 %v83, %v81
  %v114 = vpack.c.b16 %v84, %v82
  %v115 = vpack.c.b16 %v87, %v85
  %v116 = vpack.c.b16 %v88, %v86
  %v117 = vpack.c.b16 %v91, %v89
  %v118 = vpack.c.b16 %v92, %v90
  %v119 = vpack.c.b16 %v95, %v93
  %v120 = vpack.c.b16 %v96, %v94
  %v121 = vpack.c.b16 %v99, %v97
  %v122 = vpack.c.b16 %v100, %v98
  %v123 = vpack.c.b16 %v103, %v101
  %v124 = vpack.c.b16 %v104, %v102
  %v125 = vpack.c.b16 %v107, %v105
  %v126 = vpack.c.b16 %v108, %v106
  %v127 = vpack.c.b16 %v111, %v109
  %v128 = vpack.c.b16 %v112, %v110
  %145 = vmatprep.subr.bf16.mxu0 %v114
  %146 = vmatpush1.bf16.msra.mxu0 %v113
  %147 = vmatprep.subr.bf16.mxu0 %v116
  %148 = vmatpush1.bf16.msra.mxu0 %v115
  %149 = vmatprep.subr.bf16.mxu0 %v118
  %150 = vmatpush1.bf16.msra.mxu0 %v117
  %151 = vmatprep.subr.bf16.mxu0 %v120
  %152 = vmatpush1.bf16.msra.mxu0 %v119
  %153 = vmatprep.subr.bf16.mxu0 %v122
  %154 = vmatpush1.bf16.msra.mxu0 %v121
  %155 = vmatprep.subr.bf16.mxu0 %v124
  %156 = vmatpush1.bf16.msra.mxu0 %v123
  %157 = vmatprep.subr.bf16.mxu0 %v126
  %158 = vmatpush1.bf16.msra.mxu0 %v125
  %159 = vmatprep.subr.bf16.mxu0 %v128
  %160 = vmatpush1.bf16.msra.mxu0 %v127
  %161 = vmatprep.subr.bf16.mxu0 0
  %162 = vmatpush1.bf16.msra.mxu0 0
  %163 = vmatprep.subr.bf16.mxu0 0
  %164 = vmatpush1.bf16.msra.mxu0 0
  %165 = vmatprep.subr.bf16.mxu0 0
  %166 = vmatpush1.bf16.msra.mxu0 0
  %167 = vmatprep.subr.bf16.mxu0 0
  %168 = vmatpush1.bf16.msra.mxu0 0
  %169 = vmatprep.subr.bf16.mxu0 0
  %170 = vmatpush1.bf16.msra.mxu0 0
  %171 = vmatprep.subr.bf16.mxu0 0
  %172 = vmatpush1.bf16.msra.mxu0 0
  %173 = vmatprep.subr.bf16.mxu0 0
  %174 = vmatpush1.bf16.msra.mxu0 0
  %175 = vmatprep.subr.bf16.mxu0 0
  %176 = vmatpush1.bf16.msra.mxu0 0
  %177 = vmatprep.mubr.bf16.mxu0 0
  %178 = vmatmul.mubr.bf16.gmra.mrb[0].mxu0 %v39
  %v179 = vpop.f32.mrb[0].mxu0
  %v180 = vadd.f32 0.0, %v179
  %v181 = vpop.f32.mrb[0].mxu0
  %v182 = vadd.f32 0.0, %v181
  %v183 = vpop.f32.mrb[0].mxu0
  %v184 = vadd.f32 0.0, %v183
  %v185 = vpop.f32.mrb[0].mxu0
  %v186 = vadd.f32 0.0, %v185
  %187 = vmatprep.mubr.bf16.mxu0 0
  %188 = vmatmul.mubr.bf16.gmra.mrb[0].mxu0 %v40
  %v189 = vpop.f32.mrb[0].mxu0
  %v190 = vadd.f32 0.0, %v189
  %v191 = vpop.f32.mrb[0].mxu0
  %v192 = vadd.f32 0.0, %v191
  %v193 = vpop.f32.mrb[0].mxu0
  %v194 = vadd.f32 0.0, %v193
  %v195 = vpop.f32.mrb[0].mxu0
  %v196 = vadd.f32 0.0, %v195
  %197 = vdwg.mxu0
  %v198 = vadd.f32 %v41, %v180
  %v199 = vadd.f32 %v42, %v182
  %v200 = vadd.f32 %v43, %v184
  %v201 = vadd.f32 %v44, %v186
  %v202 = vadd.f32 %v45, %v190
  %v203 = vadd.f32 %v46, %v192
  %v204 = vadd.f32 %v47, %v194
  %v205 = vadd.f32 %v48, %v196
  %206 = vst [vmem:[#allocation2] sm:$0xff] %v198
  %207 = vst [vmem:[#allocation2 + $0x8] sm:$0xff] %v199
  %208 = vst [vmem:[#allocation2 + $0x10] sm:$0xff] %v200
  %209 = vst [vmem:[#allocation2 + $0x18] sm:$0xff] %v201
  %210 = vst [vmem:[#allocation2 + $0x20] sm:$0xff] %v202
  %211 = vst [vmem:[#allocation2 + $0x28] sm:$0xff] %v203
  %212 = vst [vmem:[#allocation2 + $0x30] sm:$0xff] %v204
  %213 = vst [vmem:[#allocation2 + $0x38] sm:$0xff] %v205
  %v214 = vld [vmem:[#allocation3] sm:$0xff]
  %v215 = vld [vmem:[#allocation3 + $0x8] sm:$0xff]
  %v216 = vld [vmem:[#allocation3 + $0x10] sm:$0xff]
  %v217 = vld [vmem:[#allocation3 + $0x18] sm:$0xff]
  %v218 = vld [vmem:[#allocation3 + $0x20] sm:$0xff]
  %v219 = vld [vmem:[#allocation3 + $0x28] sm:$0xff]
  %v220 = vld [vmem:[#allocation3 + $0x30] sm:$0xff]
  %v221 = vld [vmem:[#allocation3 + $0x38] sm:$0xff]
  %v222 = vld [vmem:[%s2] sm:$0xff]
  %v223 = vld [vmem:[%s2 + $0x8] sm:$0xff]
  %v224 = vld [vmem:[%s2 + $0x10] sm:$0xff]
  %v225 = vld [vmem:[%s2 + $0x18] sm:$0xff]
  %v226 = vld [vmem:[%s2 + $0x20] sm:$0xff]
  %v227 = vld [vmem:[%s2 + $0x28] sm:$0xff]
  %v228 = vld [vmem:[%s2 + $0x30] sm:$0xff]
  %v229 = vld [vmem:[%s2 + $0x38] sm:$0xff]
  %v230 = vld [vmem:[%s2 + $0x40] sm:$0xff]
  %v231 = vld [vmem:[%s2 + $0x48] sm:$0xff]
  %v232 = vld [vmem:[%s2 + $0x50] sm:$0xff]
  %v233 = vld [vmem:[%s2 + $0x58] sm:$0xff]
  %v234 = vld [vmem:[%s2 + $0x60] sm:$0xff]
  %v235 = vld [vmem:[%s2 + $0x68] sm:$0xff]
  %v236 = vld [vmem:[%s2 + $0x70] sm:$0xff]
  %v237 = vld [vmem:[%s2 + $0x78] sm:$0xff]
  %v254 = vunpack.c.l.b16 %v222
  %v255 = vunpack.c.h.b16 %v222
  %v256 = vunpack.c.l.b16 %v223
  %v257 = vunpack.c.h.b16 %v223
  %v258 = vunpack.c.l.b16 %v224
  %v259 = vunpack.c.h.b16 %v224
  %v260 = vunpack.c.l.b16 %v225
  %v261 = vunpack.c.h.b16 %v225
  %v262 = vunpack.c.l.b16 %v226
  %v263 = vunpack.c.h.b16 %v226
  %v264 = vunpack.c.l.b16 %v227
  %v265 = vunpack.c.h.b16 %v227
  %v266 = vunpack.c.l.b16 %v228
  %v267 = vunpack.c.h.b16 %v228
  %v268 = vunpack.c.l.b16 %v229
  %v269 = vunpack.c.h.b16 %v229
  %v270 = vunpack.c.l.b16 %v230
  %v271 = vunpack.c.h.b16 %v230
  %v272 = vunpack.c.l.b16 %v231
  %v273 = vunpack.c.h.b16 %v231
  %v274 = vunpack.c.l.b16 %v232
  %v275 = vunpack.c.h.b16 %v232
  %v276 = vunpack.c.l.b16 %v233
  %v277 = vunpack.c.h.b16 %v233
  %v278 = vunpack.c.l.b16 %v234
  %v279 = vunpack.c.h.b16 %v234
  %v280 = vunpack.c.l.b16 %v235
  %v281 = vunpack.c.h.b16 %v235
  %v282 = vunpack.c.l.b16 %v236
  %v283 = vunpack.c.h.b16 %v236
  %v284 = vunpack.c.l.b16 %v237
  %v285 = vunpack.c.h.b16 %v237
  %v286 = vpack.c.b16 %v256, %v254
  %v287 = vpack.c.b16 %v257, %v255
  %v288 = vpack.c.b16 %v260, %v258
  %v289 = vpack.c.b16 %v261, %v259
  %v290 = vpack.c.b16 %v264, %v262
  %v291 = vpack.c.b16 %v265, %v263
  %v292 = vpack.c.b16 %v268, %v266
  %v293 = vpack.c.b16 %v269, %v267
  %v294 = vpack.c.b16 %v272, %v270
  %v295 = vpack.c.b16 %v273, %v271
  %v296 = vpack.c.b16 %v276, %v274
  %v297 = vpack.c.b16 %v277, %v275
  %v298 = vpack.c.b16 %v280, %v278
  %v299 = vpack.c.b16 %v281, %v279
  %v300 = vpack.c.b16 %v284, %v282
  %v301 = vpack.c.b16 %v285, %v283
  %318 = vmatprep.subr.bf16.mxu0 %v287
  %319 = vmatpush1.bf16.msra.mxu0 %v286
  %320 = vmatprep.subr.bf16.mxu0 %v289
  %321 = vmatpush1.bf16.msra.mxu0 %v288
  %322 = vmatprep.subr.bf16.mxu0 %v291
  %323 = vmatpush1.bf16.msra.mxu0 %v290
  %324 = vmatprep.subr.bf16.mxu0 %v293
  %325 = vmatpush1.bf16.msra.mxu0 %v292
  %326 = vmatprep.subr.bf16.mxu0 %v295
  %327 = vmatpush1.bf16.msra.mxu0 %v294
  %328 = vmatprep.subr.bf16.mxu0 %v297
  %329 = vmatpush1.bf16.msra.mxu0 %v296
  %330 = vmatprep.subr.bf16.mxu0 %v299
  %331 = vmatpush1.bf16.msra.mxu0 %v298
  %332 = vmatprep.subr.bf16.mxu0 %v301
  %333 = vmatpush1.bf16.msra.mxu0 %v300
  %334 = vmatprep.subr.bf16.mxu0 0
  %335 = vmatpush1.bf16.msra.mxu0 0
  %336 = vmatprep.subr.bf16.mxu0 0
  %337 = vmatpush1.bf16.msra.mxu0 0
  %338 = vmatprep.subr.bf16.mxu0 0
  %339 = vmatpush1.bf16.msra.mxu0 0
  %340 = vmatprep.subr.bf16.mxu0 0
  %341 = vmatpush1.bf16.msra.mxu0 0
  %342 = vmatprep.subr.bf16.mxu0 0
  %343 = vmatpush1.bf16.msra.mxu0 0
  %344 = vmatprep.subr.bf16.mxu0 0
  %345 = vmatpush1.bf16.msra.mxu0 0
  %346 = vmatprep.subr.bf16.mxu0 0
  %347 = vmatpush1.bf16.msra.mxu0 0
  %348 = vmatprep.subr.bf16.mxu0 0
  %349 = vmatpush1.bf16.msra.mxu0 0
  %350 = vmatprep.mubr.bf16.mxu0 0
  %351 = vmatmul.mubr.bf16.gmra.mrb[0].mxu0 %v39
  %v352 = vpop.f32.mrb[0].mxu0
  %v353 = vadd.f32 0.0, %v352
  %v354 = vpop.f32.mrb[0].mxu0
  %v355 = vadd.f32 0.0, %v354
  %v356 = vpop.f32.mrb[0].mxu0
  %v357 = vadd.f32 0.0, %v356
  %v358 = vpop.f32.mrb[0].mxu0
  %v359 = vadd.f32 0.0, %v358
  %360 = vmatprep.mubr.bf16.mxu0 0
  %361 = vmatmul.mubr.bf16.gmra.mrb[0].mxu0 %v40
  %v362 = vpop.f32.mrb[0].mxu0
  %v363 = vadd.f32 0.0, %v362
  %v364 = vpop.f32.mrb[0].mxu0
  %v365 = vadd.f32 0.0, %v364
  %v366 = vpop.f32.mrb[0].mxu0
  %v367 = vadd.f32 0.0, %v366
  %v368 = vpop.f32.mrb[0].mxu0
  %v369 = vadd.f32 0.0, %v368
  %370 = vdwg.mxu0
  %v371 = vadd.f32 %v214, %v353
  %v372 = vadd.f32 %v215, %v355
  %v373 = vadd.f32 %v216, %v357
  %v374 = vadd.f32 %v217, %v359
  %v375 = vadd.f32 %v218, %v363
  %v376 = vadd.f32 %v219, %v365
  %v377 = vadd.f32 %v220, %v367
  %v378 = vadd.f32 %v221, %v369
  %379 = vst [vmem:[#allocation3] sm:$0xff] %v371
  %380 = vst [vmem:[#allocation3 + $0x8] sm:$0xff] %v372
  %381 = vst [vmem:[#allocation3 + $0x10] sm:$0xff] %v373
  %382 = vst [vmem:[#allocation3 + $0x18] sm:$0xff] %v374
  %383 = vst [vmem:[#allocation3 + $0x20] sm:$0xff] %v375
  %384 = vst [vmem:[#allocation3 + $0x28] sm:$0xff] %v376
  %385 = vst [vmem:[#allocation3 + $0x30] sm:$0xff] %v377
  %386 = vst [vmem:[#allocation3 + $0x38] sm:$0xff] %v378
  // Predicated region
  $region18: #{olmo_forward.20} parent=0 // pred_check
    %p387 = pneg %p15
  $region19: #{olmo_forward.20} parent=0 // pred_check_branch
    %389 = sbr.rel (%p387) target = $region21
  $region20: #{olmo_forward.20} parent=0 // pred_region
    %v390 = vld [vmem:[#allocation2] sm:$0xff]
    %v391 = vld [vmem:[#allocation2 + $0x8] sm:$0xff]
    %v392 = vld [vmem:[#allocation2 + $0x10] sm:$0xff]
    %v393 = vld [vmem:[#allocation2 + $0x18] sm:$0xff]
    %v394 = vld [vmem:[#allocation2 + $0x20] sm:$0xff]
    %v395 = vld [vmem:[#allocation2 + $0x28] sm:$0xff]
    %v396 = vld [vmem:[#allocation2 + $0x30] sm:$0xff]
    %v397 = vld [vmem:[#allocation2 + $0x38] sm:$0xff]
    %v398 = vxor.u32 %v390, 2147483648
    %v399 = vxor.u32 %v391, 2147483648
    %v400 = vxor.u32 %v392, 2147483648
    %v401 = vxor.u32 %v393, 2147483648
    %v402 = vxor.u32 %v394, 2147483648
    %v403 = vxor.u32 %v395, 2147483648
    %v404 = vxor.u32 %v396, 2147483648
    %v405 = vxor.u32 %v397, 2147483648
    %v406 = vmul.f32 %v398, 1.442695
    %v407 = vpow.pop %v406
    %v408 = vmul.f32 %v399, 1.442695
    %v409 = vpow.pop %v408
    %v410 = vmul.f32 %v400, 1.442695
    %v411 = vpow.pop %v410
    %v412 = vmul.f32 %v401, 1.442695
    %v413 = vpow.pop %v412
    %v414 = vmul.f32 %v402, 1.442695
    %v415 = vpow.pop %v414
    %v416 = vmul.f32 %v403, 1.442695
    %v417 = vpow.pop %v416
    %v418 = vmul.f32 %v404, 1.442695
    %v419 = vpow.pop %v418
    %v420 = vmul.f32 %v405, 1.442695
    %v421 = vpow.pop %v420
    %v422 = vadd.f32 %v407, 1.0
    %v423 = vadd.f32 %v409, 1.0
    %v424 = vadd.f32 %v411, 1.0
    %v425 = vadd.f32 %v413, 1.0
    %v426 = vadd.f32 %v415, 1.0
    %v427 = vadd.f32 %v417, 1.0
    %v428 = vadd.f32 %v419, 1.0
    %v429 = vadd.f32 %v421, 1.0
    %v430 = vrcp.pop %v422
    %v431 = vmul.f32 1.0, %v430
    %v432 = vrcp.pop %v423
    %v433 = vmul.f32 1.0, %v432
    %v434 = vrcp.pop %v424
    %v435 = vmul.f32 1.0, %v434
    %v436 = vrcp.pop %v425
    %v437 = vmul.f32 1.0, %v436
    %v438 = vrcp.pop %v426
    %v439 = vmul.f32 1.0, %v438
    %v440 = vrcp.pop %v427
    %v441 = vmul.f32 1.0, %v440
    %v442 = vrcp.pop %v428
    %v443 = vmul.f32 1.0, %v442
    %v444 = vrcp.pop %v429
    %v445 = vmul.f32 1.0, %v444
    %v446 = vmul.f32 %v390, %v431
    %v447 = vmul.f32 %v391, %v433
    %v448 = vmul.f32 %v392, %v435
    %v449 = vmul.f32 %v393, %v437
    %v450 = vmul.f32 %v394, %v439
    %v451 = vmul.f32 %v395, %v441
    %v452 = vmul.f32 %v396, %v443
    %v453 = vmul.f32 %v397, %v445
    %v454 = vld [vmem:[#allocation3] sm:$0xff]
    %v455 = vld [vmem:[#allocation3 + $0x8] sm:$0xff]
    %v456 = vld [vmem:[#allocation3 + $0x10] sm:$0xff]
    %v457 = vld [vmem:[#allocation3 + $0x18] sm:$0xff]
    %v458 = vld [vmem:[#allocation3 + $0x20] sm:$0xff]
    %v459 = vld [vmem:[#allocation3 + $0x28] sm:$0xff]
    %v460 = vld [vmem:[#allocation3 + $0x30] sm:$0xff]
    %v461 = vld [vmem:[#allocation3 + $0x38] sm:$0xff]
    %v462 = vmul.f32 %v446, %v454
    %v463 = vmul.f32 %v447, %v455
    %v464 = vmul.f32 %v448, %v456
    %v465 = vmul.f32 %v449, %v457
    %v466 = vmul.f32 %v450, %v458
    %v467 = vmul.f32 %v451, %v459
    %v468 = vmul.f32 %v452, %v460
    %v469 = vmul.f32 %v453, %v461
    %470 = vst [vmem:[%s3] sm:$0xff] %v462
    %471 = vst [vmem:[%s3 + $0x8] sm:$0xff] %v463
    %472 = vst [vmem:[%s3 + $0x10] sm:$0xff] %v464
    %473 = vst [vmem:[%s3 + $0x18] sm:$0xff] %v465
    %474 = vst [vmem:[%s3 + $0x20] sm:$0xff] %v466
    %475 = vst [vmem:[%s3 + $0x28] sm:$0xff] %v467
    %476 = vst [vmem:[%s3 + $0x30] sm:$0xff] %v468
    %477 = vst [vmem:[%s3 + $0x38] sm:$0xff] %v469
  $region21: #{olmo_forward.20} parent=0 // pred_fallthru
    _
  // Predicated region
  $region22: #{olmo_forward.20} parent=0 // pred_check
    _
  $region23: #{olmo_forward.20} parent=0 // pred_check_branch
    %479 = sbr.rel (0) target = $region25
  $region24: #{olmo_forward.20} parent=0 // pred_region
    _
  $region25: #{olmo_forward.20} parent=0 // pred_fallthru
    _
  // Predicated region
  $region26: #{olmo_forward.20} parent=0 // pred_check
    _
  $region27: #{olmo_forward.20} parent=0 // pred_check_branch
    %481 = sbr.rel (0) target = $region29
  $region28: #{olmo_forward.20} parent=0 // pred_region
    _
  $region29: #{olmo_forward.20} parent=0 // pred_fallthru
    _

// kernel: olmo_forward.21
$region0: #{olmo_forward.21}
  #allocation0 [shape = 'u32[]', space=smem, size = 0x4, offset = 0x4, fixed_abs, tag = 'smem constant byte address 0x4 - core index']
  #allocation1 [shape = 'u32[144,128]{1,0:T(1,128)}', space=vmem, size = 0x12000, scoped, tag = 'internal scratch']
  #allocation2 [shape = 'f32[32,128]{1,0:T(8,128)}', space=vmem, size = 0x4000, scoped, tag = 'scratch operand']
  %s0 = inlined_call_operand.vmem [shape: f32[32,256], index: 0, kind: input, shape index: {}]
  %s1 = inlined_call_operand.vmem [shape: bf16[256,128], index: 1, kind: input, shape index: {}]
  %s2 = inlined_call_operand.vmem [shape: f32[1,128], index: 2, kind: input, shape index: {}]
  %s3 = inlined_call_operand.vmem [shape: f32[32,128], index: 3, kind: output, shape index: {}]
  %s4 = sld [smem:[#allocation0]]
  $region30: #{olmo_forward.21} parent=0
    _
  %s6 = ssub.s32 1, %s4
  %s7 = scalar_select 0, %s6, %s4
  // Predicated region
  $region2: #{olmo_forward.21} parent=0 // pred_check
    _
  $region3: #{olmo_forward.21} parent=0 // pred_check_branch
    %9 = sbr.rel (0) target = $region5
  $region4: #{olmo_forward.21} parent=0 // pred_region
    _
  $region5: #{olmo_forward.21} parent=0 // pred_fallthru
    _
  // Predicated region
  $region6: #{olmo_forward.21} parent=0 // pred_check
    _
  $region7: #{olmo_forward.21} parent=0 // pred_check_branch
    %11 = sbr.rel (0) target = $region9
  $region8: #{olmo_forward.21} parent=0 // pred_region
    _
  $region9: #{olmo_forward.21} parent=0 // pred_fallthru
    _
  // Predicated region
  $region10: #{olmo_forward.21} parent=0 // pred_check
    _
  $region11: #{olmo_forward.21} parent=0 // pred_check_branch
    %13 = sbr.rel (0) target = $region13
  $region12: #{olmo_forward.21} parent=0 // pred_region
    _
  $region13: #{olmo_forward.21} parent=0 // pred_fallthru
    _
  %p15 = scmp.eq.s32.totalorder 0, 0
  // Predicated region
  $region14: #{olmo_forward.21} parent=0 // pred_check
    %p16 = pneg %p15
  $region15: #{olmo_forward.21} parent=0 // pred_check_branch
    %18 = sbr.rel (%p16) target = $region17
  $region16: #{olmo_forward.21} parent=0 // pred_region
    %19 = vst [vmem:[#allocation2] sm:$0xff] 0.0
    %20 = vst [vmem:[#allocation2 + $0x8] sm:$0xff] 0.0
    %21 = vst [vmem:[#allocation2 + $0x10] sm:$0xff] 0.0
    %22 = vst [vmem:[#allocation2 + $0x18] sm:$0xff] 0.0
  $region17: #{olmo_forward.21} parent=0 // pred_fallthru
    _
  %v23 = vld [vmem:[#allocation2] sm:$0xff]
  %v24 = vld [vmem:[#allocation2 + $0x8] sm:$0xff]
  %v25 = vld [vmem:[#allocation2 + $0x10] sm:$0xff]
  %v26 = vld [vmem:[#allocation2 + $0x18] sm:$0xff]
  %v27 = vld [vmem:[%s0] sm:$0xff]
  %v28 = vld [vmem:[%s0 + $0x8] sm:$0xff]
  %v29 = vld [vmem:[%s0 + $0x10] sm:$0xff]
  %v30 = vld [vmem:[%s0 + $0x18] sm:$0xff]
  %v31 = vld [vmem:[%s0 + $0x20] sm:$0xff]
  %v32 = vld [vmem:[%s0 + $0x28] sm:$0xff]
  %v33 = vld [vmem:[%s0 + $0x30] sm:$0xff]
  %v34 = vld [vmem:[%s0 + $0x38] sm:$0xff]
  %v35 = vpack.c.bf16 %v29, %v27
  %v36 = vpack.c.bf16 %v30, %v28
  %v37 = vpack.c.bf16 %v33, %v31
  %v38 = vpack.c.bf16 %v34, %v32
  %v39 = vld [vmem:[%s1] sm:$0xf]
  %v40 = vld [vmem:[%s1 + $0x4] sm:$0xf]
  %v41 = vld [vmem:[%s1 + $0x8] sm:$0xf]
  %v42 = vld [vmem:[%s1 + $0xc] sm:$0xf]
  %v43 = vld [vmem:[%s1 + $0x10] sm:$0xf]
  %v44 = vld [vmem:[%s1 + $0x14] sm:$0xf]
  %v45 = vld [vmem:[%s1 + $0x18] sm:$0xf]
  %v46 = vld [vmem:[%s1 + $0x1c] sm:$0xf]
  %v47 = vld [vmem:[%s1 + $0x20] sm:$0xf]
  %v48 = vld [vmem:[%s1 + $0x24] sm:$0xf]
  %v49 = vld [vmem:[%s1 + $0x28] sm:$0xf]
  %v50 = vld [vmem:[%s1 + $0x2c] sm:$0xf]
  %v51 = vld [vmem:[%s1 + $0x30] sm:$0xf]
  %v52 = vld [vmem:[%s1 + $0x34] sm:$0xf]
  %v53 = vld [vmem:[%s1 + $0x38] sm:$0xf]
  %v54 = vld [vmem:[%s1 + $0x3c] sm:$0xf]
  %v55 = vld [vmem:[%s1 + $0x40] sm:$0xf]
  %v56 = vld [vmem:[%s1 + $0x44] sm:$0xf]
  %v57 = vld [vmem:[%s1 + $0x48] sm:$0xf]
  %v58 = vld [vmem:[%s1 + $0x4c] sm:$0xf]
  %v59 = vld [vmem:[%s1 + $0x50] sm:$0xf]
  %v60 = vld [vmem:[%s1 + $0x54] sm:$0xf]
  %v61 = vld [vmem:[%s1 + $0x58] sm:$0xf]
  %v62 = vld [vmem:[%s1 + $0x5c] sm:$0xf]
  %v63 = vld [vmem:[%s1 + $0x60] sm:$0xf]
  %v64 = vld [vmem:[%s1 + $0x64] sm:$0xf]
  %v65 = vld [vmem:[%s1 + $0x68] sm:$0xf]
  %v66 = vld [vmem:[%s1 + $0x6c] sm:$0xf]
  %v67 = vld [vmem:[%s1 + $0x70] sm:$0xf]
  %v68 = vld [vmem:[%s1 + $0x74] sm:$0xf]
  %v69 = vld [vmem:[%s1 + $0x78] sm:$0xf]
  %v70 = vld [vmem:[%s1 + $0x7c] sm:$0xf]
  %v103 = vunpack.c.l.b16 %v39
  %v104 = vunpack.c.l.b16 %v40
  %v105 = vunpack.c.l.b16 %v41
  %v106 = vunpack.c.l.b16 %v42
  %v107 = vunpack.c.l.b16 %v43
  %v108 = vunpack.c.l.b16 %v44
  %v109 = vunpack.c.l.b16 %v45
  %v110 = vunpack.c.l.b16 %v46
  %v111 = vunpack.c.l.b16 %v47
  %v112 = vunpack.c.l.b16 %v48
  %v113 = vunpack.c.l.b16 %v49
  %v114 = vunpack.c.l.b16 %v50
  %v115 = vunpack.c.l.b16 %v51
  %v116 = vunpack.c.l.b16 %v52
  %v117 = vunpack.c.l.b16 %v53
  %v118 = vunpack.c.l.b16 %v54
  %v119 = vunpack.c.l.b16 %v55
  %v120 = vunpack.c.l.b16 %v56
  %v121 = vunpack.c.l.b16 %v57
  %v122 = vunpack.c.l.b16 %v58
  %v123 = vunpack.c.l.b16 %v59
  %v124 = vunpack.c.l.b16 %v60
  %v125 = vunpack.c.l.b16 %v61
  %v126 = vunpack.c.l.b16 %v62
  %v127 = vunpack.c.l.b16 %v63
  %v128 = vunpack.c.l.b16 %v64
  %v129 = vunpack.c.l.b16 %v65
  %v130 = vunpack.c.l.b16 %v66
  %v131 = vunpack.c.l.b16 %v67
  %v132 = vunpack.c.l.b16 %v68
  %v133 = vunpack.c.l.b16 %v69
  %v134 = vunpack.c.l.b16 %v70
  %v135 = vpack.c.b16 %v104, %v103
  %v136 = vpack.c.b16 %v106, %v105
  %v137 = vpack.c.b16 %v108, %v107
  %v138 = vpack.c.b16 %v110, %v109
  %v139 = vpack.c.b16 %v112, %v111
  %v140 = vpack.c.b16 %v114, %v113
  %v141 = vpack.c.b16 %v116, %v115
  %v142 = vpack.c.b16 %v118, %v117
  %v143 = vpack.c.b16 %v120, %v119
  %v144 = vpack.c.b16 %v122, %v121
  %v145 = vpack.c.b16 %v124, %v123
  %v146 = vpack.c.b16 %v126, %v125
  %v147 = vpack.c.b16 %v128, %v127
  %v148 = vpack.c.b16 %v130, %v129
  %v149 = vpack.c.b16 %v132, %v131
  %v150 = vpack.c.b16 %v134, %v133
  %167 = vmatprep.subr.bf16.mxu0 0
  %168 = vmatpush1.bf16.msra.mxu0 %v135
  %169 = vmatprep.subr.bf16.mxu0 0
  %170 = vmatpush1.bf16.msra.mxu0 %v136
  %171 = vmatprep.subr.bf16.mxu0 0
  %172 = vmatpush1.bf16.msra.mxu0 %v137
  %173 = vmatprep.subr.bf16.mxu0 0
  %174 = vmatpush1.bf16.msra.mxu0 %v138
  %175 = vmatprep.subr.bf16.mxu0 0
  %176 = vmatpush1.bf16.msra.mxu0 %v139
  %177 = vmatprep.subr.bf16.mxu0 0
  %178 = vmatpush1.bf16.msra.mxu0 %v140
  %179 = vmatprep.subr.bf16.mxu0 0
  %180 = vmatpush1.bf16.msra.mxu0 %v141
  %181 = vmatprep.subr.bf16.mxu0 0
  %182 = vmatpush1.bf16.msra.mxu0 %v142
  %183 = vmatprep.subr.bf16.mxu0 0
  %184 = vmatpush1.bf16.msra.mxu0 %v143
  %185 = vmatprep.subr.bf16.mxu0 0
  %186 = vmatpush1.bf16.msra.mxu0 %v144
  %187 = vmatprep.subr.bf16.mxu0 0
  %188 = vmatpush1.bf16.msra.mxu0 %v145
  %189 = vmatprep.subr.bf16.mxu0 0
  %190 = vmatpush1.bf16.msra.mxu0 %v146
  %191 = vmatprep.subr.bf16.mxu0 0
  %192 = vmatpush1.bf16.msra.mxu0 %v147
  %193 = vmatprep.subr.bf16.mxu0 0
  %194 = vmatpush1.bf16.msra.mxu0 %v148
  %195 = vmatprep.subr.bf16.mxu0 0
  %196 = vmatpush1.bf16.msra.mxu0 %v149
  %197 = vmatprep.subr.bf16.mxu0 0
  %198 = vmatpush1.bf16.msra.mxu0 %v150
  %199 = vmatprep.mubr.bf16.mxu0 %v36
  %200 = vmatmul.mubr.bf16.gmra.mrb[0].mxu0 %v35
  %v201 = vpop.f32.mrb[0].mxu0
  %v202 = vadd.f32 0.0, %v201
  %v203 = vpop.f32.mrb[0].mxu0
  %v204 = vpop.f32.mrb[0].mxu0
  %v205 = vadd.f32 0.0, %v204
  %v206 = vpop.f32.mrb[0].mxu0
  %207 = vmatprep.mubr.bf16.mxu0 %v38
  %208 = vmatmul.mubr.bf16.gmra.mrb[0].mxu0 %v37
  %v209 = vpop.f32.mrb[0].mxu0
  %v210 = vadd.f32 0.0, %v209
  %v211 = vpop.f32.mrb[0].mxu0
  %v212 = vpop.f32.mrb[0].mxu0
  %v213 = vadd.f32 0.0, %v212
  %v214 = vpop.f32.mrb[0].mxu0
  %215 = vdwg.mxu0
  %v216 = vadd.f32 %v23, %v202
  %v217 = vadd.f32 %v24, %v205
  %v218 = vadd.f32 %v25, %v210
  %v219 = vadd.f32 %v26, %v213
  %220 = vst [vmem:[#allocation2] sm:$0xff] %v216
  %221 = vst [vmem:[#allocation2 + $0x8] sm:$0xff] %v217
  %222 = vst [vmem:[#allocation2 + $0x10] sm:$0xff] %v218
  %223 = vst [vmem:[#allocation2 + $0x18] sm:$0xff] %v219
  // Predicated region
  $region18: #{olmo_forward.21} parent=0 // pred_check
    %p224 = pneg %p15
  $region19: #{olmo_forward.21} parent=0 // pred_check_branch
    %226 = sbr.rel (%p224) target = $region21
  $region20: #{olmo_forward.21} parent=0 // pred_region
    %v227 = vld [vmem:[#allocation2] sm:$0xff]
    %v228 = vld [vmem:[#allocation2 + $0x8] sm:$0xff]
    %v229 = vld [vmem:[#allocation2 + $0x10] sm:$0xff]
    %v230 = vld [vmem:[#allocation2 + $0x18] sm:$0xff]
    %v231 = vmul.f32 %v227, %v227
    %v232 = vmul.f32 %v228, %v228
    %v233 = vmul.f32 %v229, %v229
    %v234 = vmul.f32 %v230, %v230
    %235 = vadd.xlane.f32.xlu0 %v231
    %v236 = vpop.xlane.xlu0 %235
    %237 = vadd.xlane.f32.xlu0 %v232
    %v238 = vpop.xlane.xlu0 %237
    %239 = vadd.xlane.f32.xlu0 %v233
    %v240 = vpop.xlane.xlu0 %239
    %241 = vadd.xlane.f32.xlu0 %v234
    %v242 = vpop.xlane.xlu0 %241
    %v243 = vrcp.pop 128.0
    %v244 = vmul.f32 %v236, %v243
    %v245 = vmul.f32 %v238, %v243
    %v246 = vmul.f32 %v240, %v243
    %v247 = vmul.f32 %v242, %v243
    %v248 = vadd.f32 %v244, 1e-05
    %v249 = vadd.f32 %v245, 1e-05
    %v250 = vadd.f32 %v246, 1e-05
    %v251 = vadd.f32 %v247, 1e-05
    %v252 = vrsqrt.pop %v248
    %v253 = vrsqrt.pop %v249
    %v254 = vrsqrt.pop %v250
    %v255 = vrsqrt.pop %v251
    %v256 = vmul.f32 %v227, %v252
    %v257 = vmul.f32 %v228, %v253
    %v258 = vmul.f32 %v229, %v254
    %v259 = vmul.f32 %v230, %v255
    %v260 = vld [vmem:[%s2] sm:$0x1]
    %v262 = vlaneseq
    %v263 = vshrl.u32 %v262, 7
    %v264 = vsub.s32 0, %v263
    %v265 = vrot.slane %v260, %v264
    %v267 = vmul.f32 %v256, %v265
    %v268 = vmul.f32 %v257, %v265
    %v269 = vmul.f32 %v258, %v265
    %v270 = vmul.f32 %v259, %v265
    %271 = vst [vmem:[%s3] sm:$0xff] %v267
    %272 = vst [vmem:[%s3 + $0x8] sm:$0xff] %v268
    %273 = vst [vmem:[%s3 + $0x10] sm:$0xff] %v269
    %274 = vst [vmem:[%s3 + $0x18] sm:$0xff] %v270
  $region21: #{olmo_forward.21} parent=0 // pred_fallthru
    _
  // Predicated region
  $region22: #{olmo_forward.21} parent=0 // pred_check
    _
  $region23: #{olmo_forward.21} parent=0 // pred_check_branch
    %276 = sbr.rel (0) target = $region25
  $region24: #{olmo_forward.21} parent=0 // pred_region
    _
  $region25: #{olmo_forward.21} parent=0 // pred_fallthru
    _
  // Predicated region
  $region26: #{olmo_forward.21} parent=0 // pred_check
    _
  $region27: #{olmo_forward.21} parent=0 // pred_check_branch
    %278 = sbr.rel (0) target = $region29
  $region28: #{olmo_forward.21} parent=0 // pred_region
    _
  $region29: #{olmo_forward.21} parent=0 // pred_fallthru
    _

// kernel: olmo_forward.29
$region0: #{olmo_forward.29}
  #allocation0 [shape = 'u32[]', space=smem, size = 0x4, offset = 0x4, fixed_abs, tag = 'smem constant byte address 0x4 - core index']
  #allocation1 [shape = 'u32[144,128]{1,0:T(1,128)}', space=vmem, size = 0x12000, scoped, tag = 'internal scratch']
  %s0 = inlined_call_operand.vmem [shape: f32[32,128], index: 0, kind: input, shape index: {}]
  %s1 = inlined_call_operand.vmem [shape: f32[1,128], index: 1, kind: input, shape index: {}]
  %s2 = inlined_call_operand.hbm [shape: f32[32,128], index: 2, kind: output, shape index: {}]
  %s3 = sld [smem:[#allocation0]]
  $region18: #{olmo_forward.29} parent=0
    _
  %s5 = ssub.s32 1, %s3
  %s6 = scalar_select 0, %s5, %s3
  $region1: #{olmo_forward.29} parent=0
    #allocation2 [shape = 'u8[16384]{0}', space=vmem, size = 0x4000, scoped, tag = 'output window, operand 0, single buffered']
    #allocation3 [shape = 's32[1]{0}', space=sflag, size = 0x4, scoped, tag = 'scoped memory for olmo_forward.29']
    %7 = vsyncpa [#allocation3], 0
    // Predicated region
    $region2: #{olmo_forward.29} parent=1 // pred_check
      _
    $region3: #{olmo_forward.29} parent=1 // pred_check_branch
      %9 = sbr.rel (0) target = $region5
    $region4: #{olmo_forward.29} parent=1 // pred_region
      _
    $region5: #{olmo_forward.29} parent=1 // pred_fallthru
      _
    // Predicated region
    $region6: #{olmo_forward.29} parent=1 // pred_check
      _
    $region7: #{olmo_forward.29} parent=1 // pred_check_branch
      %11 = sbr.rel (0) target = $region9
    $region8: #{olmo_forward.29} parent=1 // pred_region
      _
    $region9: #{olmo_forward.29} parent=1 // pred_fallthru
      _
    %v12 = vld [vmem:[%s0] sm:$0xff]
    %v13 = vld [vmem:[%s0 + $0x8] sm:$0xff]
    %v14 = vld [vmem:[%s0 + $0x10] sm:$0xff]
    %v15 = vld [vmem:[%s0 + $0x18] sm:$0xff]
    %v16 = vmul.f32 %v12, %v12
    %v17 = vmul.f32 %v13, %v13
    %v18 = vmul.f32 %v14, %v14
    %v19 = vmul.f32 %v15, %v15
    %20 = vadd.xlane.f32.xlu0 %v16
    %v21 = vpop.xlane.xlu0 %20
    %22 = vadd.xlane.f32.xlu0 %v17
    %v23 = vpop.xlane.xlu0 %22
    %24 = vadd.xlane.f32.xlu0 %v18
    %v25 = vpop.xlane.xlu0 %24
    %26 = vadd.xlane.f32.xlu0 %v19
    %v27 = vpop.xlane.xlu0 %26
    %v28 = vrcp.pop 128.0
    %v29 = vmul.f32 %v21, %v28
    %v30 = vmul.f32 %v23, %v28
    %v31 = vmul.f32 %v25, %v28
    %v32 = vmul.f32 %v27, %v28
    %v33 = vadd.f32 %v29, 1e-05
    %v34 = vadd.f32 %v30, 1e-05
    %v35 = vadd.f32 %v31, 1e-05
    %v36 = vadd.f32 %v32, 1e-05
    %v37 = vrsqrt.pop %v33
    %v38 = vrsqrt.pop %v34
    %v39 = vrsqrt.pop %v35
    %v40 = vrsqrt.pop %v36
    %v41 = vmul.f32 %v12, %v37
    %v42 = vmul.f32 %v13, %v38
    %v43 = vmul.f32 %v14, %v39
    %v44 = vmul.f32 %v15, %v40
    %v45 = vld [vmem:[%s1] sm:$0x1]
    %v47 = vlaneseq
    %v48 = vshrl.u32 %v47, 7
    %v49 = vsub.s32 0, %v48
    %v50 = vrot.slane %v45, %v49
    %v52 = vmul.f32 %v41, %v50
    %v53 = vmul.f32 %v42, %v50
    %v54 = vmul.f32 %v43, %v50
    %v55 = vmul.f32 %v44, %v50
    %56 = vst [vmem:[#allocation2] sm:$0xff] %v52
    %57 = vst [vmem:[#allocation2 + $0x8] sm:$0xff] %v53
    %58 = vst [vmem:[#allocation2 + $0x10] sm:$0xff] %v54
    %59 = vst [vmem:[#allocation2 + $0x18] sm:$0xff] %v55
    // Predicated region
    $region10: #{olmo_forward.29} parent=1 // pred_check
      _
    $region11: #{olmo_forward.29} parent=1 // pred_check_branch
      %61 = sbr.rel (0) target = $region13
    $region12: #{olmo_forward.29} parent=1 // pred_region
      %s63 = ssub.s32 512, 512
      %64 = vsyncadd [#allocation3], %s63
      %s65 = sshll.u32 [#allocation2], 4
      %s66 = int_to_ptr.vmem [resolvable:$true] %s65
      %71 = dma.vmem_to_hbm [thread:$0]  %s66, 512, %s2, [#allocation3], 128, 128, 8
    $region13: #{olmo_forward.29} parent=1 // pred_fallthru
      _
    // Predicated region
    $region14: #{olmo_forward.29} parent=1 // pred_check
      _
    $region15: #{olmo_forward.29} parent=1 // pred_check_branch
      %73 = sbr.rel (0) target = $region17
    $region16: #{olmo_forward.29} parent=1 // pred_region
      %74 = dma.done [#allocation3], 512
    $region17: #{olmo_forward.29} parent=1 // pred_fallthru
      _
    %75 = vsyncpa [#allocation3], 1

// kernel: olmo_forward.18
$region0: #{olmo_forward.18}
  #allocation0 [shape = 'u32[]', space=smem, size = 0x4, offset = 0x4, fixed_abs, tag = 'smem constant byte address 0x4 - core index']
  #allocation1 [shape = 'u32[144,128]{1,0:T(1,128)}', space=vmem, size = 0x12000, scoped, tag = 'internal scratch']
  #allocation2 [shape = 'f32[4,16,1]{2,1,0:T(8,128)}', space=vmem, size = 0x8000, scoped, tag = 'scratch operand']
  #allocation3 [shape = 'f32[4,16,1]{2,1,0:T(8,128)}', space=vmem, size = 0x8000, scoped, tag = 'scratch operand']
  #allocation4 [shape = 'f32[4,16,32]{2,1,0:T(8,128)}', space=vmem, size = 0x8000, scoped, tag = 'scratch operand']
  %s0 = inlined_call_operand.vmem [shape: f32[2,16,128], index: 0, kind: input, shape index: {}]
  %s1 = inlined_call_operand.vmem [shape: f32[2,16,128], index: 1, kind: input, shape index: {}]
  %s2 = inlined_call_operand.vmem [shape: f32[2,16,128], index: 2, kind: input, shape index: {}]
  %s3 = inlined_call_operand.vmem [shape: f32[2,16,128], index: 3, kind: output, shape index: {}]
  %s4 = sld [smem:[#allocation0]]
  $region57: #{olmo_forward.18} parent=0
    _
  %s6 = ssub.s32 1, %s4
  %s7 = scalar_select 0, %s6, %s4
  loop: start=0, step=1, limit=4
  $region2: #{olmo_forward.18} parent=0 // loop_pre_header
    _
  $region3: #{olmo_forward.18} parent=0 // loop_header
    %s9 = sphi 0, %s13
    %p10 = scmp.ge.s32.totalorder %s9, 4
    %s16 = sphi 0, %s35
    %s17 = sphi 0, %s31
    %s18 = sphi 0, %s27
    %s19 = sphi 0, %s16
    %s20 = sphi 0, %s17
    %s21 = sphi 0, %s18
    %s22 = sphi 0, %s19
    %s23 = sphi 0, %s20
    %s24 = sphi 0, %s21
    %s40 = sphi 0, %s42
    %s43 = sphi 0, %s40
    %s44 = sphi 0, %s43
    %s60 = sphi 0, %s44
    %s68 = sphi 0, %s70
    %s71 = sphi 0, %s68
    %s72 = sphi 0, %s71
    %s88 = sphi 0, %s72
    %s96 = sphi 0, %s98
    %s99 = sphi 0, %s96
    %s100 = sphi 0, %s99
    %s116 = sphi 0, %s100
    %s124 = sphi 0, %s126
    %s127 = sphi 0, %s124
    %s128 = sphi 0, %s127
    %s144 = sphi 0, %s128
  $region4: #{olmo_forward.18} parent=0 // loop_header_branch
    %12 = sbr.rel (%p10) target = $region8
  $region5: #{olmo_forward.18} parent=0 // loop_body
    %s14 = ssub.s32 %s9, 1
    %s15 = ssub.s32 %s9, 2
    %s25 = sadd.s32 1, %s18
    %p26 = scmp.ge.s32.totalorder %s25, 1
    %s27 = scalar_select %p26, 0, %s25
    %s28 = sadd.s32 1, %s17
    %s29 = scalar_select %p26, %s28, %s17
    %p30 = scmp.ge.s32.totalorder %s29, 1
    %s31 = scalar_select %p30, 0, %s29
    %s32 = sadd.s32 1, %s16
    %s33 = scalar_select %p30, %s32, %s16
    %p34 = scmp.ge.s32.totalorder %s33, 2
    %s35 = scalar_select %p34, 0, %s33
    %s36 = ssub.s32 %s16, %s35
    %s37 = ssub.s32 %s17, %s31
    %s38 = sor.u32 %s36, %s37
    %p39 = scmp.eq.s32.totalorder %s38, 0
    %s41 = sadd.s32 %s40, 1
    %s42 = scalar_select %p39, %s40, %s41
    %p45 = pneg %p39
    %p46 = scmp.eq.s32.totalorder %s9, 1
    %p47 = por %p45, %p46
    %p48 = scmp.ne.s32.totalorder %s40, %s43
    %p49 = scmp.eq.s32.totalorder %s9, 0
    %p50 = por %p48, %p49
    %p51 = scmp.ne.s32.totalorder %s40, %s43
    %p52 = scmp.eq.s32.totalorder %s14, 1
    %p53 = por %p51, %p52
    %p54 = scmp.ne.s32.totalorder %s43, %s44
    %p55 = scmp.eq.s32.totalorder %s14, 0
    %p56 = por %p54, %p55
    %p57 = scmp.ne.s32.totalorder %s43, %s44
    %p58 = scmp.eq.s32.totalorder %s15, 1
    %p59 = por %p57, %p58
    %p61 = scmp.ne.s32.totalorder %s44, %s60
    %p62 = scmp.eq.s32.totalorder %s15, 0
    %p63 = por %p61, %p62
    %s64 = ssub.s32 %s16, %s35
    %s65 = ssub.s32 %s18, %s27
    %s66 = sor.u32 %s64, %s65
    %p67 = scmp.eq.s32.totalorder %s66, 0
    %s69 = sadd.s32 %s68, 1
    %s70 = scalar_select %p67, %s68, %s69
    %p73 = pneg %p67
    %p74 = scmp.eq.s32.totalorder %s9, 1
    %p75 = por %p73, %p74
    %p76 = scmp.ne.s32.totalorder %s68, %s71
    %p77 = scmp.eq.s32.totalorder %s9, 0
    %p78 = por %p76, %p77
    %p79 = scmp.ne.s32.totalorder %s68, %s71
    %p80 = scmp.eq.s32.totalorder %s14, 1
    %p81 = por %p79, %p80
    %p82 = scmp.ne.s32.totalorder %s71, %s72
    %p83 = scmp.eq.s32.totalorder %s14, 0
    %p84 = por %p82, %p83
    %p85 = scmp.ne.s32.totalorder %s71, %s72
    %p86 = scmp.eq.s32.totalorder %s15, 1
    %p87 = por %p85, %p86
    %p89 = scmp.ne.s32.totalorder %s72, %s88
    %p90 = scmp.eq.s32.totalorder %s15, 0
    %p91 = por %p89, %p90
    %s92 = ssub.s32 %s16, %s35
    %s93 = ssub.s32 %s18, %s27
    %s94 = sor.u32 %s92, %s93
    %p95 = scmp.eq.s32.totalorder %s94, 0
    %s97 = sadd.s32 %s96, 1
    %s98 = scalar_select %p95, %s96, %s97
    %p101 = pneg %p95
    %p102 = scmp.eq.s32.totalorder %s9, 1
    %p103 = por %p101, %p102
    %p104 = scmp.ne.s32.totalorder %s96, %s99
    %p105 = scmp.eq.s32.totalorder %s9, 0
    %p106 = por %p104, %p105
    %p107 = scmp.ne.s32.totalorder %s96, %s99
    %p108 = scmp.eq.s32.totalorder %s14, 1
    %p109 = por %p107, %p108
    %p110 = scmp.ne.s32.totalorder %s99, %s100
    %p111 = scmp.eq.s32.totalorder %s14, 0
    %p112 = por %p110, %p111
    %p113 = scmp.ne.s32.totalorder %s99, %s100
    %p114 = scmp.eq.s32.totalorder %s15, 1
    %p115 = por %p113, %p114
    %p117 = scmp.ne.s32.totalorder %s100, %s116
    %p118 = scmp.eq.s32.totalorder %s15, 0
    %p119 = por %p117, %p118
    %s120 = ssub.s32 %s16, %s35
    %s121 = ssub.s32 %s17, %s31
    %s122 = sor.u32 %s120, %s121
    %p123 = scmp.eq.s32.totalorder %s122, 0
    %s125 = sadd.s32 %s124, 1
    %s126 = scalar_select %p123, %s124, %s125
    %p129 = pneg %p123
    %p130 = scmp.eq.s32.totalorder %s9, 1
    %p131 = por %p129, %p130
    %p132 = scmp.ne.s32.totalorder %s124, %s127
    %p133 = scmp.eq.s32.totalorder %s9, 0
    %p134 = por %p132, %p133
    %p135 = scmp.ne.s32.totalorder %s124, %s127
    %p136 = scmp.eq.s32.totalorder %s14, 1
    %p137 = por %p135, %p136
    %p138 = scmp.ne.s32.totalorder %s127, %s128
    %p139 = scmp.eq.s32.totalorder %s14, 0
    %p140 = por %p138, %p139
    %p141 = scmp.ne.s32.totalorder %s127, %s128
    %p142 = scmp.eq.s32.totalorder %s15, 1
    %p143 = por %p141, %p142
    %p145 = scmp.ne.s32.totalorder %s128, %s144
    %p146 = scmp.eq.s32.totalorder %s15, 0
    %p147 = por %p145, %p146
    %p148 = scmp.le.s32.totalorder 1, %s9
    %p149 = scmp.lt.s32.totalorder %s9, 3
    %p150 = pnand %p148, %p149
    %p151 = pneg %p150
    // Predicated region
    $region9: #{olmo_forward.18} parent=5 // pred_check
      _
    $region10: #{olmo_forward.18} parent=5 // pred_check_branch
      %153 = sbr.rel (%p150) target = $region12
    $region11: #{olmo_forward.18} parent=5 // pred_region
      %s154 = ssub.s32 %s9, 1
    $region12: #{olmo_forward.18} parent=5 // pred_fallthru
      _
    %p155 = scmp.lt.s32.totalorder %s9, 2
    // Predicated region
    $region13: #{olmo_forward.18} parent=5 // pred_check
      %p156 = pneg %p155
    $region14: #{olmo_forward.18} parent=5 // pred_check_branch
      %158 = sbr.rel (%p156) target = $region16
    $region15: #{olmo_forward.18} parent=5 // pred_region
      // Predicated region
      $region17: #{olmo_forward.18} parent=15 // pred_check
        %p159 = pneg %p50
      $region18: #{olmo_forward.18} parent=15 // pred_check_branch
        %161 = sbr.rel (%p159) target = $region20
      $region19: #{olmo_forward.18} parent=15 // pred_region
        %s162 = smul.u32 2, %s17
        %p163 = scmp.lt.s32.totalorder %s16, 1
        %s164 = scalar_select %p163, %s16, 1
        %p165 = scmp.lt.s32.totalorder %s162, 1
        %s166 = scalar_select %p165, %s162, 1
        %s167 = smul.addr %s164, 2
        %s168 = sadd.s32 %s166, %s167
        %s169 = smul.addr %s168, 8
        %s170 = scalar_lea.vmem %s0, %s169
        %s171 = smul.u32 2, %s17
      $region20: #{olmo_forward.18} parent=15 // pred_fallthru
        _
      // Predicated region
      $region21: #{olmo_forward.18} parent=15 // pred_check
        %p172 = pneg %p78
      $region22: #{olmo_forward.18} parent=15 // pred_check_branch
        %174 = sbr.rel (%p172) target = $region24
      $region23: #{olmo_forward.18} parent=15 // pred_region
        %s175 = smul.u32 2, %s18
        %p176 = scmp.lt.s32.totalorder %s16, 1
        %s177 = scalar_select %p176, %s16, 1
        %p178 = scmp.lt.s32.totalorder %s175, 1
        %s179 = scalar_select %p178, %s175, 1
        %s180 = smul.addr %s177, 2
        %s181 = sadd.s32 %s179, %s180
        %s182 = smul.addr %s181, 8
        %s183 = scalar_lea.vmem %s1, %s182
        %s184 = smul.u32 2, %s18
      $region24: #{olmo_forward.18} parent=15 // pred_fallthru
        _
      // Predicated region
      $region25: #{olmo_forward.18} parent=15 // pred_check
        %p185 = pneg %p106
      $region26: #{olmo_forward.18} parent=15 // pred_check_branch
        %187 = sbr.rel (%p185) target = $region28
      $region27: #{olmo_forward.18} parent=15 // pred_region
        %s188 = smul.u32 2, %s18
        %p189 = scmp.lt.s32.totalorder %s16, 1
        %s190 = scalar_select %p189, %s16, 1
        %p191 = scmp.lt.s32.totalorder %s188, 1
        %s192 = scalar_select %p191, %s188, 1
        %s193 = smul.addr %s190, 2
        %s194 = sadd.s32 %s192, %s193
        %s195 = smul.addr %s194, 8
        %s196 = scalar_lea.vmem %s2, %s195
        %s197 = smul.u32 2, %s18
      $region28: #{olmo_forward.18} parent=15 // pred_fallthru
        _
    $region16: #{olmo_forward.18} parent=5 // pred_fallthru
      _
    %p198 = scmp.le.s32.totalorder 1, %s9
    %p199 = scmp.lt.s32.totalorder %s9, 3
    %p200 = pnand %p198, %p199
    %p201 = pneg %p200
    // Predicated region
    $region29: #{olmo_forward.18} parent=5 // pred_check
      _
    $region30: #{olmo_forward.18} parent=5 // pred_check_branch
      %203 = sbr.rel (%p200) target = $region32
    $region31: #{olmo_forward.18} parent=5 // pred_region
      %s204 = ssub.s32 %s9, 1
      %s205 = smul.u32 2, %s20
      %p206 = scmp.lt.s32.totalorder %s19, 1
      %s207 = scalar_select %p206, %s19, 1
      %p208 = scmp.lt.s32.totalorder %s205, 1
      %s209 = scalar_select %p208, %s205, 1
      %s210 = smul.addr %s207, 2
      %s211 = sadd.s32 %s209, %s210
      %s212 = smul.addr %s211, 8
      %s213 = scalar_lea.vmem %s0, %s212
      %p214 = pneg %p56
      %p215 = pneg %p53
      %s216 = smul.u32 2, %s21
      %p217 = scmp.lt.s32.totalorder %s19, 1
      %s218 = scalar_select %p217, %s19, 1
      %p219 = scmp.lt.s32.totalorder %s216, 1
      %s220 = scalar_select %p219, %s216, 1
      %s221 = smul.addr %s218, 2
      %s222 = sadd.s32 %s220, %s221
      %s223 = smul.addr %s222, 8
      %s224 = scalar_lea.vmem %s1, %s223
      %p225 = pneg %p84
      %p226 = pneg %p81
      %s227 = smul.u32 2, %s21
      %p228 = scmp.lt.s32.totalorder %s19, 1
      %s229 = scalar_select %p228, %s19, 1
      %p230 = scmp.lt.s32.totalorder %s227, 1
      %s231 = scalar_select %p230, %s227, 1
      %s232 = smul.addr %s229, 2
      %s233 = sadd.s32 %s231, %s232
      %s234 = smul.addr %s233, 8
      %s235 = scalar_lea.vmem %s2, %s234
      %p236 = pneg %p112
      %p237 = pneg %p109
      %p238 = pneg %p140
      %p239 = pneg %p137
      %s240 = smul.u32 2, %s20
      %p241 = scmp.lt.s32.totalorder %s19, 1
      %s242 = scalar_select %p241, %s19, 1
      %p243 = scmp.lt.s32.totalorder %s240, 1
      %s244 = scalar_select %p243, %s240, 1
      %s245 = smul.addr %s242, 2
      %s246 = sadd.s32 %s244, %s245
      %s247 = smul.addr %s246, 8
      %s248 = scalar_lea.vmem %s3, %s247
      %s249 = smul.u32 2, %s20
      %p250 = scmp.lt.s32.totalorder %s19, 1
      %s251 = scalar_select %p250, %s19, 1
      %p252 = scmp.lt.s32.totalorder %s249, 1
      %s253 = scalar_select %p252, %s249, 1
      %s254 = smul.addr %s251, 2
      %s255 = sadd.s32 %s253, %s254
      %s256 = smul.addr %s255, 8
      %s257 = scalar_lea.vmem %s0, %s256
      %s258 = smul.u32 2, %s20
      %s259 = smul.u32 2, %s21
      %p260 = scmp.lt.s32.totalorder %s19, 1
      %s261 = scalar_select %p260, %s19, 1
      %p262 = scmp.lt.s32.totalorder %s259, 1
      %s263 = scalar_select %p262, %s259, 1
      %s264 = smul.addr %s261, 2
      %s265 = sadd.s32 %s263, %s264
      %s266 = smul.addr %s265, 8
      %s267 = scalar_lea.vmem %s1, %s266
      %s268 = smul.u32 2, %s21
      %s269 = smul.u32 2, %s21
      %p270 = scmp.lt.s32.totalorder %s19, 1
      %s271 = scalar_select %p270, %s19, 1
      %p272 = scmp.lt.s32.totalorder %s269, 1
      %s273 = scalar_select %p272, %s269, 1
      %s274 = smul.addr %s271, 2
      %s275 = sadd.s32 %s273, %s274
      %s276 = smul.addr %s275, 8
      %s277 = scalar_lea.vmem %s2, %s276
      %s278 = smul.u32 2, %s21
      %s279 = smul.u32 2, %s20
      %p280 = scmp.lt.s32.totalorder %s19, 1
      %s281 = scalar_select %p280, %s19, 1
      %p282 = scmp.lt.s32.totalorder %s279, 1
      %s283 = scalar_select %p282, %s279, 1
      %s284 = smul.addr %s281, 2
      %s285 = sadd.s32 %s283, %s284
      %s286 = smul.addr %s285, 8
      %s287 = scalar_lea.vmem %s3, %s286
      %s288 = smul.u32 2, %s20
      %p290 = scmp.eq.s32.totalorder %s21, 0
      // Predicated region
      $region33: #{olmo_forward.18} parent=31 // pred_check
        %p291 = pneg %p290
      $region34: #{olmo_forward.18} parent=31 // pred_check_branch
        %293 = sbr.rel (%p291) target = $region36
      $region35: #{olmo_forward.18} parent=31 // pred_region
        %vm294 = vcmask 7168
        %295 = vst.msk [vmem:[#allocation2] sm:$0xff] %vm294, -1e+30
        %296 = vst.msk [vmem:[#allocation2 + $0x8] sm:$0xff] %vm294, -1e+30
        %297 = vst.msk [vmem:[#allocation2 + $0x10] sm:$0xff] %vm294, -1e+30
        %298 = vst.msk [vmem:[#allocation2 + $0x18] sm:$0xff] %vm294, -1e+30
        %299 = vst.msk [vmem:[#allocation2 + $0x20] sm:$0xff] %vm294, -1e+30
        %300 = vst.msk [vmem:[#allocation2 + $0x28] sm:$0xff] %vm294, -1e+30
        %301 = vst.msk [vmem:[#allocation2 + $0x30] sm:$0xff] %vm294, -1e+30
        %302 = vst.msk [vmem:[#allocation2 + $0x38] sm:$0xff] %vm294, -1e+30
        %303 = vst.msk [vmem:[#allocation3] sm:$0xff] %vm294, 0.0
        %304 = vst.msk [vmem:[#allocation3 + $0x8] sm:$0xff] %vm294, 0.0
        %305 = vst.msk [vmem:[#allocation3 + $0x10] sm:$0xff] %vm294, 0.0
        %306 = vst.msk [vmem:[#allocation3 + $0x18] sm:$0xff] %vm294, 0.0
        %307 = vst.msk [vmem:[#allocation3 + $0x20] sm:$0xff] %vm294, 0.0
        %308 = vst.msk [vmem:[#allocation3 + $0x28] sm:$0xff] %vm294, 0.0
        %309 = vst.msk [vmem:[#allocation3 + $0x30] sm:$0xff] %vm294, 0.0
        %310 = vst.msk [vmem:[#allocation3 + $0x38] sm:$0xff] %vm294, 0.0
        %vm311 = vcmask 261120
        %312 = vst.msk [vmem:[#allocation4] sm:$0xff] %vm311, 0.0
        %313 = vst.msk [vmem:[#allocation4 + $0x8] sm:$0xff] %vm311, 0.0
        %314 = vst.msk [vmem:[#allocation4 + $0x10] sm:$0xff] %vm311, 0.0
        %315 = vst.msk [vmem:[#allocation4 + $0x18] sm:$0xff] %vm311, 0.0
        %316 = vst.msk [vmem:[#allocation4 + $0x20] sm:$0xff] %vm311, 0.0
        %317 = vst.msk [vmem:[#allocation4 + $0x28] sm:$0xff] %vm311, 0.0
        %318 = vst.msk [vmem:[#allocation4 + $0x30] sm:$0xff] %vm311, 0.0
        %319 = vst.msk [vmem:[#allocation4 + $0x38] sm:$0xff] %vm311, 0.0
      $region36: #{olmo_forward.18} parent=31 // pred_fallthru
        _
      %s320 = smul.u32 %s20, 16
      %s321 = smul.u32 %s21, 16
      %s322 = sadd.s32 %s320, 15
      %p323 = scmp.le.s32.totalorder %s321, %s322
      // Predicated region
      $region37: #{olmo_forward.18} parent=31 // pred_check
        %p324 = pneg %p323
      $region38: #{olmo_forward.18} parent=31 // pred_check_branch
        %326 = sbr.rel (%p324) target = $region40
      $region39: #{olmo_forward.18} parent=31 // pred_region
        %v327 = vld [vmem:[%s257] sm:$0xff]
        %v328 = vld [vmem:[%s257 + $0x8] sm:$0xff]
        %v329 = vmul.f32 %v327, 0.17677669
        %v330 = vmul.f32 %v328, 0.17677669
        %v331 = vpack.c.bf16 %v330, %v329
        %v332 = vld [vmem:[%s267] sm:$0xff]
        %v333 = vld [vmem:[%s267 + $0x8] sm:$0xff]
        %v334 = vpack.c.bf16 %v333, %v332
        %v335 = vld [vmem:[%s277] sm:$0xff]
        %v336 = vld [vmem:[%s277 + $0x8] sm:$0xff]
        %v337 = vpack.c.bf16 %v336, %v335
        %v338 = vlaneseq
        %v339 = vshrl.u32 %v338, 7
        %v340 = vadd.s32 %v339, 8
        %v341 = vstv %s320
        %v342 = vadd.s32 %v341, %v339
        %v343 = vadd.s32 %v341, %v340
        %v344 = vlaneseq
        %v345 = vand.u32 %v344, 127
        %v346 = vstv %s321
        %v347 = vadd.s32 %v346, %v345
        %vm348 = vcmp.le.s32.totalorder %v347, %v342
        %vm349 = vcmp.le.s32.totalorder %v347, %v343
        %vm350 = vcmask 261120
        %v352 = vsel %vm350, %v331, 0
        %v355 = vsel %vm350, %v334, 0
        %357 = vmatprep.subr.bf16.mxu0 0
        %358 = vmatpush1.bf16.xpose.msra.mxu0 %v355
        %359 = vmatprep.subr.bf16.mxu0 0
        %360 = vmatpush1.bf16.xpose.msra.mxu0 0
        %361 = vmatprep.subr.bf16.mxu0 0
        %362 = vmatpush1.bf16.xpose.msra.mxu0 0
        %363 = vmatprep.subr.bf16.mxu0 0
        %364 = vmatpush1.bf16.xpose.msra.mxu0 0
        %365 = vmatprep.subr.bf16.mxu0 0
        %366 = vmatpush1.bf16.xpose.msra.mxu0 0
        %367 = vmatprep.subr.bf16.mxu0 0
        %368 = vmatpush1.bf16.xpose.msra.mxu0 0
        %369 = vmatprep.subr.bf16.mxu0 0
        %370 = vmatpush1.bf16.xpose.msra.mxu0 0
        %371 = vmatprep.subr.bf16.mxu0 0
        %372 = vmatpush1.bf16.xpose.msra.mxu0 0
        %373 = vmatprep.subr.bf16.mxu0 0
        %374 = vmatpush1.bf16.xpose.msra.mxu0 0
        %375 = vmatprep.subr.bf16.mxu0 0
        %376 = vmatpush1.bf16.xpose.msra.mxu0 0
        %377 = vmatprep.subr.bf16.mxu0 0
        %378 = vmatpush1.bf16.xpose.msra.mxu0 0
        %379 = vmatprep.subr.bf16.mxu0 0
        %380 = vmatpush1.bf16.xpose.msra.mxu0 0
        %381 = vmatprep.subr.bf16.mxu0 0
        %382 = vmatpush1.bf16.xpose.msra.mxu0 0
        %383 = vmatprep.subr.bf16.mxu0 0
        %384 = vmatpush1.bf16.xpose.msra.mxu0 0
        %385 = vmatprep.subr.bf16.mxu0 0
        %386 = vmatpush1.bf16.xpose.msra.mxu0 0
        %387 = vmatprep.subr.bf16.mxu0 0
        %388 = vmatpush1.bf16.xpose.msra.mxu0 0
        %389 = vmatprep.mubr.bf16.mxu0 0
        %390 = vmatmul.mubr.bf16.gmra.mrb[0].mxu0 %v352
        %v391 = vpop.f32.mrb[0].mxu0
        %v392 = vadd.f32 0.0, %v391
        %v393 = vpop.f32.mrb[0].mxu0
        %v394 = vpop.f32.mrb[0].mxu0
        %v395 = vadd.f32 0.0, %v394
        %v396 = vpop.f32.mrb[0].mxu0
        %397 = vdwg.mxu0
        %v398 = vsel %vm348, %v392, -1e+30
        %v399 = vsel %vm349, %v395, -1e+30
        %v400 = vld [vmem:[#allocation2] sm:$0xff]
        %v401 = vld [vmem:[#allocation2 + $0x8] sm:$0xff]
        %vm402 = vcmask 130048
        %v403 = vsel %vm402, %v398, -inf
        %404 = vmax.xlane.f32.xlu0 %v403
        %v405 = vpop.xlane.xlu0 %404
        %v406 = vsel %vm402, %v399, -inf
        %407 = vmax.xlane.f32.xlu0 %v406
        %v408 = vpop.xlane.xlu0 %407
        %v409 = vmax.f32 %v400, %v405
        %v410 = vmax.f32 %v401, %v408
        %v411 = vsub.f32 %v400, %v409
        %v412 = vsub.f32 %v401, %v410
        %v413 = vmul.f32 %v411, 1.442695
        %v414 = vpow.pop %v413
        %v415 = vmul.f32 %v412, 1.442695
        %v416 = vpow.pop %v415
        %418 = vset.pattern.permute.xlu0 0
        %419 = vperm.xlu0 %418, %v409
        %v420 = vpop.permute.xlu0 %419
        %423 = vset.pattern.permute.xlu0 0
        %424 = vperm.xlu0 %423, %v410
        %v425 = vpop.permute.xlu0 %424
        %v427 = vsub.f32 %v398, %v420
        %v428 = vsub.f32 %v399, %v425
        %v429 = vmul.f32 %v427, 1.442695
        %v430 = vpow.pop %v429
        %v431 = vmul.f32 %v428, 1.442695
        %v432 = vpow.pop %v431
        %v433 = vld [vmem:[#allocation3] sm:$0xff]
        %v434 = vld [vmem:[#allocation3 + $0x8] sm:$0xff]
        %v435 = vmul.f32 %v414, %v433
        %v436 = vmul.f32 %v416, %v434
        %v437 = vsel %vm402, %v430, 0.0
        %438 = vadd.xlane.f32.xlu0 %v437
        %v439 = vpop.xlane.xlu0 %438
        %v440 = vsel %vm402, %v432, 0.0
        %441 = vadd.xlane.f32.xlu0 %v440
        %v442 = vpop.xlane.xlu0 %441
        %v443 = vadd.f32 %v435, %v439
        %v444 = vadd.f32 %v436, %v442
        %vm445 = vcmask 7168
        %446 = vst.msk [vmem:[#allocation3] sm:$0xff] %vm445, %v443
        %447 = vst.msk [vmem:[#allocation3 + $0x8] sm:$0xff] %vm445, %v444
        %v448 = vld [vmem:[#allocation4] sm:$0xff]
        %v449 = vld [vmem:[#allocation4 + $0x8] sm:$0xff]
        %451 = vset.pattern.permute.xlu0 0
        %452 = vperm.xlu0 %451, %v414
        %v453 = vpop.permute.xlu0 %452
        %456 = vset.pattern.permute.xlu0 0
        %457 = vperm.xlu0 %456, %v416
        %v458 = vpop.permute.xlu0 %457
        %v460 = vmul.f32 %v453, %v448
        %v461 = vmul.f32 %v458, %v449
        %v462 = vpack.c.bf16 %v432, %v430
        %v464 = vsel %vm402, %v462, 0
        %466 = vmatprep.subr.bf16.mxu0 0
        %467 = vmatpush1.bf16.msra.mxu0 %v337
        %468 = vmatprep.subr.bf16.mxu0 0
        %469 = vmatpush1.bf16.msra.mxu0 0
        %470 = vmatprep.subr.bf16.mxu0 0
        %471 = vmatpush1.bf16.msra.mxu0 0
        %472 = vmatprep.subr.bf16.mxu0 0
        %473 = vmatpush1.bf16.msra.mxu0 0
        %474 = vmatprep.subr.bf16.mxu0 0
        %475 = vmatpush1.bf16.msra.mxu0 0
        %476 = vmatprep.subr.bf16.mxu0 0
        %477 = vmatpush1.bf16.msra.mxu0 0
        %478 = vmatprep.subr.bf16.mxu0 0
        %479 = vmatpush1.bf16.msra.mxu0 0
        %480 = vmatprep.subr.bf16.mxu0 0
        %481 = vmatpush1.bf16.msra.mxu0 0
        %482 = vmatprep.subr.bf16.mxu0 0
        %483 = vmatpush1.bf16.msra.mxu0 0
        %484 = vmatprep.subr.bf16.mxu0 0
        %485 = vmatpush1.bf16.msra.mxu0 0
        %486 = vmatprep.subr.bf16.mxu0 0
        %487 = vmatpush1.bf16.msra.mxu0 0
        %488 = vmatprep.subr.bf16.mxu0 0
        %489 = vmatpush1.bf16.msra.mxu0 0
        %490 = vmatprep.subr.bf16.mxu0 0
        %491 = vmatpush1.bf16.msra.mxu0 0
        %492 = vmatprep.subr.bf16.mxu0 0
        %493 = vmatpush1.bf16.msra.mxu0 0
        %494 = vmatprep.subr.bf16.mxu0 0
        %495 = vmatpush1.bf16.msra.mxu0 0
        %496 = vmatprep.subr.bf16.mxu0 0
        %497 = vmatpush1.bf16.msra.mxu0 0
        %498 = vmatprep.mubr.bf16.mxu0 0
        %499 = vmatmul.mubr.bf16.gmra.mrb[0].mxu0 %v464
        %v500 = vpop.f32.mrb[0].mxu0
        %v501 = vadd.f32 0.0, %v500
        %v502 = vpop.f32.mrb[0].mxu0
        %v503 = vpop.f32.mrb[0].mxu0
        %v504 = vadd.f32 0.0, %v503
        %v505 = vpop.f32.mrb[0].mxu0
        %506 = vdwg.mxu0
        %v507 = vadd.f32 %v460, %v501
        %v508 = vadd.f32 %v461, %v504
        %509 = vst.msk [vmem:[#allocation4] sm:$0xff] %vm350, %v507
        %510 = vst.msk [vmem:[#allocation4 + $0x8] sm:$0xff] %vm350, %v508
        %511 = vst.msk [vmem:[#allocation2] sm:$0xff] %vm445, %v409
        %512 = vst.msk [vmem:[#allocation2 + $0x8] sm:$0xff] %vm445, %v410
        %514 = vrot.lane.b32.xlu0 %v331, 96
        %v515 = vpop.permute.xlu0 %514
        %517 = vrot.lane.b32.xlu0 %v334, 96
        %v518 = vpop.permute.xlu0 %517
        %v520 = vsel %vm350, %v515, 0
        %v523 = vsel %vm350, %v518, 0
        %525 = vmatprep.subr.bf16.mxu0 0
        %526 = vmatpush1.bf16.xpose.msra.mxu0 %v523
        %527 = vmatprep.subr.bf16.mxu0 0
        %528 = vmatpush1.bf16.xpose.msra.mxu0 0
        %529 = vmatprep.subr.bf16.mxu0 0
        %530 = vmatpush1.bf16.xpose.msra.mxu0 0
        %531 = vmatprep.subr.bf16.mxu0 0
        %532 = vmatpush1.bf16.xpose.msra.mxu0 0
        %533 = vmatprep.subr.bf16.mxu0 0
        %534 = vmatpush1.bf16.xpose.msra.mxu0 0
        %535 = vmatprep.subr.bf16.mxu0 0
        %536 = vmatpush1.bf16.xpose.msra.mxu0 0
        %537 = vmatprep.subr.bf16.mxu0 0
        %538 = vmatpush1.bf16.xpose.msra.mxu0 0
        %539 = vmatprep.subr.bf16.mxu0 0
        %540 = vmatpush1.bf16.xpose.msra.mxu0 0
        %541 = vmatprep.subr.bf16.mxu0 0
        %542 = vmatpush1.bf16.xpose.msra.mxu0 0
        %543 = vmatprep.subr.bf16.mxu0 0
        %544 = vmatpush1.bf16.xpose.msra.mxu0 0
        %545 = vmatprep.subr.bf16.mxu0 0
        %546 = vmatpush1.bf16.xpose.msra.mxu0 0
        %547 = vmatprep.subr.bf16.mxu0 0
        %548 = vmatpush1.bf16.xpose.msra.mxu0 0
        %549 = vmatprep.subr.bf16.mxu0 0
        %550 = vmatpush1.bf16.xpose.msra.mxu0 0
        %551 = vmatprep.subr.bf16.mxu0 0
        %552 = vmatpush1.bf16.xpose.msra.mxu0 0
        %553 = vmatprep.subr.bf16.mxu0 0
        %554 = vmatpush1.bf16.xpose.msra.mxu0 0
        %555 = vmatprep.subr.bf16.mxu0 0
        %556 = vmatpush1.bf16.xpose.msra.mxu0 0
        %557 = vmatprep.mubr.bf16.mxu0 0
        %558 = vmatmul.mubr.bf16.gmra.mrb[0].mxu0 %v520
        %v559 = vpop.f32.mrb[0].mxu0
        %v560 = vadd.f32 0.0, %v559
        %v561 = vpop.f32.mrb[0].mxu0
        %v562 = vpop.f32.mrb[0].mxu0
        %v563 = vadd.f32 0.0, %v562
        %v564 = vpop.f32.mrb[0].mxu0
        %565 = vdwg.mxu0
        %v566 = vsel %vm348, %v560, -1e+30
        %v567 = vsel %vm349, %v563, -1e+30
        %s568 = scalar_lea.vmem [#allocation2], 16
        %v569 = vld [vmem:[%s568] sm:$0xff]
        %v570 = vld [vmem:[%s568 + $0x8] sm:$0xff]
        %v571 = vsel %vm402, %v566, -inf
        %572 = vmax.xlane.f32.xlu0 %v571
        %v573 = vpop.xlane.xlu0 %572
        %v574 = vsel %vm402, %v567, -inf
        %575 = vmax.xlane.f32.xlu0 %v574
        %v576 = vpop.xlane.xlu0 %575
        %v577 = vmax.f32 %v569, %v573
        %v578 = vmax.f32 %v570, %v576
        %v579 = vsub.f32 %v569, %v577
        %v580 = vsub.f32 %v570, %v578
        %v581 = vmul.f32 %v579, 1.442695
        %v582 = vpow.pop %v581
        %v583 = vmul.f32 %v580, 1.442695
        %v584 = vpow.pop %v583
        %586 = vset.pattern.permute.xlu0 0
        %587 = vperm.xlu0 %586, %v577
        %v588 = vpop.permute.xlu0 %587
        %591 = vset.pattern.permute.xlu0 0
        %592 = vperm.xlu0 %591, %v578
        %v593 = vpop.permute.xlu0 %592
        %v595 = vsub.f32 %v566, %v588
        %v596 = vsub.f32 %v567, %v593
        %v597 = vmul.f32 %v595, 1.442695
        %v598 = vpow.pop %v597
        %v599 = vmul.f32 %v596, 1.442695
        %v600 = vpow.pop %v599
        %s601 = scalar_lea.vmem [#allocation3], 16
        %v602 = vld [vmem:[%s601] sm:$0xff]
        %v603 = vld [vmem:[%s601 + $0x8] sm:$0xff]
        %v604 = vmul.f32 %v582, %v602
        %v605 = vmul.f32 %v584, %v603
        %v606 = vsel %vm402, %v598, 0.0
        %607 = vadd.xlane.f32.xlu0 %v606
        %v608 = vpop.xlane.xlu0 %607
        %v609 = vsel %vm402, %v600, 0.0
        %610 = vadd.xlane.f32.xlu0 %v609
        %v611 = vpop.xlane.xlu0 %610
        %v612 = vadd.f32 %v604, %v608
        %v613 = vadd.f32 %v605, %v611
        %614 = vst.msk [vmem:[%s601] sm:$0xff] %vm445, %v612
        %615 = vst.msk [vmem:[%s601 + $0x8] sm:$0xff] %vm445, %v613
        %s616 = scalar_lea.vmem [#allocation4], 16
        %v617 = vld [vmem:[%s616] sm:$0xff]
        %v618 = vld [vmem:[%s616 + $0x8] sm:$0xff]
        %620 = vset.pattern.permute.xlu0 0
        %621 = vperm.xlu0 %620, %v582
        %v622 = vpop.permute.xlu0 %621
        %625 = vset.pattern.permute.xlu0 0
        %626 = vperm.xlu0 %625, %v584
        %v627 = vpop.permute.xlu0 %626
        %v629 = vmul.f32 %v622, %v617
        %v630 = vmul.f32 %v627, %v618
        %v631 = vpack.c.bf16 %v600, %v598
        %633 = vrot.lane.b32.xlu0 %v337, 96
        %v634 = vpop.permute.xlu0 %633
        %v637 = vsel %vm402, %v631, 0
        %639 = vmatprep.subr.bf16.mxu0 0
        %640 = vmatpush1.bf16.msra.mxu0 %v634
        %641 = vmatprep.subr.bf16.mxu0 0
        %642 = vmatpush1.bf16.msra.mxu0 0
        %643 = vmatprep.subr.bf16.mxu0 0
        %644 = vmatpush1.bf16.msra.mxu0 0
        %645 = vmatprep.subr.bf16.mxu0 0
        %646 = vmatpush1.bf16.msra.mxu0 0
        %647 = vmatprep.subr.bf16.mxu0 0
        %648 = vmatpush1.bf16.msra.mxu0 0
        %649 = vmatprep.subr.bf16.mxu0 0
        %650 = vmatpush1.bf16.msra.mxu0 0
        %651 = vmatprep.subr.bf16.mxu0 0
        %652 = vmatpush1.bf16.msra.mxu0 0
        %653 = vmatprep.subr.bf16.mxu0 0
        %654 = vmatpush1.bf16.msra.mxu0 0
        %655 = vmatprep.subr.bf16.mxu0 0
        %656 = vmatpush1.bf16.msra.mxu0 0
        %657 = vmatprep.subr.bf16.mxu0 0
        %658 = vmatpush1.bf16.msra.mxu0 0
        %659 = vmatprep.subr.bf16.mxu0 0
        %660 = vmatpush1.bf16.msra.mxu0 0
        %661 = vmatprep.subr.bf16.mxu0 0
        %662 = vmatpush1.bf16.msra.mxu0 0
        %663 = vmatprep.subr.bf16.mxu0 0
        %664 = vmatpush1.bf16.msra.mxu0 0
        %665 = vmatprep.subr.bf16.mxu0 0
        %666 = vmatpush1.bf16.msra.mxu0 0
        %667 = vmatprep.subr.bf16.mxu0 0
        %668 = vmatpush1.bf16.msra.mxu0 0
        %669 = vmatprep.subr.bf16.mxu0 0
        %670 = vmatpush1.bf16.msra.mxu0 0
        %671 = vmatprep.mubr.bf16.mxu0 0
        %672 = vmatmul.mubr.bf16.gmra.mrb[0].mxu0 %v637
        %v673 = vpop.f32.mrb[0].mxu0
        %v674 = vadd.f32 0.0, %v673
        %v675 = vpop.f32.mrb[0].mxu0
        %v676 = vpop.f32.mrb[0].mxu0
        %v677 = vadd.f32 0.0, %v676
        %v678 = vpop.f32.mrb[0].mxu0
        %679 = vdwg.mxu0
        %v680 = vadd.f32 %v629, %v674
        %v681 = vadd.f32 %v630, %v677
        %682 = vst.msk [vmem:[%s616] sm:$0xff] %vm350, %v680
        %683 = vst.msk [vmem:[%s616 + $0x8] sm:$0xff] %vm350, %v681
        %684 = vst.msk [vmem:[%s568] sm:$0xff] %vm445, %v577
        %685 = vst.msk [vmem:[%s568 + $0x8] sm:$0xff] %vm445, %v578
        %686 = vrot.lane.b32.xlu0 %v331, 64
        %v687 = vpop.permute.xlu0 %686
        %688 = vrot.lane.b32.xlu0 %v334, 64
        %v689 = vpop.permute.xlu0 %688
        %v691 = vsel %vm350, %v687, 0
        %v694 = vsel %vm350, %v689, 0
        %696 = vmatprep.subr.bf16.mxu0 0
        %697 = vmatpush1.bf16.xpose.msra.mxu0 %v694
        %698 = vmatprep.subr.bf16.mxu0 0
        %699 = vmatpush1.bf16.xpose.msra.mxu0 0
        %700 = vmatprep.subr.bf16.mxu0 0
        %701 = vmatpush1.bf16.xpose.msra.mxu0 0
        %702 = vmatprep.subr.bf16.mxu0 0
        %703 = vmatpush1.bf16.xpose.msra.mxu0 0
        %704 = vmatprep.subr.bf16.mxu0 0
        %705 = vmatpush1.bf16.xpose.msra.mxu0 0
        %706 = vmatprep.subr.bf16.mxu0 0
        %707 = vmatpush1.bf16.xpose.msra.mxu0 0
        %708 = vmatprep.subr.bf16.mxu0 0
        %709 = vmatpush1.bf16.xpose.msra.mxu0 0
        %710 = vmatprep.subr.bf16.mxu0 0
        %711 = vmatpush1.bf16.xpose.msra.mxu0 0
        %712 = vmatprep.subr.bf16.mxu0 0
        %713 = vmatpush1.bf16.xpose.msra.mxu0 0
        %714 = vmatprep.subr.bf16.mxu0 0
        %715 = vmatpush1.bf16.xpose.msra.mxu0 0
        %716 = vmatprep.subr.bf16.mxu0 0
        %717 = vmatpush1.bf16.xpose.msra.mxu0 0
        %718 = vmatprep.subr.bf16.mxu0 0
        %719 = vmatpush1.bf16.xpose.msra.mxu0 0
        %720 = vmatprep.subr.bf16.mxu0 0
        %721 = vmatpush1.bf16.xpose.msra.mxu0 0
        %722 = vmatprep.subr.bf16.mxu0 0
        %723 = vmatpush1.bf16.xpose.msra.mxu0 0
        %724 = vmatprep.subr.bf16.mxu0 0
        %725 = vmatpush1.bf16.xpose.msra.mxu0 0
        %726 = vmatprep.subr.bf16.mxu0 0
        %727 = vmatpush1.bf16.xpose.msra.mxu0 0
        %728 = vmatprep.mubr.bf16.mxu0 0
        %729 = vmatmul.mubr.bf16.gmra.mrb[0].mxu0 %v691
        %v730 = vpop.f32.mrb[0].mxu0
        %v731 = vadd.f32 0.0, %v730
        %v732 = vpop.f32.mrb[0].mxu0
        %v733 = vpop.f32.mrb[0].mxu0
        %v734 = vadd.f32 0.0, %v733
        %v735 = vpop.f32.mrb[0].mxu0
        %736 = vdwg.mxu0
        %v737 = vsel %vm348, %v731, -1e+30
        %v738 = vsel %vm349, %v734, -1e+30
        %s739 = scalar_lea.vmem [#allocation2], 32
        %v740 = vld [vmem:[%s739] sm:$0xff]
        %v741 = vld [vmem:[%s739 + $0x8] sm:$0xff]
        %v742 = vsel %vm402, %v737, -inf
        %743 = vmax.xlane.f32.xlu0 %v742
        %v744 = vpop.xlane.xlu0 %743
        %v745 = vsel %vm402, %v738, -inf
        %746 = vmax.xlane.f32.xlu0 %v745
        %v747 = vpop.xlane.xlu0 %746
        %v748 = vmax.f32 %v740, %v744
        %v749 = vmax.f32 %v741, %v747
        %v750 = vsub.f32 %v740, %v748
        %v751 = vsub.f32 %v741, %v749
        %v752 = vmul.f32 %v750, 1.442695
        %v753 = vpow.pop %v752
        %v754 = vmul.f32 %v751, 1.442695
        %v755 = vpow.pop %v754
        %757 = vset.pattern.permute.xlu0 0
        %758 = vperm.xlu0 %757, %v748
        %v759 = vpop.permute.xlu0 %758
        %762 = vset.pattern.permute.xlu0 0
        %763 = vperm.xlu0 %762, %v749
        %v764 = vpop.permute.xlu0 %763
        %v766 = vsub.f32 %v737, %v759
        %v767 = vsub.f32 %v738, %v764
        %v768 = vmul.f32 %v766, 1.442695
        %v769 = vpow.pop %v768
        %v770 = vmul.f32 %v767, 1.442695
        %v771 = vpow.pop %v770
        %s772 = scalar_lea.vmem [#allocation3], 32
        %v773 = vld [vmem:[%s772] sm:$0xff]
        %v774 = vld [vmem:[%s772 + $0x8] sm:$0xff]
        %v775 = vmul.f32 %v753, %v773
        %v776 = vmul.f32 %v755, %v774
        %v777 = vsel %vm402, %v769, 0.0
        %778 = vadd.xlane.f32.xlu0 %v777
        %v779 = vpop.xlane.xlu0 %778
        %v780 = vsel %vm402, %v771, 0.0
        %781 = vadd.xlane.f32.xlu0 %v780
        %v782 = vpop.xlane.xlu0 %781
        %v783 = vadd.f32 %v775, %v779
        %v784 = vadd.f32 %v776, %v782
        %785 = vst.msk [vmem:[%s772] sm:$0xff] %vm445, %v783
        %786 = vst.msk [vmem:[%s772 + $0x8] sm:$0xff] %vm445, %v784
        %s787 = scalar_lea.vmem [#allocation4], 32
        %v788 = vld [vmem:[%s787] sm:$0xff]
        %v789 = vld [vmem:[%s787 + $0x8] sm:$0xff]
        %791 = vset.pattern.permute.xlu0 0
        %792 = vperm.xlu0 %791, %v753
        %v793 = vpop.permute.xlu0 %792
        %796 = vset.pattern.permute.xlu0 0
        %797 = vperm.xlu0 %796, %v755
        %v798 = vpop.permute.xlu0 %797
        %v800 = vmul.f32 %v793, %v788
        %v801 = vmul.f32 %v798, %v789
        %v802 = vpack.c.bf16 %v771, %v769
        %803 = vrot.lane.b32.xlu0 %v337, 64
        %v804 = vpop.permute.xlu0 %803
        %v807 = vsel %vm402, %v802, 0
        %809 = vmatprep.subr.bf16.mxu0 0
        %810 = vmatpush1.bf16.msra.mxu0 %v804
        %811 = vmatprep.subr.bf16.mxu0 0
        %812 = vmatpush1.bf16.msra.mxu0 0
        %813 = vmatprep.subr.bf16.mxu0 0
        %814 = vmatpush1.bf16.msra.mxu0 0
        %815 = vmatprep.subr.bf16.mxu0 0
        %816 = vmatpush1.bf16.msra.mxu0 0
        %817 = vmatprep.subr.bf16.mxu0 0
        %818 = vmatpush1.bf16.msra.mxu0 0
        %819 = vmatprep.subr.bf16.mxu0 0
        %820 = vmatpush1.bf16.msra.mxu0 0
        %821 = vmatprep.subr.bf16.mxu0 0
        %822 = vmatpush1.bf16.msra.mxu0 0
        %823 = vmatprep.subr.bf16.mxu0 0
        %824 = vmatpush1.bf16.msra.mxu0 0
        %825 = vmatprep.subr.bf16.mxu0 0
        %826 = vmatpush1.bf16.msra.mxu0 0
        %827 = vmatprep.subr.bf16.mxu0 0
        %828 = vmatpush1.bf16.msra.mxu0 0
        %829 = vmatprep.subr.bf16.mxu0 0
        %830 = vmatpush1.bf16.msra.mxu0 0
        %831 = vmatprep.subr.bf16.mxu0 0
        %832 = vmatpush1.bf16.msra.mxu0 0
        %833 = vmatprep.subr.bf16.mxu0 0
        %834 = vmatpush1.bf16.msra.mxu0 0
        %835 = vmatprep.subr.bf16.mxu0 0
        %836 = vmatpush1.bf16.msra.mxu0 0
        %837 = vmatprep.subr.bf16.mxu0 0
        %838 = vmatpush1.bf16.msra.mxu0 0
        %839 = vmatprep.subr.bf16.mxu0 0
        %840 = vmatpush1.bf16.msra.mxu0 0
        %841 = vmatprep.mubr.bf16.mxu0 0
        %842 = vmatmul.mubr.bf16.gmra.mrb[0].mxu0 %v807
        %v843 = vpop.f32.mrb[0].mxu0
        %v844 = vadd.f32 0.0, %v843
        %v845 = vpop.f32.mrb[0].mxu0
        %v846 = vpop.f32.mrb[0].mxu0
        %v847 = vadd.f32 0.0, %v846
        %v848 = vpop.f32.mrb[0].mxu0
        %849 = vdwg.mxu0
        %v850 = vadd.f32 %v800, %v844
        %v851 = vadd.f32 %v801, %v847
        %852 = vst.msk [vmem:[%s787] sm:$0xff] %vm350, %v850
        %853 = vst.msk [vmem:[%s787 + $0x8] sm:$0xff] %vm350, %v851
        %854 = vst.msk [vmem:[%s739] sm:$0xff] %vm445, %v748
        %855 = vst.msk [vmem:[%s739 + $0x8] sm:$0xff] %vm445, %v749
        %856 = vrot.lane.b32.xlu0 %v331, 32
        %v857 = vpop.permute.xlu0 %856
        %858 = vrot.lane.b32.xlu0 %v334, 32
        %v859 = vpop.permute.xlu0 %858
        %v861 = vsel %vm350, %v857, 0
        %v864 = vsel %vm350, %v859, 0
        %866 = vmatprep.subr.bf16.mxu0 0
        %867 = vmatpush1.bf16.xpose.msra.mxu0 %v864
        %868 = vmatprep.subr.bf16.mxu0 0
        %869 = vmatpush1.bf16.xpose.msra.mxu0 0
        %870 = vmatprep.subr.bf16.mxu0 0
        %871 = vmatpush1.bf16.xpose.msra.mxu0 0
        %872 = vmatprep.subr.bf16.mxu0 0
        %873 = vmatpush1.bf16.xpose.msra.mxu0 0
        %874 = vmatprep.subr.bf16.mxu0 0
        %875 = vmatpush1.bf16.xpose.msra.mxu0 0
        %876 = vmatprep.subr.bf16.mxu0 0
        %877 = vmatpush1.bf16.xpose.msra.mxu0 0
        %878 = vmatprep.subr.bf16.mxu0 0
        %879 = vmatpush1.bf16.xpose.msra.mxu0 0
        %880 = vmatprep.subr.bf16.mxu0 0
        %881 = vmatpush1.bf16.xpose.msra.mxu0 0
        %882 = vmatprep.subr.bf16.mxu0 0
        %883 = vmatpush1.bf16.xpose.msra.mxu0 0
        %884 = vmatprep.subr.bf16.mxu0 0
        %885 = vmatpush1.bf16.xpose.msra.mxu0 0
        %886 = vmatprep.subr.bf16.mxu0 0
        %887 = vmatpush1.bf16.xpose.msra.mxu0 0
        %888 = vmatprep.subr.bf16.mxu0 0
        %889 = vmatpush1.bf16.xpose.msra.mxu0 0
        %890 = vmatprep.subr.bf16.mxu0 0
        %891 = vmatpush1.bf16.xpose.msra.mxu0 0
        %892 = vmatprep.subr.bf16.mxu0 0
        %893 = vmatpush1.bf16.xpose.msra.mxu0 0
        %894 = vmatprep.subr.bf16.mxu0 0
        %895 = vmatpush1.bf16.xpose.msra.mxu0 0
        %896 = vmatprep.subr.bf16.mxu0 0
        %897 = vmatpush1.bf16.xpose.msra.mxu0 0
        %898 = vmatprep.mubr.bf16.mxu0 0
        %899 = vmatmul.mubr.bf16.gmra.mrb[0].mxu0 %v861
        %v900 = vpop.f32.mrb[0].mxu0
        %v901 = vadd.f32 0.0, %v900
        %v902 = vpop.f32.mrb[0].mxu0
        %v903 = vpop.f32.mrb[0].mxu0
        %v904 = vadd.f32 0.0, %v903
        %v905 = vpop.f32.mrb[0].mxu0
        %906 = vdwg.mxu0
        %v907 = vsel %vm348, %v901, -1e+30
        %v908 = vsel %vm349, %v904, -1e+30
        %s909 = scalar_lea.vmem [#allocation2], 48
        %v910 = vld [vmem:[%s909] sm:$0xff]
        %v911 = vld [vmem:[%s909 + $0x8] sm:$0xff]
        %v912 = vsel %vm402, %v907, -inf
        %913 = vmax.xlane.f32.xlu0 %v912
        %v914 = vpop.xlane.xlu0 %913
        %v915 = vsel %vm402, %v908, -inf
        %916 = vmax.xlane.f32.xlu0 %v915
        %v917 = vpop.xlane.xlu0 %916
        %v918 = vmax.f32 %v910, %v914
        %v919 = vmax.f32 %v911, %v917
        %v920 = vsub.f32 %v910, %v918
        %v921 = vsub.f32 %v911, %v919
        %v922 = vmul.f32 %v920, 1.442695
        %v923 = vpow.pop %v922
        %v924 = vmul.f32 %v921, 1.442695
        %v925 = vpow.pop %v924
        %927 = vset.pattern.permute.xlu0 0
        %928 = vperm.xlu0 %927, %v918
        %v929 = vpop.permute.xlu0 %928
        %932 = vset.pattern.permute.xlu0 0
        %933 = vperm.xlu0 %932, %v919
        %v934 = vpop.permute.xlu0 %933
        %v936 = vsub.f32 %v907, %v929
        %v937 = vsub.f32 %v908, %v934
        %v938 = vmul.f32 %v936, 1.442695
        %v939 = vpow.pop %v938
        %v940 = vmul.f32 %v937, 1.442695
        %v941 = vpow.pop %v940
        %s942 = scalar_lea.vmem [#allocation3], 48
        %v943 = vld [vmem:[%s942] sm:$0xff]
        %v944 = vld [vmem:[%s942 + $0x8] sm:$0xff]
        %v945 = vmul.f32 %v923, %v943
        %v946 = vmul.f32 %v925, %v944
        %v947 = vsel %vm402, %v939, 0.0
        %948 = vadd.xlane.f32.xlu0 %v947
        %v949 = vpop.xlane.xlu0 %948
        %v950 = vsel %vm402, %v941, 0.0
        %951 = vadd.xlane.f32.xlu0 %v950
        %v952 = vpop.xlane.xlu0 %951
        %v953 = vadd.f32 %v945, %v949
        %v954 = vadd.f32 %v946, %v952
        %955 = vst.msk [vmem:[%s942] sm:$0xff] %vm445, %v953
        %956 = vst.msk [vmem:[%s942 + $0x8] sm:$0xff] %vm445, %v954
        %s957 = scalar_lea.vmem [#allocation4], 48
        %v958 = vld [vmem:[%s957] sm:$0xff]
        %v959 = vld [vmem:[%s957 + $0x8] sm:$0xff]
        %961 = vset.pattern.permute.xlu0 0
        %962 = vperm.xlu0 %961, %v923
        %v963 = vpop.permute.xlu0 %962
        %966 = vset.pattern.permute.xlu0 0
        %967 = vperm.xlu0 %966, %v925
        %v968 = vpop.permute.xlu0 %967
        %v970 = vmul.f32 %v963, %v958
        %v971 = vmul.f32 %v968, %v959
        %v972 = vpack.c.bf16 %v941, %v939
        %973 = vrot.lane.b32.xlu0 %v337, 32
        %v974 = vpop.permute.xlu0 %973
        %v977 = vsel %vm402, %v972, 0
        %979 = vmatprep.subr.bf16.mxu0 0
        %980 = vmatpush1.bf16.msra.mxu0 %v974
        %981 = vmatprep.subr.bf16.mxu0 0
        %982 = vmatpush1.bf16.msra.mxu0 0
        %983 = vmatprep.subr.bf16.mxu0 0
        %984 = vmatpush1.bf16.msra.mxu0 0
        %985 = vmatprep.subr.bf16.mxu0 0
        %986 = vmatpush1.bf16.msra.mxu0 0
        %987 = vmatprep.subr.bf16.mxu0 0
        %988 = vmatpush1.bf16.msra.mxu0 0
        %989 = vmatprep.subr.bf16.mxu0 0
        %990 = vmatpush1.bf16.msra.mxu0 0
        %991 = vmatprep.subr.bf16.mxu0 0
        %992 = vmatpush1.bf16.msra.mxu0 0
        %993 = vmatprep.subr.bf16.mxu0 0
        %994 = vmatpush1.bf16.msra.mxu0 0
        %995 = vmatprep.subr.bf16.mxu0 0
        %996 = vmatpush1.bf16.msra.mxu0 0
        %997 = vmatprep.subr.bf16.mxu0 0
        %998 = vmatpush1.bf16.msra.mxu0 0
        %999 = vmatprep.subr.bf16.mxu0 0
        %1000 = vmatpush1.bf16.msra.mxu0 0
        %1001 = vmatprep.subr.bf16.mxu0 0
        %1002 = vmatpush1.bf16.msra.mxu0 0
        %1003 = vmatprep.subr.bf16.mxu0 0
        %1004 = vmatpush1.bf16.msra.mxu0 0
        %1005 = vmatprep.subr.bf16.mxu0 0
        %1006 = vmatpush1.bf16.msra.mxu0 0
        %1007 = vmatprep.subr.bf16.mxu0 0
        %1008 = vmatpush1.bf16.msra.mxu0 0
        %1009 = vmatprep.subr.bf16.mxu0 0
        %1010 = vmatpush1.bf16.msra.mxu0 0
        %1011 = vmatprep.mubr.bf16.mxu0 0
        %1012 = vmatmul.mubr.bf16.gmra.mrb[0].mxu0 %v977
        %v1013 = vpop.f32.mrb[0].mxu0
        %v1014 = vadd.f32 0.0, %v1013
        %v1015 = vpop.f32.mrb[0].mxu0
        %v1016 = vpop.f32.mrb[0].mxu0
        %v1017 = vadd.f32 0.0, %v1016
        %v1018 = vpop.f32.mrb[0].mxu0
        %1019 = vdwg.mxu0
        %v1020 = vadd.f32 %v970, %v1014
        %v1021 = vadd.f32 %v971, %v1017
        %1022 = vst.msk [vmem:[%s957] sm:$0xff] %vm350, %v1020
        %1023 = vst.msk [vmem:[%s957 + $0x8] sm:$0xff] %vm350, %v1021
        %1024 = vst.msk [vmem:[%s909] sm:$0xff] %vm445, %v918
        %1025 = vst.msk [vmem:[%s909 + $0x8] sm:$0xff] %vm445, %v919
      $region40: #{olmo_forward.18} parent=31 // pred_fallthru
        _
      // Predicated region
      $region41: #{olmo_forward.18} parent=31 // pred_check
        %p1026 = pneg %p290
      $region42: #{olmo_forward.18} parent=31 // pred_check_branch
        %1028 = sbr.rel (%p1026) target = $region44
      $region43: #{olmo_forward.18} parent=31 // pred_region
        %v1029 = vld [vmem:[#allocation3] sm:$0xff]
        %v1030 = vld [vmem:[#allocation3 + $0x8] sm:$0xff]
        %v1031 = vrcp.pop %v1029
        %v1032 = vrcp.pop %v1030
        %v1033 = vld [vmem:[#allocation4] sm:$0xff]
        %v1034 = vld [vmem:[#allocation4 + $0x8] sm:$0xff]
        %1036 = vset.pattern.permute.xlu0 0
        %1037 = vperm.xlu0 %1036, %v1031
        %v1038 = vpop.permute.xlu0 %1037
        %1041 = vset.pattern.permute.xlu0 0
        %1042 = vperm.xlu0 %1041, %v1032
        %v1043 = vpop.permute.xlu0 %1042
        %v1045 = vmul.f32 %v1033, %v1038
        %v1046 = vmul.f32 %v1034, %v1043
        %s1047 = scalar_lea.vmem [#allocation3], 16
        %v1048 = vld [vmem:[%s1047] sm:$0xff]
        %v1049 = vld [vmem:[%s1047 + $0x8] sm:$0xff]
        %v1050 = vrcp.pop %v1048
        %v1051 = vrcp.pop %v1049
        %s1052 = scalar_lea.vmem [#allocation4], 16
        %v1053 = vld [vmem:[%s1052] sm:$0xff]
        %v1054 = vld [vmem:[%s1052 + $0x8] sm:$0xff]
        %1056 = vset.pattern.permute.xlu0 0
        %1057 = vperm.xlu0 %1056, %v1050
        %v1058 = vpop.permute.xlu0 %1057
        %1061 = vset.pattern.permute.xlu0 0
        %1062 = vperm.xlu0 %1061, %v1051
        %v1063 = vpop.permute.xlu0 %1062
        %v1065 = vmul.f32 %v1053, %v1058
        %v1066 = vmul.f32 %v1054, %v1063
        %s1067 = scalar_lea.vmem [#allocation3], 32
        %v1068 = vld [vmem:[%s1067] sm:$0xff]
        %v1069 = vld [vmem:[%s1067 + $0x8] sm:$0xff]
        %v1070 = vrcp.pop %v1068
        %v1071 = vrcp.pop %v1069
        %s1072 = scalar_lea.vmem [#allocation4], 32
        %v1073 = vld [vmem:[%s1072] sm:$0xff]
        %v1074 = vld [vmem:[%s1072 + $0x8] sm:$0xff]
        %1076 = vset.pattern.permute.xlu0 0
        %1077 = vperm.xlu0 %1076, %v1070
        %v1078 = vpop.permute.xlu0 %1077
        %1081 = vset.pattern.permute.xlu0 0
        %1082 = vperm.xlu0 %1081, %v1071
        %v1083 = vpop.permute.xlu0 %1082
        %v1085 = vmul.f32 %v1073, %v1078
        %v1086 = vmul.f32 %v1074, %v1083
        %s1087 = scalar_lea.vmem [#allocation3], 48
        %v1088 = vld [vmem:[%s1087] sm:$0xff]
        %v1089 = vld [vmem:[%s1087 + $0x8] sm:$0xff]
        %v1090 = vrcp.pop %v1088
        %v1091 = vrcp.pop %v1089
        %s1092 = scalar_lea.vmem [#allocation4], 48
        %v1093 = vld [vmem:[%s1092] sm:$0xff]
        %v1094 = vld [vmem:[%s1092 + $0x8] sm:$0xff]
        %1096 = vset.pattern.permute.xlu0 0
        %1097 = vperm.xlu0 %1096, %v1090
        %v1098 = vpop.permute.xlu0 %1097
        %1101 = vset.pattern.permute.xlu0 0
        %1102 = vperm.xlu0 %1101, %v1091
        %v1103 = vpop.permute.xlu0 %1102
        %v1105 = vmul.f32 %v1093, %v1098
        %v1106 = vmul.f32 %v1094, %v1103
        %1109 = vrot.lane.b32.xlu0 %v1065, 32
        %v1110 = vpop.permute.xlu0 %1109
        %1111 = vrot.lane.b32.xlu0 %v1066, 32
        %v1112 = vpop.permute.xlu0 %1111
        %1117 = vrot.lane.b32.xlu0 %v1085, 64
        %v1118 = vpop.permute.xlu0 %1117
        %1119 = vrot.lane.b32.xlu0 %v1086, 64
        %v1120 = vpop.permute.xlu0 %1119
        %1125 = vrot.lane.b32.xlu0 %v1105, 96
        %v1126 = vpop.permute.xlu0 %1125
        %1127 = vrot.lane.b32.xlu0 %v1106, 96
        %v1128 = vpop.permute.xlu0 %1127
        %vm1131 = vcmask 261120
        %v1132 = vsel %vm1131, %v1045, %v1110
        %v1133 = vsel %vm1131, %v1046, %v1112
        %vm1134 = vcmask 523264
        %v1135 = vsel %vm1134, %v1132, %v1118
        %v1136 = vsel %vm1134, %v1133, %v1120
        %vm1137 = vcmask 785408
        %v1138 = vsel %vm1137, %v1135, %v1126
        %v1139 = vsel %vm1137, %v1136, %v1128
        %1140 = vst [vmem:[%s287] sm:$0xff] %v1138
        %1141 = vst [vmem:[%s287 + $0x8] sm:$0xff] %v1139
      $region44: #{olmo_forward.18} parent=31 // pred_fallthru
        _
      %s1142 = smul.u32 2, %s20
      %p1143 = scmp.lt.s32.totalorder %s19, 1
      %s1144 = scalar_select %p1143, %s19, 1
      %p1145 = scmp.lt.s32.totalorder %s1142, 1
      %s1146 = scalar_select %p1145, %s1142, 1
      %s1147 = smul.addr %s1144, 2
      %s1148 = sadd.s32 %s1146, %s1147
      %s1149 = smul.addr %s1148, 8
      %s1150 = scalar_lea.vmem %s3, %s1149
      // Predicated region
      $region45: #{olmo_forward.18} parent=31 // pred_check
        %p1151 = pneg %p137
      $region46: #{olmo_forward.18} parent=31 // pred_check_branch
        %1153 = sbr.rel (%p1151) target = $region48
      $region47: #{olmo_forward.18} parent=31 // pred_region
        %s1154 = smul.u32 2, %s20
      $region48: #{olmo_forward.18} parent=31 // pred_fallthru
        _
    $region32: #{olmo_forward.18} parent=5 // pred_fallthru
      _
    %p1155 = scmp.le.s32.totalorder 2, %s9
    // Predicated region
    $region49: #{olmo_forward.18} parent=5 // pred_check
      %p1156 = pneg %p1155
    $region50: #{olmo_forward.18} parent=5 // pred_check_branch
      %1158 = sbr.rel (%p1156) target = $region52
    $region51: #{olmo_forward.18} parent=5 // pred_region
      %s1159 = ssub.s32 %s9, 2
      // Predicated region
      $region53: #{olmo_forward.18} parent=51 // pred_check
        %p1160 = pneg %p143
      $region54: #{olmo_forward.18} parent=51 // pred_check_branch
        %1162 = sbr.rel (%p1160) target = $region56
      $region55: #{olmo_forward.18} parent=51 // pred_region
        %s1163 = smul.u32 2, %s23
        %p1164 = scmp.lt.s32.totalorder %s22, 1
        %s1165 = scalar_select %p1164, %s22, 1
        %p1166 = scmp.lt.s32.totalorder %s1163, 1
        %s1167 = scalar_select %p1166, %s1163, 1
        %s1168 = smul.addr %s1165, 2
        %s1169 = sadd.s32 %s1167, %s1168
        %s1170 = smul.addr %s1169, 8
        %s1171 = scalar_lea.vmem %s3, %s1170
      $region56: #{olmo_forward.18} parent=51 // pred_fallthru
        _
    $region52: #{olmo_forward.18} parent=5 // pred_fallthru
      _
  $region6: #{olmo_forward.18} parent=0 // loop_footer
    %s13 = sadd.s32 1, %s9
  $region7: #{olmo_forward.18} parent=0 // loop_footer_branch
    %8 = sbr.rel target = $region3
  $region8: #{olmo_forward.18} parent=0 // loop_exit
    _

</llo_original>
